<compile_context>
chip_gen: v7x
topology: tpu7x:2x2x1
jax: 0.10.0
libtpu: 0.0.40
codegen_flags: <defaults>
</compile_context>

<pallas_src>
import numpy as np
import jax
import jax.numpy as jnp
from jax.experimental import pallas as pl
from jax.experimental.pallas import tpu as pltpu


def _leaky(x, slope):
    return jnp.where(x >= 0, x, slope * x)


_ROLL_MODE = []  # cache: True = jnp.roll semantics, False = inverted, None = unusable


def _probe_roll_mode():
    """Detect pltpu.roll's rotation direction once with a tiny eager kernel."""
    if _ROLL_MODE:
        return _ROLL_MODE[0]
    mode = None
    try:
        def k(x_ref, o_ref):
            o_ref[...] = pltpu.roll(x_ref[...], 1, axis=1)

        x = jnp.tile(jnp.arange(128, dtype=jnp.float32)[None, :], (8, 1))
        out = np.asarray(jax.block_until_ready(
            pl.pallas_call(k, out_shape=jax.ShapeDtypeStruct((8, 128), jnp.float32))(x)))
        xn = np.asarray(x)
        if np.array_equal(out, np.roll(xn, 1, axis=1)):
            mode = True          # matches jnp.roll: use shift = MW - dj
        elif np.array_equal(out, np.roll(xn, -1, axis=1)):
            mode = False         # opposite direction: use shift = dj
    except Exception:            # any lowering/runtime issue -> fall back to direct loads
        mode = None
    _ROLL_MODE.append(mode)
    return mode


def multi_scale_attention_block(x, params, *, matmul_dtype=jnp.bfloat16,
                                images_per_step=None):
    """x: (N, H, W, Cin) float32 NHWC (== PyTorch NCHW transposed). Returns (N, H, W, Cout)."""
    N, H, W, Cin = x.shape
    Cout = params['bf'].shape[0]
    Cr = params['wca1'].shape[1]
    K7 = 7
    P = K7 // 2                                   # pad of the largest kernel (3)
    Hp = H + 2 * P
    # row stride of the flattened padded image; multiple of 8 so H*Wq is lane-dense.
    # Wq >= W + 6 always holds, so roll wrap-around only ever lands in pad columns.
    Wq = ((W + 2 * P + 7) // 8) * 8               # 24 for W=16
    MW = H * Wq                                   # flat length of the H output rows (384)
    KK = K7 * K7 * Cin                            # im2col depth (196)
    L = ((MW + (K7 - 1) * (Wq + 1) + 127) // 128) * 128
    SA_OFF = P * Wq + P                           # flat offset of valid region in a padded map

    # ---- images per grid step: keep >= 2 steps (both v7x TCs busy), fold the rest ----
    if images_per_step is None:
        images_per_step = max(1, -(-N // 2))
    B = int(max(1, min(images_per_step, N, 32)))
    steps = -(-N // B)
    N_pad = steps * B
    BMW = B * MW

    roll_mode = _probe_roll_mode()

    a_bytes = jnp.dtype(matmul_dtype).itemsize
    tile_rows = 8 * max(1, 4 // a_bytes)          # full-sublane-tile rows (8 f32 / 16 bf16)
    taps_per_group = max(1, tile_rows // Cin)     # taps folded into one a_scr store
    R3 = 3 * Cout
    R3p = ((R3 + tile_rows - 1) // tile_rows) * tile_rows   # 24 -> 32 for bf16

    # ----------------- wrapper-side layout plumbing (no compute) -----------------
    x_cm = jnp.transpose(x.astype(jnp.float32), (0, 3, 1, 2))            # (N, Cin, H, W)
    x_pad = jnp.pad(x_cm, ((0, 0), (0, 0), (P, P), (P, Wq - W - P)))     # (N, Cin, Hp, Wq)
    x_flat = jnp.pad(x_pad.reshape(N, Cin, Hp * Wq),
                     ((0, N_pad - N), (0, 0), (0, L - Hp * Wq)))         # (N_pad, Cin, L)

    # stack the 3 conv weights into one (R3p, 49*Cin) matrix; each kernel zero-embedded
    # into the 7x7 tap frame; K index = (di*7 + dj)*Cin + c.
    def embed(w, k):
        off = (K7 - k) // 2
        full = jnp.zeros((K7, K7, Cin, Cout), jnp.float32)
        full = full.at[off:off + k, off:off + k, :, :].set(w)
        return full.reshape(KK, Cout).T                                  # (Cout, KK)

    w_all = jnp.concatenate([embed(params['w3'], 3), embed(params['w5'], 5),
                             embed(params['w7'], 7)], axis=0)            # (R3, KK)
    w_all = jnp.pad(w_all, ((0, R3p - R3), (0, 0))).astype(matmul_dtype)
    b_all = jnp.pad(jnp.concatenate([params['b3'], params['b5'], params['b7']]),
                    (0, R3p - R3)).reshape(R3p, 1).astype(jnp.float32)
    wf_cm = jnp.pad(params['wf'].T, ((0, 0), (0, R3p - R3))).astype(matmul_dtype)
    bf_cm = params['bf'].reshape(Cout, 1).astype(jnp.float32)
    wca1t = params['wca1'].T.astype(jnp.float32)                         # (Cr, Cout)
    wca2t = params['wca2'].T.astype(jnp.float32)                         # (Cout, Cr)
    wsa_v = params['wsa'].reshape(K7 * K7 * 2).astype(jnp.float32)       # idx 2*tap+{0:max,1:avg}
    bsa_v = params['bsa'].reshape(1).astype(jnp.float32)

    # ---------------------------------- kernel -----------------------------------
    def kernel(xflat_ref, w_all_ref, b_all_ref, wf_ref, bf_ref,
               wca1t_ref, wca2t_ref, wsa_ref, bsa_ref, out_ref, a_scr, sa_scr):
        f32 = jnp.float32

        def shifted(base, dj):
            # slab[:, j] = base[:, j + dj]; wrapped lanes land only in pad columns.
            if dj == 0:
                return base
            shift = (MW - dj) if roll_mode else dj
            return pltpu.roll(base, shift, axis=1)

        # ---- im2col^T: a_scr[(di*7+dj)*Cin + c, b*MW + j] = xpad_b[c, j + di*Wq + dj] ----
        # (full-tile grouped stores; one base load + rolls per kernel row)
        for b in range(B):
            row = 0
            pending = []
            for di in range(K7):
                base = (xflat_ref[b, :, pl.ds(di * Wq, MW)]
                        if roll_mode is not None else None)
                for dj in range(K7):
                    if roll_mode is None:
                        slab = xflat_ref[b, :, pl.ds(di * Wq + dj, MW)]
                    else:
                        slab = shifted(base, dj)
                    pending.append(slab)
                    if len(pending) == taps_per_group:
                        blk = jnp.concatenate(pending, axis=0).astype(a_scr.dtype)
                        a_scr[pl.ds(row, blk.shape[0]), pl.ds(b * MW, MW)] = blk
                        row += blk.shape[0]
                        pending = []
            if pending:
                blk = jnp.concatenate(pending, axis=0).astype(a_scr.dtype)
                a_scr[pl.ds(row, blk.shape[0]), pl.ds(b * MW, MW)] = blk

        # ---- all three scale convs as ONE matmul + LeakyReLU(0.1) ----
        # TODO(synk): at production sizes on v7x, tile this contraction by kernel row
        # (7 matmuls into an f32 accumulator) if the (KK, B*MW) scratch nears 64 MiB VMEM.
        feats = jnp.dot(w_all_ref[...], a_scr[...], preferred_element_type=f32)   # (R3p, B*MW)
        feats = _leaky(feats + b_all_ref[...], 0.1)

        # ---- 1x1 fusion (rows of `feats` already ARE the [f3|f5|f7] channel concat) ----
        fused = jnp.dot(wf_ref[...], feats.astype(wf_ref.dtype),
                        preferred_element_type=f32) + bf_ref[...]
        fused = _leaky(fused, 0.01)                                                # (Cout, B*MW)

        # ---- in-kernel valid-column mask (row stride Wq > W -> cols W..Wq-1 garbage) ----
        col = jax.lax.broadcasted_iota(jnp.int32, (1, MW), 1)
        maskb = (col % Wq) < W
        maskf = maskb.astype(f32)

        # ---- CBAM channel attention: both SE branches for all images in one RHS ----
        lane2b = jax.lax.broadcasted_iota(jnp.int32, (1, 2 * B), 1)
        mc = jnp.zeros((Cout, 2 * B), f32)
        for b in range(B):
            fb = fused[:, b * MW:(b + 1) * MW]
            mx = jnp.max(jnp.where(maskb, fb, -3.0e38), axis=1, keepdims=True)
            av = jnp.sum(fb * maskf, axis=1, keepdims=True) * (1.0 / (H * W))
            mc = mc + mx * (lane2b == 2 * b).astype(f32) \
                    + av * (lane2b == 2 * b + 1).astype(f32)
        hca = jnp.maximum(jnp.dot(wca1t_ref[...], mc, preferred_element_type=f32), 0.0)
        yca = jnp.dot(wca2t_ref[...], hca, preferred_element_type=f32)             # (Cout, 2B)

        # ---- channel-gated features + masked pooled maps for spatial attention ----
        sa_scr[...] = jnp.zeros(sa_scr.shape, f32)
        out1_list = []
        for b in range(B):
            ca = jax.nn.sigmoid(yca[:, 2 * b:2 * b + 1] + yca[:, 2 * b + 1:2 * b + 2])
            ob = fused[:, b * MW:(b + 1) * MW] * ca                                # (Cout, MW)
            out1_list.append(ob)
            sa_scr[pl.ds(b, 1), pl.ds(SA_OFF, MW)] = \
                jnp.max(ob, axis=0, keepdims=True) * maskf
            sa_scr[pl.ds(B + b, 1), pl.ds(SA_OFF, MW)] = \
                jnp.mean(ob, axis=0, keepdims=True) * maskf

        # ---- CBAM spatial attention: 7x7 conv via the same flat-shift trick ----
        accs = [jnp.zeros((B, MW), f32) for _ in range(4)]                 # 4 indep. chains
        for di in range(K7):
            base = (sa_scr[:, pl.ds(di * Wq, MW)] if roll_mode is not None else None)
            for dj in range(K7):
                t = di * K7 + dj
                if roll_mode is None:
                    slab = sa_scr[:, pl.ds(di * Wq + dj, MW)]
                else:
                    slab = shifted(base, dj)
                accs[t % 4] = accs[t % 4] + (wsa_ref[2 * t] * slab[:B, :]
                                             + wsa_ref[2 * t + 1] * slab[B:, :])
        sa = jax.nn.sigmoid(accs[0] + accs[1] + accs[2] + accs[3] + bsa_ref[0])    # (B, MW)

        # ---- out = out1 * sa + fused  (CBAM residual); lane-dense per-image stores ----
        for b in range(B):
            out_ref[b, :, :] = (out1_list[b] * sa[b:b + 1, :]
                                + fused[:, b * MW:(b + 1) * MW]).astype(out_ref.dtype)

    # -------------------------------- pallas_call --------------------------------
    def fullspec(shape):
        rank = len(shape)
        return pl.BlockSpec(shape, lambda n, _r=rank: (0,) * _r)

    # per-step VMEM budget (double-buffered in/out blocks + scratch + weights) + slack
    est = (KK * BMW * a_bytes + 2 * B * L * 4
           + 2 * (B * Cin * L * 4) + 2 * (B * Cout * MW * 4)
           + R3p * KK * a_bytes + (1 << 16))
    vmem_limit = int(min(64 * 2 ** 20, max(32 * 2 ** 20, 4 * est)))

    grid_spec = pltpu.PrefetchScalarGridSpec(
        num_scalar_prefetch=0,
        grid=(steps,),
        in_specs=[
            pl.BlockSpec((B, Cin, L), lambda n: (n, 0, 0)),              # x_flat (B images/step)
            fullspec((R3p, KK)), fullspec((R3p, 1)),                     # stacked conv w / b
            fullspec((Cout, R3p)), fullspec((Cout, 1)),                  # fusion w / b
            fullspec((Cr, Cout)), fullspec((Cout, Cr)),                  # channel-attn MLP
            pl.BlockSpec(memory_space=pltpu.MemorySpace.SMEM),           # wsa (98,)
            pl.BlockSpec(memory_space=pltpu.MemorySpace.SMEM),           # bsa (1,)
        ],
        out_specs=pl.BlockSpec((B, Cout, MW), lambda n: (n, 0, 0)),
        scratch_shapes=[pltpu.VMEM((KK, BMW), matmul_dtype),             # im2col^T
                        pltpu.VMEM((2 * B, L), jnp.float32)],            # padded SA maps
    )

    out_flat = pl.pallas_call(
        kernel,
        out_shape=jax.ShapeDtypeStruct((N_pad, Cout, MW), jnp.float32),
        grid_spec=grid_spec,
        compiler_params=pltpu.CompilerParams(
            dimension_semantics=("parallel",), vmem_limit_bytes=vmem_limit),
    )(x_flat, w_all, b_all, wf_cm, bf_cm, wca1t, wca2t, wsa_v, bsa_v)

    # un-pad the flat spatial axis and return to NHWC
    out = out_flat[:N].reshape(N, Cout, H, Wq)[:, :, :, :W]
    return jnp.transpose(out, (0, 2, 3, 1))


# ---------------- pure-JAX reference (for correctness check) ----------------
def _reference(x, p):
    def conv(inp, w, b, pad):
        out = jax.lax.conv_general_dilated(
            inp, w, (1, 1), [(pad, pad), (pad, pad)],
            dimension_numbers=('NHWC', 'HWIO', 'NHWC'),
            precision=jax.lax.Precision.HIGHEST)
        return out + b.reshape(1, 1, 1, -1)

    f3 = _leaky(conv(x, p['w3'], p['b3'], 1), 0.1)
    f5 = _leaky(conv(x, p['w5'], p['b5'], 2), 0.1)
    f7 = _leaky(conv(x, p['w7'], p['b7'], 3), 0.1)
    comb = jnp.concatenate([f3, f5, f7], axis=-1)
    fused = _leaky(jnp.einsum('nhwc,cd->nhwd', comb, p['wf'],
                              precision=jax.lax.Precision.HIGHEST)
                   + p['bf'].reshape(1, 1, 1, -1), 0.01)
    mx = jnp.max(fused, axis=(1, 2))
    av = jnp.mean(fused, axis=(1, 2))
    se = lambda v: jnp.maximum(v @ p['wca1'], 0.0) @ p['wca2']
    ca = jax.nn.sigmoid(se(mx) + se(av))
    out1 = fused * ca[:, None, None, :]
    mxs = jnp.max(out1, axis=-1, keepdims=True)
    avs = jnp.mean(out1, axis=-1, keepdims=True)
    sa_in = jnp.concatenate([mxs, avs], axis=-1)
    sa = jax.nn.sigmoid(conv(sa_in, p['wsa'].reshape(7, 7, 2, 1),
                             p['bsa'].reshape(1), 3))
    return out1 * sa + fused


def init_params(key, c_in, c_out, reduction):
    c_r = max(c_out // reduction, 1)
    ks = jax.random.split(key, 12)
    nrm = lambda k, shape, s: s * jax.random.normal(k, shape, jnp.float32)
    return {
        'w3': nrm(ks[0], (3, 3, c_in, c_out), 0.15),
        'b3': nrm(ks[1], (c_out,), 0.05),
        'w5': nrm(ks[2], (5, 5, c_in, c_out), 0.10),
        'b5': nrm(ks[3], (c_out,), 0.05),
        'w7': nrm(ks[4], (7, 7, c_in, c_out), 0.08),
        'b7': nrm(ks[5], (c_out,), 0.05),
        'wf': nrm(ks[6], (3 * c_out, c_out), 0.15),
        'bf': nrm(ks[7], (c_out,), 0.05),
        'wca1': nrm(ks[8], (c_out, c_r), 0.3),
        'wca2': nrm(ks[9], (c_r, c_out), 0.3),
        'wsa': nrm(ks[10], (7, 7, 2), 0.1),
        'bsa': nrm(ks[11], (1,), 0.05),
    }


if __name__ == "__main__":
    key = jax.random.PRNGKey(0)
    kx, kp = jax.random.split(key)
    N, Cin, Cout, H, W = 2, 4, 8, 16, 16        # in_channels=4, out_channels=8, reduction=8

    x = jax.random.normal(kx, (N, H, W, Cin), jnp.float32)
    params = init_params(kp, Cin, Cout, reduction=8)

    out = multi_scale_attention_block(x, params)     # bf16 MXU operands, f32 accumulation
    out = jax.block_until_ready(out)
    assert out.shape == (N, H, W, Cout)

    ref = _reference(x, params)
    # tolerance accounts for bf16 matmul operands (f32 path passes at 2e-2)
    np.testing.assert_allclose(np.asarray(out), np.asarray(ref), atol=3e-2, rtol=3e-2)

    print("KERNEL_OK")
</pallas_src>

<mosaic_0001>
module attributes {stable_mosaic.version = 11 : i64} {
  func.func @k(%arg0: memref<8x128xf32, #tpu.memory_space<vmem>>, %arg1: memref<8x128xf32, #tpu.memory_space<vmem>>) attributes {dimension_semantics = [], scalar_prefetch = 0 : i64, scratch_operands = 0 : i64, tpu.core_type = #tpu.core_type<tc>} {
    %c0 = arith.constant 0 : index
    %c0_0 = arith.constant 0 : index
    %0 = vector.load %arg0[%c0, %c0_0] : memref<8x128xf32, #tpu.memory_space<vmem>>, vector<8x128xf32>
    %c1_i32 = arith.constant 1 : i32
    %1 = tpu.dynamic_rotate %0 by %c1_i32 dim 1 : vector<8x128xf32>, i32 -> vector<8x128xf32>
    %c0_1 = arith.constant 0 : index
    %c0_2 = arith.constant 0 : index
    %2 = vector.load %arg1[%c0_1, %c0_2] : memref<8x128xf32, #tpu.memory_space<vmem>>, vector<8x128xf32>
    tpu.vector_store %arg1[%c0_1, %c0_2], %1 {strides = array<i32>} : memref<8x128xf32, #tpu.memory_space<vmem>>, vector<8x128xf32>,
    return
  }
}

module attributes {stable_mosaic.version = 11 : i64} {
  func.func @kernel(%arg0: i32, %arg1: memref<1x4x640xf32, #tpu.memory_space<vmem>>, %arg2: memref<32x196xbf16, #tpu.memory_space<vmem>>, %arg3: memref<32x1xf32, #tpu.memory_space<vmem>>, %arg4: memref<8x32xbf16, #tpu.memory_space<vmem>>, %arg5: memref<8x1xf32, #tpu.memory_space<vmem>>, %arg6: memref<1x8xf32, #tpu.memory_space<vmem>>, %arg7: memref<8x1xf32, #tpu.memory_space<vmem>>, %arg8: memref<98xf32, #tpu.memory_space<smem>>, %arg9: memref<1xf32, #tpu.memory_space<smem>>, %arg10: memref<1x8x384xf32, #tpu.memory_space<vmem>>, %arg11: memref<196x384xbf16, #tpu.memory_space<vmem>>, %arg12: memref<2x640xf32, #tpu.memory_space<vmem>>) attributes {dimension_semantics = [#tpu.dimension_semantics<parallel>], iteration_bounds = array<i64: 2>, scalar_prefetch = 0 : i64, scratch_operands = 2 : i64, tpu.core_type = #tpu.core_type<tc>, window_params = [{transform_indices = @transform_0, window_bounds = array<i64: 1, 4, 640>}, {pipeline_mode = #tpu.pipeline_mode<synchronous>, transform_indices = @transform_1, window_bounds = array<i64: 32, 196>}, {pipeline_mode = #tpu.pipeline_mode<synchronous>, transform_indices = @transform_2, window_bounds = array<i64: 32, 1>}, {pipeline_mode = #tpu.pipeline_mode<synchronous>, transform_indices = @transform_3, window_bounds = array<i64: 8, 32>}, {pipeline_mode = #tpu.pipeline_mode<synchronous>, transform_indices = @transform_4, window_bounds = array<i64: 8, 1>}, {pipeline_mode = #tpu.pipeline_mode<synchronous>, transform_indices = @transform_5, window_bounds = array<i64: 1, 8>}, {pipeline_mode = #tpu.pipeline_mode<synchronous>, transform_indices = @transform_6, window_bounds = array<i64: 8, 1>}, {transform_indices = @transform_7, window_bounds = array<i64: 98>}, {transform_indices = @transform_8, window_bounds = array<i64: 1>}, {transform_indices = @transform_9, window_bounds = array<i64: 1, 8, 384>}]} {
    %c0 = arith.constant 0 : index
    %c0_0 = arith.constant 0 : index
    %c0_1 = arith.constant 0 : index
    %0 = vector.load %arg1[%c0, %c0_0, %c0_1] : memref<1x4x640xf32, #tpu.memory_space<vmem>>, vector<1x4x384xf32>
    %1 = vector.shape_cast %0 : vector<1x4x384xf32> to vector<4x384xf32>
    %c0_2 = arith.constant 0 : index
    %c0_3 = arith.constant 0 : index
    %c1 = arith.constant 1 : index
    %2 = vector.load %arg1[%c0_2, %c0_3, %c1] : memref<1x4x640xf32, #tpu.memory_space<vmem>>, vector<1x4x384xf32>
    %3 = vector.shape_cast %2 : vector<1x4x384xf32> to vector<4x384xf32>
    %c0_4 = arith.constant 0 : index
    %c0_5 = arith.constant 0 : index
    %c2 = arith.constant 2 : index
    %4 = vector.load %arg1[%c0_4, %c0_5, %c2] : memref<1x4x640xf32, #tpu.memory_space<vmem>>, vector<1x4x384xf32>
    %5 = vector.shape_cast %4 : vector<1x4x384xf32> to vector<4x384xf32>
    %c0_6 = arith.constant 0 : index
    %c0_7 = arith.constant 0 : index
    %c3 = arith.constant 3 : index
    %6 = vector.load %arg1[%c0_6, %c0_7, %c3] : memref<1x4x640xf32, #tpu.memory_space<vmem>>, vector<1x4x384xf32>
    %7 = vector.shape_cast %6 : vector<1x4x384xf32> to vector<4x384xf32>
    %8 = tpu.concatenate %1, %3, %5, %7 in 0 : vector<4x384xf32>, vector<4x384xf32>, vector<4x384xf32>, vector<4x384xf32> -> vector<16x384xf32>
    %9 = arith.truncf %8 : vector<16x384xf32> to vector<16x384xbf16>
    %c0_8 = arith.constant 0 : index
    %c0_9 = arith.constant 0 : index
    %10 = vector.load %arg11[%c0_8, %c0_9] : memref<196x384xbf16, #tpu.memory_space<vmem>>, vector<16x384xbf16>
    tpu.vector_store %arg11[%c0_8, %c0_9], %9 {strides = array<i32>} : memref<196x384xbf16, #tpu.memory_space<vmem>>, vector<16x384xbf16>,
    %c0_10 = arith.constant 0 : index
    %c0_11 = arith.constant 0 : index
    %c4 = arith.constant 4 : index
    %11 = vector.load %arg1[%c0_10, %c0_11, %c4] : memref<1x4x640xf32, #tpu.memory_space<vmem>>, vector<1x4x384xf32>
    %12 = vector.shape_cast %11 : vector<1x4x384xf32> to vector<4x384xf32>
    %c0_12 = arith.constant 0 : index
    %c0_13 = arith.constant 0 : index
    %c5 = arith.constant 5 : index
    %13 = vector.load %arg1[%c0_12, %c0_13, %c5] : memref<1x4x640xf32, #tpu.memory_space<vmem>>, vector<1x4x384xf32>
    %14 = vector.shape_cast %13 : vector<1x4x384xf32> to vector<4x384xf32>
    %c0_14 = arith.constant 0 : index
    %c0_15 = arith.constant 0 : index
    %c6 = arith.constant 6 : index
    %15 = vector.load %arg1[%c0_14, %c0_15, %c6] : memref<1x4x640xf32, #tpu.memory_space<vmem>>, vector<1x4x384xf32>
    %16 = vector.shape_cast %15 : vector<1x4x384xf32> to vector<4x384xf32>
    %c0_16 = arith.constant 0 : index
    %c0_17 = arith.constant 0 : index
    %c24 = arith.constant 24 : index
    %17 = vector.load %arg1[%c0_16, %c0_17, %c24] : memref<1x4x640xf32, #tpu.memory_space<vmem>>, vector<1x4x384xf32>
    %18 = vector.shape_cast %17 : vector<1x4x384xf32> to vector<4x384xf32>
    %19 = tpu.concatenate %12, %14, %16, %18 in 0 : vector<4x384xf32>, vector<4x384xf32>, vector<4x384xf32>, vector<4x384xf32> -> vector<16x384xf32>
    %20 = arith.truncf %19 : vector<16x384xf32> to vector<16x384xbf16>
    %c16 = arith.constant 16 : index
    %c0_18 = arith.constant 0 : index
    %21 = vector.load %arg11[%c16, %c0_18] : memref<196x384xbf16, #tpu.memory_space<vmem>>, vector<16x384xbf16>
    tpu.vector_store %arg11[%c16, %c0_18], %20 {strides = array<i32>} : memref<196x384xbf16, #tpu.memory_space<vmem>>, vector<16x384xbf16>,
    %c0_19 = arith.constant 0 : index
    %c0_20 = arith.constant 0 : index
    %c25 = arith.constant 25 : index
    %22 = vector.load %arg1[%c0_19, %c0_20, %c25] : memref<1x4x640xf32, #tpu.memory_space<vmem>>, vector<1x4x384xf32>
    %23 = vector.shape_cast %22 : vector<1x4x384xf32> to vector<4x384xf32>
    %c0_21 = arith.constant 0 : index
    %c0_22 = arith.constant 0 : index
    %c26 = arith.constant 26 : index
    %24 = vector.load %arg1[%c0_21, %c0_22, %c26] : memref<1x4x640xf32, #tpu.memory_space<vmem>>, vector<1x4x384xf32>
    %25 = vector.shape_cast %24 : vector<1x4x384xf32> to vector<4x384xf32>
    %c0_23 = arith.constant 0 : index
    %c0_24 = arith.constant 0 : index
    %c27 = arith.constant 27 : index
    %26 = vector.load %arg1[%c0_23, %c0_24, %c27] : memref<1x4x640xf32, #tpu.memory_space<vmem>>, vector<1x4x384xf32>
    %27 = vector.shape_cast %26 : vector<1x4x384xf32> to vector<4x384xf32>
    %c0_25 = arith.constant 0 : index
    %c0_26 = arith.constant 0 : index
    %c28 = arith.constant 28 : index
    %28 = vector.load %arg1[%c0_25, %c0_26, %c28] : memref<1x4x640xf32, #tpu.memory_space<vmem>>, vector<1x4x384xf32>
    %29 = vector.shape_cast %28 : vector<1x4x384xf32> to vector<4x384xf32>
    %30 = tpu.concatenate %23, %25, %27, %29 in 0 : vector<4x384xf32>, vector<4x384xf32>, vector<4x384xf32>, vector<4x384xf32> -> vector<16x384xf32>
    %31 = arith.truncf %30 : vector<16x384xf32> to vector<16x384xbf16>
    %c32 = arith.constant 32 : index
    %c0_27 = arith.constant 0 : index
    %32 = vector.load %arg11[%c32, %c0_27] : memref<196x384xbf16, #tpu.memory_space<vmem>>, vector<16x384xbf16>
    tpu.vector_store %arg11[%c32, %c0_27], %31 {strides = array<i32>} : memref<196x384xbf16, #tpu.memory_space<vmem>>, vector<16x384xbf16>,
    %c0_28 = arith.constant 0 : index
    %c0_29 = arith.constant 0 : index
    %c29 = arith.constant 29 : index
    %33 = vector.load %arg1[%c0_28, %c0_29, %c29] : memref<1x4x640xf32, #tpu.memory_space<vmem>>, vector<1x4x384xf32>
    %34 = vector.shape_cast %33 : vector<1x4x384xf32> to vector<4x384xf32>
    %c0_30 = arith.constant 0 : index
    %c0_31 = arith.constant 0 : index
    %c30 = arith.constant 30 : index
    %35 = vector.load %arg1[%c0_30, %c0_31, %c30] : memref<1x4x640xf32, #tpu.memory_space<vmem>>, vector<1x4x384xf32>
    %36 = vector.shape_cast %35 : vector<1x4x384xf32> to vector<4x384xf32>
    %c0_32 = arith.constant 0 : index
    %c0_33 = arith.constant 0 : index
    %c48 = arith.constant 48 : index
    %37 = vector.load %arg1[%c0_32, %c0_33, %c48] : memref<1x4x640xf32, #tpu.memory_space<vmem>>, vector<1x4x384xf32>
    %38 = vector.shape_cast %37 : vector<1x4x384xf32> to vector<4x384xf32>
    %c0_34 = arith.constant 0 : index
    %c0_35 = arith.constant 0 : index
    %c49 = arith.constant 49 : index
    %39 = vector.load %arg1[%c0_34, %c0_35, %c49] : memref<1x4x640xf32, #tpu.memory_space<vmem>>, vector<1x4x384xf32>
    %40 = vector.shape_cast %39 : vector<1x4x384xf32> to vector<4x384xf32>
    %41 = tpu.concatenate %34, %36, %38, %40 in 0 : vector<4x384xf32>, vector<4x384xf32>, vector<4x384xf32>, vector<4x384xf32> -> vector<16x384xf32>
    %42 = arith.truncf %41 : vector<16x384xf32> to vector<16x384xbf16>
    %c48_36 = arith.constant 48 : index
    %c0_37 = arith.constant 0 : index
    %43 = vector.load %arg11[%c48_36, %c0_37] : memref<196x384xbf16, #tpu.memory_space<vmem>>, vector<16x384xbf16>
    tpu.vector_store %arg11[%c48_36, %c0_37], %42 {strides = array<i32>} : memref<196x384xbf16, #tpu.memory_space<vmem>>, vector<16x384xbf16>,
    %c0_38 = arith.constant 0 : index
    %c0_39 = arith.constant 0 : index
    %c50 = arith.constant 50 : index
    %44 = vector.load %arg1[%c0_38, %c0_39, %c50] : memref<1x4x640xf32, #tpu.memory_space<vmem>>, vector<1x4x384xf32>
    %45 = vector.shape_cast %44 : vector<1x4x384xf32> to vector<4x384xf32>
    %c0_40 = arith.constant 0 : index
    %c0_41 = arith.constant 0 : index
    %c51 = arith.constant 51 : index
    %46 = vector.load %arg1[%c0_40, %c0_41, %c51] : memref<1x4x640xf32, #tpu.memory_space<vmem>>, vector<1x4x384xf32>
    %47 = vector.shape_cast %46 : vector<1x4x384xf32> to vector<4x384xf32>
    %c0_42 = arith.constant 0 : index
    %c0_43 = arith.constant 0 : index
    %c52 = arith.constant 52 : index
    %48 = vector.load %arg1[%c0_42, %c0_43, %c52] : memref<1x4x640xf32, #tpu.memory_space<vmem>>, vector<1x4x384xf32>
    %49 = vector.shape_cast %48 : vector<1x4x384xf32> to vector<4x384xf32>
    %c0_44 = arith.constant 0 : index
    %c0_45 = arith.constant 0 : index
    %c53 = arith.constant 53 : index
    %50 = vector.load %arg1[%c0_44, %c0_45, %c53] : memref<1x4x640xf32, #tpu.memory_space<vmem>>, vector<1x4x384xf32>
    %51 = vector.shape_cast %50 : vector<1x4x384xf32> to vector<4x384xf32>
    %52 = tpu.concatenate %45, %47, %49, %51 in 0 : vector<4x384xf32>, vector<4x384xf32>, vector<4x384xf32>, vector<4x384xf32> -> vector<16x384xf32>
    %53 = arith.truncf %52 : vector<16x384xf32> to vector<16x384xbf16>
    %c64 = arith.constant 64 : index
    %c0_46 = arith.constant 0 : index
    %54 = vector.load %arg11[%c64, %c0_46] : memref<196x384xbf16, #tpu.memory_space<vmem>>, vector<16x384xbf16>
    tpu.vector_store %arg11[%c64, %c0_46], %53 {strides = array<i32>} : memref<196x384xbf16, #tpu.memory_space<vmem>>, vector<16x384xbf16>,
    %c0_47 = arith.constant 0 : index
    %c0_48 = arith.constant 0 : index
    %c54 = arith.constant 54 : index
    %55 = vector.load %arg1[%c0_47, %c0_48, %c54] : memref<1x4x640xf32, #tpu.memory_space<vmem>>, vector<1x4x384xf32>
    %56 = vector.shape_cast %55 : vector<1x4x384xf32> to vector<4x384xf32>
    %c0_49 = arith.constant 0 : index
    %c0_50 = arith.constant 0 : index
    %c72 = arith.constant 72 : index
    %57 = vector.load %arg1[%c0_49, %c0_50, %c72] : memref<1x4x640xf32, #tpu.memory_space<vmem>>, vector<1x4x384xf32>
    %58 = vector.shape_cast %57 : vector<1x4x384xf32> to vector<4x384xf32>
    %c0_51 = arith.constant 0 : index
    %c0_52 = arith.constant 0 : index
    %c73 = arith.constant 73 : index
    %59 = vector.load %arg1[%c0_51, %c0_52, %c73] : memref<1x4x640xf32, #tpu.memory_space<vmem>>, vector<1x4x384xf32>
    %60 = vector.shape_cast %59 : vector<1x4x384xf32> to vector<4x384xf32>
    %c0_53 = arith.constant 0 : index
    %c0_54 = arith.constant 0 : index
    %c74 = arith.constant 74 : index
    %61 = vector.load %arg1[%c0_53, %c0_54, %c74] : memref<1x4x640xf32, #tpu.memory_space<vmem>>, vector<1x4x384xf32>
    %62 = vector.shape_cast %61 : vector<1x4x384xf32> to vector<4x384xf32>
    %63 = tpu.concatenate %56, %58, %60, %62 in 0 : vector<4x384xf32>, vector<4x384xf32>, vector<4x384xf32>, vector<4x384xf32> -> vector<16x384xf32>
    %64 = arith.truncf %63 : vector<16x384xf32> to vector<16x384xbf16>
    %c80 = arith.constant 80 : index
    %c0_55 = arith.constant 0 : index
    %65 = vector.load %arg11[%c80, %c0_55] : memref<196x384xbf16, #tpu.memory_space<vmem>>, vector<16x384xbf16>
    tpu.vector_store %arg11[%c80, %c0_55], %64 {strides = array<i32>} : memref<196x384xbf16, #tpu.memory_space<vmem>>, vector<16x384xbf16>,
    %c0_56 = arith.constant 0 : index
    %c0_57 = arith.constant 0 : index
    %c75 = arith.constant 75 : index
    %66 = vector.load %arg1[%c0_56, %c0_57, %c75] : memref<1x4x640xf32, #tpu.memory_space<vmem>>, vector<1x4x384xf32>
    %67 = vector.shape_cast %66 : vector<1x4x384xf32> to vector<4x384xf32>
    %c0_58 = arith.constant 0 : index
    %c0_59 = arith.constant 0 : index
    %c76 = arith.constant 76 : index
    %68 = vector.load %arg1[%c0_58, %c0_59, %c76] : memref<1x4x640xf32, #tpu.memory_space<vmem>>, vector<1x4x384xf32>
    %69 = vector.shape_cast %68 : vector<1x4x384xf32> to vector<4x384xf32>
    %c0_60 = arith.constant 0 : index
    %c0_61 = arith.constant 0 : index
    %c77 = arith.constant 77 : index
    %70 = vector.load %arg1[%c0_60, %c0_61, %c77] : memref<1x4x640xf32, #tpu.memory_space<vmem>>, vector<1x4x384xf32>
    %71 = vector.shape_cast %70 : vector<1x4x384xf32> to vector<4x384xf32>
    %c0_62 = arith.constant 0 : index
    %c0_63 = arith.constant 0 : index
    %c78 = arith.constant 78 : index
    %72 = vector.load %arg1[%c0_62, %c0_63, %c78] : memref<1x4x640xf32, #tpu.memory_space<vmem>>, vector<1x4x384xf32>
    %73 = vector.shape_cast %72 : vector<1x4x384xf32> to vector<4x384xf32>
    %74 = tpu.concatenate %67, %69, %71, %73 in 0 : vector<4x384xf32>, vector<4x384xf32>, vector<4x384xf32>, vector<4x384xf32> -> vector<16x384xf32>
    %75 = arith.truncf %74 : vector<16x384xf32> to vector<16x384xbf16>
    %c96 = arith.constant 96 : index
    %c0_64 = arith.constant 0 : index
    %76 = vector.load %arg11[%c96, %c0_64] : memref<196x384xbf16, #tpu.memory_space<vmem>>, vector<16x384xbf16>
    tpu.vector_store %arg11[%c96, %c0_64], %75 {strides = array<i32>} : memref<196x384xbf16, #tpu.memory_space<vmem>>, vector<16x384xbf16>,
    %c0_65 = arith.constant 0 : index
    %c0_66 = arith.constant 0 : index
    %c96_67 = arith.constant 96 : index
    %77 = vector.load %arg1[%c0_65, %c0_66, %c96_67] : memref<1x4x640xf32, #tpu.memory_space<vmem>>, vector<1x4x384xf32>
    %78 = vector.shape_cast %77 : vector<1x4x384xf32> to vector<4x384xf32>
    %c0_68 = arith.constant 0 : index
    %c0_69 = arith.constant 0 : index
    %c97 = arith.constant 97 : index
    %79 = vector.load %arg1[%c0_68, %c0_69, %c97] : memref<1x4x640xf32, #tpu.memory_space<vmem>>, vector<1x4x384xf32>
    %80 = vector.shape_cast %79 : vector<1x4x384xf32> to vector<4x384xf32>
    %c0_70 = arith.constant 0 : index
    %c0_71 = arith.constant 0 : index
    %c98 = arith.constant 98 : index
    %81 = vector.load %arg1[%c0_70, %c0_71, %c98] : memref<1x4x640xf32, #tpu.memory_space<vmem>>, vector<1x4x384xf32>
    %82 = vector.shape_cast %81 : vector<1x4x384xf32> to vector<4x384xf32>
    %c0_72 = arith.constant 0 : index
    %c0_73 = arith.constant 0 : index
    %c99 = arith.constant 99 : index
    %83 = vector.load %arg1[%c0_72, %c0_73, %c99] : memref<1x4x640xf32, #tpu.memory_space<vmem>>, vector<1x4x384xf32>
    %84 = vector.shape_cast %83 : vector<1x4x384xf32> to vector<4x384xf32>
    %85 = tpu.concatenate %78, %80, %82, %84 in 0 : vector<4x384xf32>, vector<4x384xf32>, vector<4x384xf32>, vector<4x384xf32> -> vector<16x384xf32>
    %86 = arith.truncf %85 : vector<16x384xf32> to vector<16x384xbf16>
    %c112 = arith.constant 112 : index
    %c0_74 = arith.constant 0 : index
    %87 = vector.load %arg11[%c112, %c0_74] : memref<196x384xbf16, #tpu.memory_space<vmem>>, vector<16x384xbf16>
    tpu.vector_store %arg11[%c112, %c0_74], %86 {strides = array<i32>} : memref<196x384xbf16, #tpu.memory_space<vmem>>, vector<16x384xbf16>,
    %c0_75 = arith.constant 0 : index
    %c0_76 = arith.constant 0 : index
    %c100 = arith.constant 100 : index
    %88 = vector.load %arg1[%c0_75, %c0_76, %c100] : memref<1x4x640xf32, #tpu.memory_space<vmem>>, vector<1x4x384xf32>
    %89 = vector.shape_cast %88 : vector<1x4x384xf32> to vector<4x384xf32>
    %c0_77 = arith.constant 0 : index
    %c0_78 = arith.constant 0 : index
    %c101 = arith.constant 101 : index
    %90 = vector.load %arg1[%c0_77, %c0_78, %c101] : memref<1x4x640xf32, #tpu.memory_space<vmem>>, vector<1x4x384xf32>
    %91 = vector.shape_cast %90 : vector<1x4x384xf32> to vector<4x384xf32>
    %c0_79 = arith.constant 0 : index
    %c0_80 = arith.constant 0 : index
    %c102 = arith.constant 102 : index
    %92 = vector.load %arg1[%c0_79, %c0_80, %c102] : memref<1x4x640xf32, #tpu.memory_space<vmem>>, vector<1x4x384xf32>
    %93 = vector.shape_cast %92 : vector<1x4x384xf32> to vector<4x384xf32>
    %c0_81 = arith.constant 0 : index
    %c0_82 = arith.constant 0 : index
    %c120 = arith.constant 120 : index
    %94 = vector.load %arg1[%c0_81, %c0_82, %c120] : memref<1x4x640xf32, #tpu.memory_space<vmem>>, vector<1x4x384xf32>
    %95 = vector.shape_cast %94 : vector<1x4x384xf32> to vector<4x384xf32>
    %96 = tpu.concatenate %89, %91, %93, %95 in 0 : vector<4x384xf32>, vector<4x384xf32>, vector<4x384xf32>, vector<4x384xf32> -> vector<16x384xf32>
    %97 = arith.truncf %96 : vector<16x384xf32> to vector<16x384xbf16>
    %c128 = arith.constant 128 : index
    %c0_83 = arith.constant 0 : index
    %98 = vector.load %arg11[%c128, %c0_83] : memref<196x384xbf16, #tpu.memory_space<vmem>>, vector<16x384xbf16>
    tpu.vector_store %arg11[%c128, %c0_83], %97 {strides = array<i32>} : memref<196x384xbf16, #tpu.memory_space<vmem>>, vector<16x384xbf16>,
    %c0_84 = arith.constant 0 : index
    %c0_85 = arith.constant 0 : index
    %c121 = arith.constant 121 : index
    %99 = vector.load %arg1[%c0_84, %c0_85, %c121] : memref<1x4x640xf32, #tpu.memory_space<vmem>>, vector<1x4x384xf32>
    %100 = vector.shape_cast %99 : vector<1x4x384xf32> to vector<4x384xf32>
    %c0_86 = arith.constant 0 : index
    %c0_87 = arith.constant 0 : index
    %c122 = arith.constant 122 : index
    %101 = vector.load %arg1[%c0_86, %c0_87, %c122] : memref<1x4x640xf32, #tpu.memory_space<vmem>>, vector<1x4x384xf32>
    %102 = vector.shape_cast %101 : vector<1x4x384xf32> to vector<4x384xf32>
    %c0_88 = arith.constant 0 : index
    %c0_89 = arith.constant 0 : index
    %c123 = arith.constant 123 : index
    %103 = vector.load %arg1[%c0_88, %c0_89, %c123] : memref<1x4x640xf32, #tpu.memory_space<vmem>>, vector<1x4x384xf32>
    %104 = vector.shape_cast %103 : vector<1x4x384xf32> to vector<4x384xf32>
    %c0_90 = arith.constant 0 : index
    %c0_91 = arith.constant 0 : index
    %c124 = arith.constant 124 : index
    %105 = vector.load %arg1[%c0_90, %c0_91, %c124] : memref<1x4x640xf32, #tpu.memory_space<vmem>>, vector<1x4x384xf32>
    %106 = vector.shape_cast %105 : vector<1x4x384xf32> to vector<4x384xf32>
    %107 = tpu.concatenate %100, %102, %104, %106 in 0 : vector<4x384xf32>, vector<4x384xf32>, vector<4x384xf32>, vector<4x384xf32> -> vector<16x384xf32>
    %108 = arith.truncf %107 : vector<16x384xf32> to vector<16x384xbf16>
    %c144 = arith.constant 144 : index
    %c0_92 = arith.constant 0 : index
    %109 = vector.load %arg11[%c144, %c0_92] : memref<196x384xbf16, #tpu.memory_space<vmem>>, vector<16x384xbf16>
    tpu.vector_store %arg11[%c144, %c0_92], %108 {strides = array<i32>} : memref<196x384xbf16, #tpu.memory_space<vmem>>, vector<16x384xbf16>,
    %c0_93 = arith.constant 0 : index
    %c0_94 = arith.constant 0 : index
    %c125 = arith.constant 125 : index
    %110 = vector.load %arg1[%c0_93, %c0_94, %c125] : memref<1x4x640xf32, #tpu.memory_space<vmem>>, vector<1x4x384xf32>
    %111 = vector.shape_cast %110 : vector<1x4x384xf32> to vector<4x384xf32>
    %c0_95 = arith.constant 0 : index
    %c0_96 = arith.constant 0 : index
    %c126 = arith.constant 126 : index
    %112 = vector.load %arg1[%c0_95, %c0_96, %c126] : memref<1x4x640xf32, #tpu.memory_space<vmem>>, vector<1x4x384xf32>
    %113 = vector.shape_cast %112 : vector<1x4x384xf32> to vector<4x384xf32>
    %c0_97 = arith.constant 0 : index
    %c0_98 = arith.constant 0 : index
    %c144_99 = arith.constant 144 : index
    %114 = vector.load %arg1[%c0_97, %c0_98, %c144_99] : memref<1x4x640xf32, #tpu.memory_space<vmem>>, vector<1x4x384xf32>
    %115 = vector.shape_cast %114 : vector<1x4x384xf32> to vector<4x384xf32>
    %c0_100 = arith.constant 0 : index
    %c0_101 = arith.constant 0 : index
    %c145 = arith.constant 145 : index
    %116 = vector.load %arg1[%c0_100, %c0_101, %c145] : memref<1x4x640xf32, #tpu.memory_space<vmem>>, vector<1x4x384xf32>
    %117 = vector.shape_cast %116 : vector<1x4x384xf32> to vector<4x384xf32>
    %118 = tpu.concatenate %111, %113, %115, %117 in 0 : vector<4x384xf32>, vector<4x384xf32>, vector<4x384xf32>, vector<4x384xf32> -> vector<16x384xf32>
    %119 = arith.truncf %118 : vector<16x384xf32> to vector<16x384xbf16>
    %c160 = arith.constant 160 : index
    %c0_102 = arith.constant 0 : index
    %120 = vector.load %arg11[%c160, %c0_102] : memref<196x384xbf16, #tpu.memory_space<vmem>>, vector<16x384xbf16>
    tpu.vector_store %arg11[%c160, %c0_102], %119 {strides = array<i32>} : memref<196x384xbf16, #tpu.memory_space<vmem>>, vector<16x384xbf16>,
    %c0_103 = arith.constant 0 : index
    %c0_104 = arith.constant 0 : index
    %c146 = arith.constant 146 : index
    %121 = vector.load %arg1[%c0_103, %c0_104, %c146] : memref<1x4x640xf32, #tpu.memory_space<vmem>>, vector<1x4x384xf32>
    %122 = vector.shape_cast %121 : vector<1x4x384xf32> to vector<4x384xf32>
    %c0_105 = arith.constant 0 : index
    %c0_106 = arith.constant 0 : index
    %c147 = arith.constant 147 : index
    %123 = vector.load %arg1[%c0_105, %c0_106, %c147] : memref<1x4x640xf32, #tpu.memory_space<vmem>>, vector<1x4x384xf32>
    %124 = vector.shape_cast %123 : vector<1x4x384xf32> to vector<4x384xf32>
    %c0_107 = arith.constant 0 : index
    %c0_108 = arith.constant 0 : index
    %c148 = arith.constant 148 : index
    %125 = vector.load %arg1[%c0_107, %c0_108, %c148] : memref<1x4x640xf32, #tpu.memory_space<vmem>>, vector<1x4x384xf32>
    %126 = vector.shape_cast %125 : vector<1x4x384xf32> to vector<4x384xf32>
    %c0_109 = arith.constant 0 : index
    %c0_110 = arith.constant 0 : index
    %c149 = arith.constant 149 : index
    %127 = vector.load %arg1[%c0_109, %c0_110, %c149] : memref<1x4x640xf32, #tpu.memory_space<vmem>>, vector<1x4x384xf32>
    %128 = vector.shape_cast %127 : vector<1x4x384xf32> to vector<4x384xf32>
    %129 = tpu.concatenate %122, %124, %126, %128 in 0 : vector<4x384xf32>, vector<4x384xf32>, vector<4x384xf32>, vector<4x384xf32> -> vector<16x384xf32>
    %130 = arith.truncf %129 : vector<16x384xf32> to vector<16x384xbf16>
    %c176 = arith.constant 176 : index
    %c0_111 = arith.constant 0 : index
    %131 = vector.load %arg11[%c176, %c0_111] : memref<196x384xbf16, #tpu.memory_space<vmem>>, vector<16x384xbf16>
    tpu.vector_store %arg11[%c176, %c0_111], %130 {strides = array<i32>} : memref<196x384xbf16, #tpu.memory_space<vmem>>, vector<16x384xbf16>,
    %c0_112 = arith.constant 0 : index
    %c0_113 = arith.constant 0 : index
    %c150 = arith.constant 150 : index
    %132 = vector.load %arg1[%c0_112, %c0_113, %c150] : memref<1x4x640xf32, #tpu.memory_space<vmem>>, vector<1x4x384xf32>
    %133 = vector.shape_cast %132 : vector<1x4x384xf32> to vector<4x384xf32>
    %134 = arith.truncf %133 : vector<4x384xf32> to vector<4x384xbf16>
    %c192 = arith.constant 192 : index
    %c0_114 = arith.constant 0 : index
    %135 = vector.load %arg11[%c192, %c0_114] : memref<196x384xbf16, #tpu.memory_space<vmem>>, vector<4x384xbf16>
    tpu.vector_store %arg11[%c192, %c0_114], %134 {strides = array<i32>} : memref<196x384xbf16, #tpu.memory_space<vmem>>, vector<4x384xbf16>,
    %c0_115 = arith.constant 0 : index
    %c0_116 = arith.constant 0 : index
    %136 = vector.load %arg2[%c0_115, %c0_116] : memref<32x196xbf16, #tpu.memory_space<vmem>>, vector<32x196xbf16>
    %c0_117 = arith.constant 0 : index
    %c0_118 = arith.constant 0 : index
    %137 = vector.load %arg11[%c0_117, %c0_118] : memref<196x384xbf16, #tpu.memory_space<vmem>>, vector<196x384xbf16>
    %cst = arith.constant dense<0.000000e+00> : vector<32x384xf32>
    %138 = tpu.matmul %136, %137, %cst {dimension_numbers = #tpu.dot_dimension_numbers<[1], [0], [0], [1], [0, 0, 1, 1], [], []>} : vector<32x196xbf16>, vector<196x384xbf16>, vector<32x384xf32> -> vector<32x384xf32>
    %c0_119 = arith.constant 0 : index
    %c0_120 = arith.constant 0 : index
    %139 = vector.load %arg3[%c0_119, %c0_120] : memref<32x1xf32, #tpu.memory_space<vmem>>, vector<32x1xf32>
    %140 = vector.broadcast %139 : vector<32x1xf32> to vector<32x384xf32>
    %141 = arith.addf %138, %140 : vector<32x384xf32>
    %cst_121 = arith.constant 0.000000e+00 : f32
    %142 = vector.broadcast %cst_121 : f32 to vector<32x384xf32>
    %143 = arith.cmpf oge, %141, %142 : vector<32x384xf32>
    %cst_122 = arith.constant 1.000000e-01 : f32
    %144 = vector.broadcast %cst_122 : f32 to vector<32x384xf32>
    %145 = arith.mulf %144, %141 : vector<32x384xf32>
    %146 = arith.select %143, %141, %145 : vector<32x384xi1>, vector<32x384xf32>
    %c0_123 = arith.constant 0 : index
    %c0_124 = arith.constant 0 : index
    %147 = vector.load %arg4[%c0_123, %c0_124] : memref<8x32xbf16, #tpu.memory_space<vmem>>, vector<8x32xbf16>
    %148 = arith.truncf %146 : vector<32x384xf32> to vector<32x384xbf16>
    %cst_125 = arith.constant dense<0.000000e+00> : vector<8x384xf32>
    %149 = tpu.matmul %147, %148, %cst_125 {dimension_numbers = #tpu.dot_dimension_numbers<[1], [0], [0], [1], [0, 0, 1, 1], [], []>} : vector<8x32xbf16>, vector<32x384xbf16>, vector<8x384xf32> -> vector<8x384xf32>
    %c0_126 = arith.constant 0 : index
    %c0_127 = arith.constant 0 : index
    %150 = vector.load %arg5[%c0_126, %c0_127] : memref<8x1xf32, #tpu.memory_space<vmem>>, vector<8x1xf32>
    %151 = vector.broadcast %150 : vector<8x1xf32> to vector<8x384xf32>
    %152 = arith.addf %149, %151 : vector<8x384xf32>
    %cst_128 = arith.constant 0.000000e+00 : f32
    %153 = vector.broadcast %cst_128 : f32 to vector<8x384xf32>
    %154 = arith.cmpf oge, %152, %153 : vector<8x384xf32>
    %cst_129 = arith.constant 0.00999999977 : f32
    %155 = vector.broadcast %cst_129 : f32 to vector<8x384xf32>
    %156 = arith.mulf %155, %152 : vector<8x384xf32>
    %157 = arith.select %154, %152, %156 : vector<8x384xi1>, vector<8x384xf32>
    %158 = tpu.iota {dimensions = array<i32: 1>} : vector<1x384xi32>
    %c24_i32 = arith.constant 24 : i32
    %c0_i32 = arith.constant 0 : i32
    %159 = arith.cmpi eq, %c24_i32, %c0_i32 : i32
    %c1_i32 = arith.constant 1 : i32
    %160 = arith.select %159, %c1_i32, %c24_i32 : i32
    %161 = vector.broadcast %160 : i32 to vector<1x384xi32>
    %162 = arith.remsi %158, %161 : vector<1x384xi32>
    %c0_i32_130 = arith.constant 0 : i32
    %163 = vector.broadcast %c0_i32_130 : i32 to vector<1x384xi32>
    %164 = arith.cmpi ne, %162, %163 : vector<1x384xi32>
    %c0_i32_131 = arith.constant 0 : i32
    %165 = vector.broadcast %c0_i32_131 : i32 to vector<1x384xi32>
    %166 = arith.cmpi slt, %162, %165 : vector<1x384xi32>
    %c0_i32_132 = arith.constant 0 : i32
    %167 = arith.cmpi slt, %160, %c0_i32_132 : i32
    %168 = vector.broadcast %167 : i1 to vector<1x384xi1>
    %169 = vector.broadcast %168 : vector<1x384xi1> to vector<1x384xi1>
    %170 = arith.xori %166, %169 : vector<1x384xi1>
    %171 = arith.andi %170, %164 : vector<1x384xi1>
    %172 = vector.broadcast %160 : i32 to vector<1x384xi32>
    %173 = arith.addi %162, %172 : vector<1x384xi32>
    %174 = arith.select %171, %173, %162 : vector<1x384xi1>, vector<1x384xi32>
    %c16_i32 = arith.constant 16 : i32
    %175 = vector.broadcast %c16_i32 : i32 to vector<1x384xi32>
    %176 = arith.cmpi slt, %174, %175 : vector<1x384xi32>
    %177 = arith.extui %176 : vector<1x384xi1> to vector<1x384xi32>
    %178 = arith.sitofp %177 : vector<1x384xi32> to vector<1x384xf32>
    %179 = tpu.iota {dimensions = array<i32: 1>} : vector<1x2xi32>
    %cst_133 = arith.constant 0.000000e+00 : f32
    %180 = vector.broadcast %cst_133 : f32 to vector<8x2xf32>
    %cst_134 = arith.constant -3.000000e+38 : f32
    %181 = vector.shape_cast %176 : vector<1x384xi1> to vector<1x384xi1>
    %182 = vector.broadcast %181 : vector<1x384xi1> to vector<8x384xi1>
    %183 = vector.broadcast %cst_134 : f32 to vector<8x384xf32>
    %184 = arith.select %182, %157, %183 : vector<8x384xi1>, vector<8x384xf32>
    %cst_135 = arith.constant dense<0xFF800000> : vector<8xf32>
    %185 = vector.multi_reduction <maximumf>, %184, %cst_135 [1] : vector<8x384xf32> to vector<8xf32>
    %186 = vector.shape_cast %185 : vector<8xf32> to vector<8x1xf32>
    %187 = vector.broadcast %178 : vector<1x384xf32> to vector<8x384xf32>
    %188 = arith.mulf %157, %187 : vector<8x384xf32>
    %cst_136 = arith.constant dense<0.000000e+00> : vector<8xf32>
    %189 = vector.multi_reduction <add>, %188, %cst_136 [1] : vector<8x384xf32> to vector<8xf32>
    %190 = vector.shape_cast %189 : vector<8xf32> to vector<8x1xf32>
    %cst_137 = arith.constant 3.906250e-03 : f32
    %191 = vector.broadcast %cst_137 : f32 to vector<8x1xf32>
    %192 = arith.mulf %190, %191 : vector<8x1xf32>
    %c0_i32_138 = arith.constant 0 : i32
    %193 = vector.broadcast %c0_i32_138 : i32 to vector<1x2xi32>
    %194 = arith.cmpi eq, %179, %193 : vector<1x2xi32>
    %195 = arith.extui %194 : vector<1x2xi1> to vector<1x2xi32>
    %196 = arith.sitofp %195 : vector<1x2xi32> to vector<1x2xf32>
    %197 = vector.broadcast %186 : vector<8x1xf32> to vector<8x2xf32>
    %198 = vector.broadcast %196 : vector<1x2xf32> to vector<8x2xf32>
    %199 = arith.mulf %197, %198 : vector<8x2xf32>
    %200 = arith.addf %180, %199 : vector<8x2xf32>
    %c1_i32_139 = arith.constant 1 : i32
    %201 = vector.broadcast %c1_i32_139 : i32 to vector<1x2xi32>
    %202 = arith.cmpi eq, %179, %201 : vector<1x2xi32>
    %203 = arith.extui %202 : vector<1x2xi1> to vector<1x2xi32>
    %204 = arith.sitofp %203 : vector<1x2xi32> to vector<1x2xf32>
    %205 = vector.broadcast %192 : vector<8x1xf32> to vector<8x2xf32>
    %206 = vector.broadcast %204 : vector<1x2xf32> to vector<8x2xf32>
    %207 = arith.mulf %205, %206 : vector<8x2xf32>
    %208 = arith.addf %200, %207 : vector<8x2xf32>
    %c0_140 = arith.constant 0 : index
    %c0_141 = arith.constant 0 : index
    %209 = vector.load %arg6[%c0_140, %c0_141] : memref<1x8xf32, #tpu.memory_space<vmem>>, vector<1x8xf32>
    %cst_142 = arith.constant dense<0.000000e+00> : vector<1x2xf32>
    %210 = tpu.matmul %209, %208, %cst_142 {dimension_numbers = #tpu.dot_dimension_numbers<[1], [0], [0], [1], [0, 0, 1, 1], [], []>} : vector<1x8xf32>, vector<8x2xf32>, vector<1x2xf32> -> vector<1x2xf32>
    %cst_143 = arith.constant 0.000000e+00 : f32
    %211 = vector.broadcast %cst_143 : f32 to vector<1x2xf32>
    %212 = arith.maximumf %210, %211 : vector<1x2xf32>
    %c0_144 = arith.constant 0 : index
    %c0_145 = arith.constant 0 : index
    %213 = vector.load %arg7[%c0_144, %c0_145] : memref<8x1xf32, #tpu.memory_space<vmem>>, vector<8x1xf32>
    %cst_146 = arith.constant dense<0.000000e+00> : vector<8x2xf32>
    %214 = tpu.matmul %213, %212, %cst_146 {dimension_numbers = #tpu.dot_dimension_numbers<[1], [0], [0], [1], [0, 0, 1, 1], [], []>} : vector<8x1xf32>, vector<1x2xf32>, vector<8x2xf32> -> vector<8x2xf32>
    %cst_147 = arith.constant 0.000000e+00 : f32
    %215 = vector.broadcast %cst_147 : f32 to vector<2x640xf32>
    %c0_148 = arith.constant 0 : index
    %c0_149 = arith.constant 0 : index
    %216 = vector.load %arg12[%c0_148, %c0_149] : memref<2x640xf32, #tpu.memory_space<vmem>>, vector<2x640xf32>
    tpu.vector_store %arg12[%c0_148, %c0_149], %215 {strides = array<i32>} : memref<2x640xf32, #tpu.memory_space<vmem>>, vector<2x640xf32>,
    %217 = vector.extract_strided_slice %214 {offsets = [0, 0], sizes = [8, 1], strides = [1, 1]} : vector<8x2xf32> to vector<8x1xf32>
    %218 = vector.extract_strided_slice %214 {offsets = [0, 1], sizes = [8, 1], strides = [1, 1]} : vector<8x2xf32> to vector<8x1xf32>
    %219 = arith.addf %217, %218 : vector<8x1xf32>
    %220 = arith.negf %219 : vector<8x1xf32>
    %221 = math.exp %220 : vector<8x1xf32>
    %cst_150 = arith.constant 1.000000e+00 : f32
    %222 = vector.broadcast %cst_150 : f32 to vector<8x1xf32>
    %223 = arith.addf %222, %221 : vector<8x1xf32>
    %224 = arith.divf %222, %223 : vector<8x1xf32>
    %225 = vector.broadcast %224 : vector<8x1xf32> to vector<8x384xf32>
    %226 = arith.mulf %157, %225 : vector<8x384xf32>
    %cst_151 = arith.constant dense<0xFF800000> : vector<384xf32>
    %227 = vector.multi_reduction <maximumf>, %226, %cst_151 [0] : vector<8x384xf32> to vector<384xf32>
    %228 = vector.shape_cast %227 : vector<384xf32> to vector<1x384xf32>
    %229 = arith.mulf %228, %178 : vector<1x384xf32>
    %c0_152 = arith.constant 0 : index
    %c75_153 = arith.constant 75 : index
    %230 = vector.load %arg12[%c0_152, %c75_153] : memref<2x640xf32, #tpu.memory_space<vmem>>, vector<1x384xf32>
    tpu.vector_store %arg12[%c0_152, %c75_153], %229 {strides = array<i32>} : memref<2x640xf32, #tpu.memory_space<vmem>>, vector<1x384xf32>,
    %cst_154 = arith.constant dense<0.000000e+00> : vector<384xf32>
    %231 = vector.multi_reduction <add>, %226, %cst_154 [0] : vector<8x384xf32> to vector<384xf32>
    %232 = vector.shape_cast %231 : vector<384xf32> to vector<1x384xf32>
    %cst_155 = arith.constant 8.000000e+00 : f32
    %233 = vector.broadcast %cst_155 : f32 to vector<1x384xf32>
    %234 = arith.divf %232, %233 : vector<1x384xf32>
    %235 = arith.mulf %234, %178 : vector<1x384xf32>
    %c1_156 = arith.constant 1 : index
    %c75_157 = arith.constant 75 : index
    %236 = vector.load %arg12[%c1_156, %c75_157] : memref<2x640xf32, #tpu.memory_space<vmem>>, vector<1x384xf32>
    tpu.vector_store %arg12[%c1_156, %c75_157], %235 {strides = array<i32>} : memref<2x640xf32, #tpu.memory_space<vmem>>, vector<1x384xf32>,
    %cst_158 = arith.constant 0.000000e+00 : f32
    %237 = vector.broadcast %cst_158 : f32 to vector<1x384xf32>
    %cst_159 = arith.constant 0.000000e+00 : f32
    %238 = vector.broadcast %cst_159 : f32 to vector<1x384xf32>
    %cst_160 = arith.constant 0.000000e+00 : f32
    %239 = vector.broadcast %cst_160 : f32 to vector<1x384xf32>
    %cst_161 = arith.constant 0.000000e+00 : f32
    %240 = vector.broadcast %cst_161 : f32 to vector<1x384xf32>
    %c0_162 = arith.constant 0 : index
    %c0_163 = arith.constant 0 : index
    %241 = vector.load %arg12[%c0_162, %c0_163] : memref<2x640xf32, #tpu.memory_space<vmem>>, vector<2x384xf32>
    %c0_164 = arith.constant 0 : index
    %242 = memref.load %arg8[%c0_164] : memref<98xf32, #tpu.memory_space<smem>>
    %243 = vector.extract_strided_slice %241 {offsets = [0, 0], sizes = [1, 384], strides = [1, 1]} : vector<2x384xf32> to vector<1x384xf32>
    %244 = vector.broadcast %242 : f32 to vector<1x384xf32>
    %245 = arith.mulf %244, %243 : vector<1x384xf32>
    %c1_165 = arith.constant 1 : index
    %246 = memref.load %arg8[%c1_165] : memref<98xf32, #tpu.memory_space<smem>>
    %247 = vector.extract_strided_slice %241 {offsets = [1, 0], sizes = [1, 384], strides = [1, 1]} : vector<2x384xf32> to vector<1x384xf32>
    %248 = vector.broadcast %246 : f32 to vector<1x384xf32>
    %249 = arith.mulf %248, %247 : vector<1x384xf32>
    %250 = arith.addf %245, %249 : vector<1x384xf32>
    %251 = arith.addf %237, %250 : vector<1x384xf32>
    %c0_166 = arith.constant 0 : index
    %c1_167 = arith.constant 1 : index
    %252 = vector.load %arg12[%c0_166, %c1_167] : memref<2x640xf32, #tpu.memory_space<vmem>>, vector<2x384xf32>
    %c2_168 = arith.constant 2 : index
    %253 = memref.load %arg8[%c2_168] : memref<98xf32, #tpu.memory_space<smem>>
    %254 = vector.extract_strided_slice %252 {offsets = [0, 0], sizes = [1, 384], strides = [1, 1]} : vector<2x384xf32> to vector<1x384xf32>
    %255 = vector.broadcast %253 : f32 to vector<1x384xf32>
    %256 = arith.mulf %255, %254 : vector<1x384xf32>
    %c3_169 = arith.constant 3 : index
    %257 = memref.load %arg8[%c3_169] : memref<98xf32, #tpu.memory_space<smem>>
    %258 = vector.extract_strided_slice %252 {offsets = [1, 0], sizes = [1, 384], strides = [1, 1]} : vector<2x384xf32> to vector<1x384xf32>
    %259 = vector.broadcast %257 : f32 to vector<1x384xf32>
    %260 = arith.mulf %259, %258 : vector<1x384xf32>
    %261 = arith.addf %256, %260 : vector<1x384xf32>
    %262 = arith.addf %238, %261 : vector<1x384xf32>
    %c0_170 = arith.constant 0 : index
    %c2_171 = arith.constant 2 : index
    %263 = vector.load %arg12[%c0_170, %c2_171] : memref<2x640xf32, #tpu.memory_space<vmem>>, vector<2x384xf32>
    %c4_172 = arith.constant 4 : index
    %264 = memref.load %arg8[%c4_172] : memref<98xf32, #tpu.memory_space<smem>>
    %265 = vector.extract_strided_slice %263 {offsets = [0, 0], sizes = [1, 384], strides = [1, 1]} : vector<2x384xf32> to vector<1x384xf32>
    %266 = vector.broadcast %264 : f32 to vector<1x384xf32>
    %267 = arith.mulf %266, %265 : vector<1x384xf32>
    %c5_173 = arith.constant 5 : index
    %268 = memref.load %arg8[%c5_173] : memref<98xf32, #tpu.memory_space<smem>>
    %269 = vector.extract_strided_slice %263 {offsets = [1, 0], sizes = [1, 384], strides = [1, 1]} : vector<2x384xf32> to vector<1x384xf32>
    %270 = vector.broadcast %268 : f32 to vector<1x384xf32>
    %271 = arith.mulf %270, %269 : vector<1x384xf32>
    %272 = arith.addf %267, %271 : vector<1x384xf32>
    %273 = arith.addf %239, %272 : vector<1x384xf32>
    %c0_174 = arith.constant 0 : index
    %c3_175 = arith.constant 3 : index
    %274 = vector.load %arg12[%c0_174, %c3_175] : memref<2x640xf32, #tpu.memory_space<vmem>>, vector<2x384xf32>
    %c6_176 = arith.constant 6 : index
    %275 = memref.load %arg8[%c6_176] : memref<98xf32, #tpu.memory_space<smem>>
    %276 = vector.extract_strided_slice %274 {offsets = [0, 0], sizes = [1, 384], strides = [1, 1]} : vector<2x384xf32> to vector<1x384xf32>
    %277 = vector.broadcast %275 : f32 to vector<1x384xf32>
    %278 = arith.mulf %277, %276 : vector<1x384xf32>
    %c7 = arith.constant 7 : index
    %279 = memref.load %arg8[%c7] : memref<98xf32, #tpu.memory_space<smem>>
    %280 = vector.extract_strided_slice %274 {offsets = [1, 0], sizes = [1, 384], strides = [1, 1]} : vector<2x384xf32> to vector<1x384xf32>
    %281 = vector.broadcast %279 : f32 to vector<1x384xf32>
    %282 = arith.mulf %281, %280 : vector<1x384xf32>
    %283 = arith.addf %278, %282 : vector<1x384xf32>
    %284 = arith.addf %240, %283 : vector<1x384xf32>
    %c0_177 = arith.constant 0 : index
    %c4_178 = arith.constant 4 : index
    %285 = vector.load %arg12[%c0_177, %c4_178] : memref<2x640xf32, #tpu.memory_space<vmem>>, vector<2x384xf32>
    %c8 = arith.constant 8 : index
    %286 = memref.load %arg8[%c8] : memref<98xf32, #tpu.memory_space<smem>>
    %287 = vector.extract_strided_slice %285 {offsets = [0, 0], sizes = [1, 384], strides = [1, 1]} : vector<2x384xf32> to vector<1x384xf32>
    %288 = vector.broadcast %286 : f32 to vector<1x384xf32>
    %289 = arith.mulf %288, %287 : vector<1x384xf32>
    %c9 = arith.constant 9 : index
    %290 = memref.load %arg8[%c9] : memref<98xf32, #tpu.memory_space<smem>>
    %291 = vector.extract_strided_slice %285 {offsets = [1, 0], sizes = [1, 384], strides = [1, 1]} : vector<2x384xf32> to vector<1x384xf32>
    %292 = vector.broadcast %290 : f32 to vector<1x384xf32>
    %293 = arith.mulf %292, %291 : vector<1x384xf32>
    %294 = arith.addf %289, %293 : vector<1x384xf32>
    %295 = arith.addf %251, %294 : vector<1x384xf32>
    %c0_179 = arith.constant 0 : index
    %c5_180 = arith.constant 5 : index
    %296 = vector.load %arg12[%c0_179, %c5_180] : memref<2x640xf32, #tpu.memory_space<vmem>>, vector<2x384xf32>
    %c10 = arith.constant 10 : index
    %297 = memref.load %arg8[%c10] : memref<98xf32, #tpu.memory_space<smem>>
    %298 = vector.extract_strided_slice %296 {offsets = [0, 0], sizes = [1, 384], strides = [1, 1]} : vector<2x384xf32> to vector<1x384xf32>
    %299 = vector.broadcast %297 : f32 to vector<1x384xf32>
    %300 = arith.mulf %299, %298 : vector<1x384xf32>
    %c11 = arith.constant 11 : index
    %301 = memref.load %arg8[%c11] : memref<98xf32, #tpu.memory_space<smem>>
    %302 = vector.extract_strided_slice %296 {offsets = [1, 0], sizes = [1, 384], strides = [1, 1]} : vector<2x384xf32> to vector<1x384xf32>
    %303 = vector.broadcast %301 : f32 to vector<1x384xf32>
    %304 = arith.mulf %303, %302 : vector<1x384xf32>
    %305 = arith.addf %300, %304 : vector<1x384xf32>
    %306 = arith.addf %262, %305 : vector<1x384xf32>
    %c0_181 = arith.constant 0 : index
    %c6_182 = arith.constant 6 : index
    %307 = vector.load %arg12[%c0_181, %c6_182] : memref<2x640xf32, #tpu.memory_space<vmem>>, vector<2x384xf32>
    %c12 = arith.constant 12 : index
    %308 = memref.load %arg8[%c12] : memref<98xf32, #tpu.memory_space<smem>>
    %309 = vector.extract_strided_slice %307 {offsets = [0, 0], sizes = [1, 384], strides = [1, 1]} : vector<2x384xf32> to vector<1x384xf32>
    %310 = vector.broadcast %308 : f32 to vector<1x384xf32>
    %311 = arith.mulf %310, %309 : vector<1x384xf32>
    %c13 = arith.constant 13 : index
    %312 = memref.load %arg8[%c13] : memref<98xf32, #tpu.memory_space<smem>>
    %313 = vector.extract_strided_slice %307 {offsets = [1, 0], sizes = [1, 384], strides = [1, 1]} : vector<2x384xf32> to vector<1x384xf32>
    %314 = vector.broadcast %312 : f32 to vector<1x384xf32>
    %315 = arith.mulf %314, %313 : vector<1x384xf32>
    %316 = arith.addf %311, %315 : vector<1x384xf32>
    %317 = arith.addf %273, %316 : vector<1x384xf32>
    %c0_183 = arith.constant 0 : index
    %c24_184 = arith.constant 24 : index
    %318 = vector.load %arg12[%c0_183, %c24_184] : memref<2x640xf32, #tpu.memory_space<vmem>>, vector<2x384xf32>
    %c14 = arith.constant 14 : index
    %319 = memref.load %arg8[%c14] : memref<98xf32, #tpu.memory_space<smem>>
    %320 = vector.extract_strided_slice %318 {offsets = [0, 0], sizes = [1, 384], strides = [1, 1]} : vector<2x384xf32> to vector<1x384xf32>
    %321 = vector.broadcast %319 : f32 to vector<1x384xf32>
    %322 = arith.mulf %321, %320 : vector<1x384xf32>
    %c15 = arith.constant 15 : index
    %323 = memref.load %arg8[%c15] : memref<98xf32, #tpu.memory_space<smem>>
    %324 = vector.extract_strided_slice %318 {offsets = [1, 0], sizes = [1, 384], strides = [1, 1]} : vector<2x384xf32> to vector<1x384xf32>
    %325 = vector.broadcast %323 : f32 to vector<1x384xf32>
    %326 = arith.mulf %325, %324 : vector<1x384xf32>
    %327 = arith.addf %322, %326 : vector<1x384xf32>
    %328 = arith.addf %284, %327 : vector<1x384xf32>
    %c0_185 = arith.constant 0 : index
    %c25_186 = arith.constant 25 : index
    %329 = vector.load %arg12[%c0_185, %c25_186] : memref<2x640xf32, #tpu.memory_space<vmem>>, vector<2x384xf32>
    %c16_187 = arith.constant 16 : index
    %330 = memref.load %arg8[%c16_187] : memref<98xf32, #tpu.memory_space<smem>>
    %331 = vector.extract_strided_slice %329 {offsets = [0, 0], sizes = [1, 384], strides = [1, 1]} : vector<2x384xf32> to vector<1x384xf32>
    %332 = vector.broadcast %330 : f32 to vector<1x384xf32>
    %333 = arith.mulf %332, %331 : vector<1x384xf32>
    %c17 = arith.constant 17 : index
    %334 = memref.load %arg8[%c17] : memref<98xf32, #tpu.memory_space<smem>>
    %335 = vector.extract_strided_slice %329 {offsets = [1, 0], sizes = [1, 384], strides = [1, 1]} : vector<2x384xf32> to vector<1x384xf32>
    %336 = vector.broadcast %334 : f32 to vector<1x384xf32>
    %337 = arith.mulf %336, %335 : vector<1x384xf32>
    %338 = arith.addf %333, %337 : vector<1x384xf32>
    %339 = arith.addf %295, %338 : vector<1x384xf32>
    %c0_188 = arith.constant 0 : index
    %c26_189 = arith.constant 26 : index
    %340 = vector.load %arg12[%c0_188, %c26_189] : memref<2x640xf32, #tpu.memory_space<vmem>>, vector<2x384xf32>
    %c18 = arith.constant 18 : index
    %341 = memref.load %arg8[%c18] : memref<98xf32, #tpu.memory_space<smem>>
    %342 = vector.extract_strided_slice %340 {offsets = [0, 0], sizes = [1, 384], strides = [1, 1]} : vector<2x384xf32> to vector<1x384xf32>
    %343 = vector.broadcast %341 : f32 to vector<1x384xf32>
    %344 = arith.mulf %343, %342 : vector<1x384xf32>
    %c19 = arith.constant 19 : index
    %345 = memref.load %arg8[%c19] : memref<98xf32, #tpu.memory_space<smem>>
    %346 = vector.extract_strided_slice %340 {offsets = [1, 0], sizes = [1, 384], strides = [1, 1]} : vector<2x384xf32> to vector<1x384xf32>
    %347 = vector.broadcast %345 : f32 to vector<1x384xf32>
    %348 = arith.mulf %347, %346 : vector<1x384xf32>
    %349 = arith.addf %344, %348 : vector<1x384xf32>
    %350 = arith.addf %306, %349 : vector<1x384xf32>
    %c0_190 = arith.constant 0 : index
    %c27_191 = arith.constant 27 : index
    %351 = vector.load %arg12[%c0_190, %c27_191] : memref<2x640xf32, #tpu.memory_space<vmem>>, vector<2x384xf32>
    %c20 = arith.constant 20 : index
    %352 = memref.load %arg8[%c20] : memref<98xf32, #tpu.memory_space<smem>>
    %353 = vector.extract_strided_slice %351 {offsets = [0, 0], sizes = [1, 384], strides = [1, 1]} : vector<2x384xf32> to vector<1x384xf32>
    %354 = vector.broadcast %352 : f32 to vector<1x384xf32>
    %355 = arith.mulf %354, %353 : vector<1x384xf32>
    %c21 = arith.constant 21 : index
    %356 = memref.load %arg8[%c21] : memref<98xf32, #tpu.memory_space<smem>>
    %357 = vector.extract_strided_slice %351 {offsets = [1, 0], sizes = [1, 384], strides = [1, 1]} : vector<2x384xf32> to vector<1x384xf32>
    %358 = vector.broadcast %356 : f32 to vector<1x384xf32>
    %359 = arith.mulf %358, %357 : vector<1x384xf32>
    %360 = arith.addf %355, %359 : vector<1x384xf32>
    %361 = arith.addf %317, %360 : vector<1x384xf32>
    %c0_192 = arith.constant 0 : index
    %c28_193 = arith.constant 28 : index
    %362 = vector.load %arg12[%c0_192, %c28_193] : memref<2x640xf32, #tpu.memory_space<vmem>>, vector<2x384xf32>
    %c22 = arith.constant 22 : index
    %363 = memref.load %arg8[%c22] : memref<98xf32, #tpu.memory_space<smem>>
    %364 = vector.extract_strided_slice %362 {offsets = [0, 0], sizes = [1, 384], strides = [1, 1]} : vector<2x384xf32> to vector<1x384xf32>
    %365 = vector.broadcast %363 : f32 to vector<1x384xf32>
    %366 = arith.mulf %365, %364 : vector<1x384xf32>
    %c23 = arith.constant 23 : index
    %367 = memref.load %arg8[%c23] : memref<98xf32, #tpu.memory_space<smem>>
    %368 = vector.extract_strided_slice %362 {offsets = [1, 0], sizes = [1, 384], strides = [1, 1]} : vector<2x384xf32> to vector<1x384xf32>
    %369 = vector.broadcast %367 : f32 to vector<1x384xf32>
    %370 = arith.mulf %369, %368 : vector<1x384xf32>
    %371 = arith.addf %366, %370 : vector<1x384xf32>
    %372 = arith.addf %328, %371 : vector<1x384xf32>
    %c0_194 = arith.constant 0 : index
    %c29_195 = arith.constant 29 : index
    %373 = vector.load %arg12[%c0_194, %c29_195] : memref<2x640xf32, #tpu.memory_space<vmem>>, vector<2x384xf32>
    %c24_196 = arith.constant 24 : index
    %374 = memref.load %arg8[%c24_196] : memref<98xf32, #tpu.memory_space<smem>>
    %375 = vector.extract_strided_slice %373 {offsets = [0, 0], sizes = [1, 384], strides = [1, 1]} : vector<2x384xf32> to vector<1x384xf32>
    %376 = vector.broadcast %374 : f32 to vector<1x384xf32>
    %377 = arith.mulf %376, %375 : vector<1x384xf32>
    %c25_197 = arith.constant 25 : index
    %378 = memref.load %arg8[%c25_197] : memref<98xf32, #tpu.memory_space<smem>>
    %379 = vector.extract_strided_slice %373 {offsets = [1, 0], sizes = [1, 384], strides = [1, 1]} : vector<2x384xf32> to vector<1x384xf32>
    %380 = vector.broadcast %378 : f32 to vector<1x384xf32>
    %381 = arith.mulf %380, %379 : vector<1x384xf32>
    %382 = arith.addf %377, %381 : vector<1x384xf32>
    %383 = arith.addf %339, %382 : vector<1x384xf32>
    %c0_198 = arith.constant 0 : index
    %c30_199 = arith.constant 30 : index
    %384 = vector.load %arg12[%c0_198, %c30_199] : memref<2x640xf32, #tpu.memory_space<vmem>>, vector<2x384xf32>
    %c26_200 = arith.constant 26 : index
    %385 = memref.load %arg8[%c26_200] : memref<98xf32, #tpu.memory_space<smem>>
    %386 = vector.extract_strided_slice %384 {offsets = [0, 0], sizes = [1, 384], strides = [1, 1]} : vector<2x384xf32> to vector<1x384xf32>
    %387 = vector.broadcast %385 : f32 to vector<1x384xf32>
    %388 = arith.mulf %387, %386 : vector<1x384xf32>
    %c27_201 = arith.constant 27 : index
    %389 = memref.load %arg8[%c27_201] : memref<98xf32, #tpu.memory_space<smem>>
    %390 = vector.extract_strided_slice %384 {offsets = [1, 0], sizes = [1, 384], strides = [1, 1]} : vector<2x384xf32> to vector<1x384xf32>
    %391 = vector.broadcast %389 : f32 to vector<1x384xf32>
    %392 = arith.mulf %391, %390 : vector<1x384xf32>
    %393 = arith.addf %388, %392 : vector<1x384xf32>
    %394 = arith.addf %350, %393 : vector<1x384xf32>
    %c0_202 = arith.constant 0 : index
    %c48_203 = arith.constant 48 : index
    %395 = vector.load %arg12[%c0_202, %c48_203] : memref<2x640xf32, #tpu.memory_space<vmem>>, vector<2x384xf32>
    %c28_204 = arith.constant 28 : index
    %396 = memref.load %arg8[%c28_204] : memref<98xf32, #tpu.memory_space<smem>>
    %397 = vector.extract_strided_slice %395 {offsets = [0, 0], sizes = [1, 384], strides = [1, 1]} : vector<2x384xf32> to vector<1x384xf32>
    %398 = vector.broadcast %396 : f32 to vector<1x384xf32>
    %399 = arith.mulf %398, %397 : vector<1x384xf32>
    %c29_205 = arith.constant 29 : index
    %400 = memref.load %arg8[%c29_205] : memref<98xf32, #tpu.memory_space<smem>>
    %401 = vector.extract_strided_slice %395 {offsets = [1, 0], sizes = [1, 384], strides = [1, 1]} : vector<2x384xf32> to vector<1x384xf32>
    %402 = vector.broadcast %400 : f32 to vector<1x384xf32>
    %403 = arith.mulf %402, %401 : vector<1x384xf32>
    %404 = arith.addf %399, %403 : vector<1x384xf32>
    %405 = arith.addf %361, %404 : vector<1x384xf32>
    %c0_206 = arith.constant 0 : index
    %c49_207 = arith.constant 49 : index
    %406 = vector.load %arg12[%c0_206, %c49_207] : memref<2x640xf32, #tpu.memory_space<vmem>>, vector<2x384xf32>
    %c30_208 = arith.constant 30 : index
    %407 = memref.load %arg8[%c30_208] : memref<98xf32, #tpu.memory_space<smem>>
    %408 = vector.extract_strided_slice %406 {offsets = [0, 0], sizes = [1, 384], strides = [1, 1]} : vector<2x384xf32> to vector<1x384xf32>
    %409 = vector.broadcast %407 : f32 to vector<1x384xf32>
    %410 = arith.mulf %409, %408 : vector<1x384xf32>
    %c31 = arith.constant 31 : index
    %411 = memref.load %arg8[%c31] : memref<98xf32, #tpu.memory_space<smem>>
    %412 = vector.extract_strided_slice %406 {offsets = [1, 0], sizes = [1, 384], strides = [1, 1]} : vector<2x384xf32> to vector<1x384xf32>
    %413 = vector.broadcast %411 : f32 to vector<1x384xf32>
    %414 = arith.mulf %413, %412 : vector<1x384xf32>
    %415 = arith.addf %410, %414 : vector<1x384xf32>
    %416 = arith.addf %372, %415 : vector<1x384xf32>
    %c0_209 = arith.constant 0 : index
    %c50_210 = arith.constant 50 : index
    %417 = vector.load %arg12[%c0_209, %c50_210] : memref<2x640xf32, #tpu.memory_space<vmem>>, vector<2x384xf32>
    %c32_211 = arith.constant 32 : index
    %418 = memref.load %arg8[%c32_211] : memref<98xf32, #tpu.memory_space<smem>>
    %419 = vector.extract_strided_slice %417 {offsets = [0, 0], sizes = [1, 384], strides = [1, 1]} : vector<2x384xf32> to vector<1x384xf32>
    %420 = vector.broadcast %418 : f32 to vector<1x384xf32>
    %421 = arith.mulf %420, %419 : vector<1x384xf32>
    %c33 = arith.constant 33 : index
    %422 = memref.load %arg8[%c33] : memref<98xf32, #tpu.memory_space<smem>>
    %423 = vector.extract_strided_slice %417 {offsets = [1, 0], sizes = [1, 384], strides = [1, 1]} : vector<2x384xf32> to vector<1x384xf32>
    %424 = vector.broadcast %422 : f32 to vector<1x384xf32>
    %425 = arith.mulf %424, %423 : vector<1x384xf32>
    %426 = arith.addf %421, %425 : vector<1x384xf32>
    %427 = arith.addf %383, %426 : vector<1x384xf32>
    %c0_212 = arith.constant 0 : index
    %c51_213 = arith.constant 51 : index
    %428 = vector.load %arg12[%c0_212, %c51_213] : memref<2x640xf32, #tpu.memory_space<vmem>>, vector<2x384xf32>
    %c34 = arith.constant 34 : index
    %429 = memref.load %arg8[%c34] : memref<98xf32, #tpu.memory_space<smem>>
    %430 = vector.extract_strided_slice %428 {offsets = [0, 0], sizes = [1, 384], strides = [1, 1]} : vector<2x384xf32> to vector<1x384xf32>
    %431 = vector.broadcast %429 : f32 to vector<1x384xf32>
    %432 = arith.mulf %431, %430 : vector<1x384xf32>
    %c35 = arith.constant 35 : index
    %433 = memref.load %arg8[%c35] : memref<98xf32, #tpu.memory_space<smem>>
    %434 = vector.extract_strided_slice %428 {offsets = [1, 0], sizes = [1, 384], strides = [1, 1]} : vector<2x384xf32> to vector<1x384xf32>
    %435 = vector.broadcast %433 : f32 to vector<1x384xf32>
    %436 = arith.mulf %435, %434 : vector<1x384xf32>
    %437 = arith.addf %432, %436 : vector<1x384xf32>
    %438 = arith.addf %394, %437 : vector<1x384xf32>
    %c0_214 = arith.constant 0 : index
    %c52_215 = arith.constant 52 : index
    %439 = vector.load %arg12[%c0_214, %c52_215] : memref<2x640xf32, #tpu.memory_space<vmem>>, vector<2x384xf32>
    %c36 = arith.constant 36 : index
    %440 = memref.load %arg8[%c36] : memref<98xf32, #tpu.memory_space<smem>>
    %441 = vector.extract_strided_slice %439 {offsets = [0, 0], sizes = [1, 384], strides = [1, 1]} : vector<2x384xf32> to vector<1x384xf32>
    %442 = vector.broadcast %440 : f32 to vector<1x384xf32>
    %443 = arith.mulf %442, %441 : vector<1x384xf32>
    %c37 = arith.constant 37 : index
    %444 = memref.load %arg8[%c37] : memref<98xf32, #tpu.memory_space<smem>>
    %445 = vector.extract_strided_slice %439 {offsets = [1, 0], sizes = [1, 384], strides = [1, 1]} : vector<2x384xf32> to vector<1x384xf32>
    %446 = vector.broadcast %444 : f32 to vector<1x384xf32>
    %447 = arith.mulf %446, %445 : vector<1x384xf32>
    %448 = arith.addf %443, %447 : vector<1x384xf32>
    %449 = arith.addf %405, %448 : vector<1x384xf32>
    %c0_216 = arith.constant 0 : index
    %c53_217 = arith.constant 53 : index
    %450 = vector.load %arg12[%c0_216, %c53_217] : memref<2x640xf32, #tpu.memory_space<vmem>>, vector<2x384xf32>
    %c38 = arith.constant 38 : index
    %451 = memref.load %arg8[%c38] : memref<98xf32, #tpu.memory_space<smem>>
    %452 = vector.extract_strided_slice %450 {offsets = [0, 0], sizes = [1, 384], strides = [1, 1]} : vector<2x384xf32> to vector<1x384xf32>
    %453 = vector.broadcast %451 : f32 to vector<1x384xf32>
    %454 = arith.mulf %453, %452 : vector<1x384xf32>
    %c39 = arith.constant 39 : index
    %455 = memref.load %arg8[%c39] : memref<98xf32, #tpu.memory_space<smem>>
    %456 = vector.extract_strided_slice %450 {offsets = [1, 0], sizes = [1, 384], strides = [1, 1]} : vector<2x384xf32> to vector<1x384xf32>
    %457 = vector.broadcast %455 : f32 to vector<1x384xf32>
    %458 = arith.mulf %457, %456 : vector<1x384xf32>
    %459 = arith.addf %454, %458 : vector<1x384xf32>
    %460 = arith.addf %416, %459 : vector<1x384xf32>
    %c0_218 = arith.constant 0 : index
    %c54_219 = arith.constant 54 : index
    %461 = vector.load %arg12[%c0_218, %c54_219] : memref<2x640xf32, #tpu.memory_space<vmem>>, vector<2x384xf32>
    %c40 = arith.constant 40 : index
    %462 = memref.load %arg8[%c40] : memref<98xf32, #tpu.memory_space<smem>>
    %463 = vector.extract_strided_slice %461 {offsets = [0, 0], sizes = [1, 384], strides = [1, 1]} : vector<2x384xf32> to vector<1x384xf32>
    %464 = vector.broadcast %462 : f32 to vector<1x384xf32>
    %465 = arith.mulf %464, %463 : vector<1x384xf32>
    %c41 = arith.constant 41 : index
    %466 = memref.load %arg8[%c41] : memref<98xf32, #tpu.memory_space<smem>>
    %467 = vector.extract_strided_slice %461 {offsets = [1, 0], sizes = [1, 384], strides = [1, 1]} : vector<2x384xf32> to vector<1x384xf32>
    %468 = vector.broadcast %466 : f32 to vector<1x384xf32>
    %469 = arith.mulf %468, %467 : vector<1x384xf32>
    %470 = arith.addf %465, %469 : vector<1x384xf32>
    %471 = arith.addf %427, %470 : vector<1x384xf32>
    %c0_220 = arith.constant 0 : index
    %c72_221 = arith.constant 72 : index
    %472 = vector.load %arg12[%c0_220, %c72_221] : memref<2x640xf32, #tpu.memory_space<vmem>>, vector<2x384xf32>
    %c42 = arith.constant 42 : index
    %473 = memref.load %arg8[%c42] : memref<98xf32, #tpu.memory_space<smem>>
    %474 = vector.extract_strided_slice %472 {offsets = [0, 0], sizes = [1, 384], strides = [1, 1]} : vector<2x384xf32> to vector<1x384xf32>
    %475 = vector.broadcast %473 : f32 to vector<1x384xf32>
    %476 = arith.mulf %475, %474 : vector<1x384xf32>
    %c43 = arith.constant 43 : index
    %477 = memref.load %arg8[%c43] : memref<98xf32, #tpu.memory_space<smem>>
    %478 = vector.extract_strided_slice %472 {offsets = [1, 0], sizes = [1, 384], strides = [1, 1]} : vector<2x384xf32> to vector<1x384xf32>
    %479 = vector.broadcast %477 : f32 to vector<1x384xf32>
    %480 = arith.mulf %479, %478 : vector<1x384xf32>
    %481 = arith.addf %476, %480 : vector<1x384xf32>
    %482 = arith.addf %438, %481 : vector<1x384xf32>
    %c0_222 = arith.constant 0 : index
    %c73_223 = arith.constant 73 : index
    %483 = vector.load %arg12[%c0_222, %c73_223] : memref<2x640xf32, #tpu.memory_space<vmem>>, vector<2x384xf32>
    %c44 = arith.constant 44 : index
    %484 = memref.load %arg8[%c44] : memref<98xf32, #tpu.memory_space<smem>>
    %485 = vector.extract_strided_slice %483 {offsets = [0, 0], sizes = [1, 384], strides = [1, 1]} : vector<2x384xf32> to vector<1x384xf32>
    %486 = vector.broadcast %484 : f32 to vector<1x384xf32>
    %487 = arith.mulf %486, %485 : vector<1x384xf32>
    %c45 = arith.constant 45 : index
    %488 = memref.load %arg8[%c45] : memref<98xf32, #tpu.memory_space<smem>>
    %489 = vector.extract_strided_slice %483 {offsets = [1, 0], sizes = [1, 384], strides = [1, 1]} : vector<2x384xf32> to vector<1x384xf32>
    %490 = vector.broadcast %488 : f32 to vector<1x384xf32>
    %491 = arith.mulf %490, %489 : vector<1x384xf32>
    %492 = arith.addf %487, %491 : vector<1x384xf32>
    %493 = arith.addf %449, %492 : vector<1x384xf32>
    %c0_224 = arith.constant 0 : index
    %c74_225 = arith.constant 74 : index
    %494 = vector.load %arg12[%c0_224, %c74_225] : memref<2x640xf32, #tpu.memory_space<vmem>>, vector<2x384xf32>
    %c46 = arith.constant 46 : index
    %495 = memref.load %arg8[%c46] : memref<98xf32, #tpu.memory_space<smem>>
    %496 = vector.extract_strided_slice %494 {offsets = [0, 0], sizes = [1, 384], strides = [1, 1]} : vector<2x384xf32> to vector<1x384xf32>
    %497 = vector.broadcast %495 : f32 to vector<1x384xf32>
    %498 = arith.mulf %497, %496 : vector<1x384xf32>
    %c47 = arith.constant 47 : index
    %499 = memref.load %arg8[%c47] : memref<98xf32, #tpu.memory_space<smem>>
    %500 = vector.extract_strided_slice %494 {offsets = [1, 0], sizes = [1, 384], strides = [1, 1]} : vector<2x384xf32> to vector<1x384xf32>
    %501 = vector.broadcast %499 : f32 to vector<1x384xf32>
    %502 = arith.mulf %501, %500 : vector<1x384xf32>
    %503 = arith.addf %498, %502 : vector<1x384xf32>
    %504 = arith.addf %460, %503 : vector<1x384xf32>
    %c0_226 = arith.constant 0 : index
    %c75_227 = arith.constant 75 : index
    %505 = vector.load %arg12[%c0_226, %c75_227] : memref<2x640xf32, #tpu.memory_space<vmem>>, vector<2x384xf32>
    %c48_228 = arith.constant 48 : index
    %506 = memref.load %arg8[%c48_228] : memref<98xf32, #tpu.memory_space<smem>>
    %507 = vector.extract_strided_slice %505 {offsets = [0, 0], sizes = [1, 384], strides = [1, 1]} : vector<2x384xf32> to vector<1x384xf32>
    %508 = vector.broadcast %506 : f32 to vector<1x384xf32>
    %509 = arith.mulf %508, %507 : vector<1x384xf32>
    %c49_229 = arith.constant 49 : index
    %510 = memref.load %arg8[%c49_229] : memref<98xf32, #tpu.memory_space<smem>>
    %511 = vector.extract_strided_slice %505 {offsets = [1, 0], sizes = [1, 384], strides = [1, 1]} : vector<2x384xf32> to vector<1x384xf32>
    %512 = vector.broadcast %510 : f32 to vector<1x384xf32>
    %513 = arith.mulf %512, %511 : vector<1x384xf32>
    %514 = arith.addf %509, %513 : vector<1x384xf32>
    %515 = arith.addf %471, %514 : vector<1x384xf32>
    %c0_230 = arith.constant 0 : index
    %c76_231 = arith.constant 76 : index
    %516 = vector.load %arg12[%c0_230, %c76_231] : memref<2x640xf32, #tpu.memory_space<vmem>>, vector<2x384xf32>
    %c50_232 = arith.constant 50 : index
    %517 = memref.load %arg8[%c50_232] : memref<98xf32, #tpu.memory_space<smem>>
    %518 = vector.extract_strided_slice %516 {offsets = [0, 0], sizes = [1, 384], strides = [1, 1]} : vector<2x384xf32> to vector<1x384xf32>
    %519 = vector.broadcast %517 : f32 to vector<1x384xf32>
    %520 = arith.mulf %519, %518 : vector<1x384xf32>
    %c51_233 = arith.constant 51 : index
    %521 = memref.load %arg8[%c51_233] : memref<98xf32, #tpu.memory_space<smem>>
    %522 = vector.extract_strided_slice %516 {offsets = [1, 0], sizes = [1, 384], strides = [1, 1]} : vector<2x384xf32> to vector<1x384xf32>
    %523 = vector.broadcast %521 : f32 to vector<1x384xf32>
    %524 = arith.mulf %523, %522 : vector<1x384xf32>
    %525 = arith.addf %520, %524 : vector<1x384xf32>
    %526 = arith.addf %482, %525 : vector<1x384xf32>
    %c0_234 = arith.constant 0 : index
    %c77_235 = arith.constant 77 : index
    %527 = vector.load %arg12[%c0_234, %c77_235] : memref<2x640xf32, #tpu.memory_space<vmem>>, vector<2x384xf32>
    %c52_236 = arith.constant 52 : index
    %528 = memref.load %arg8[%c52_236] : memref<98xf32, #tpu.memory_space<smem>>
    %529 = vector.extract_strided_slice %527 {offsets = [0, 0], sizes = [1, 384], strides = [1, 1]} : vector<2x384xf32> to vector<1x384xf32>
    %530 = vector.broadcast %528 : f32 to vector<1x384xf32>
    %531 = arith.mulf %530, %529 : vector<1x384xf32>
    %c53_237 = arith.constant 53 : index
    %532 = memref.load %arg8[%c53_237] : memref<98xf32, #tpu.memory_space<smem>>
    %533 = vector.extract_strided_slice %527 {offsets = [1, 0], sizes = [1, 384], strides = [1, 1]} : vector<2x384xf32> to vector<1x384xf32>
    %534 = vector.broadcast %532 : f32 to vector<1x384xf32>
    %535 = arith.mulf %534, %533 : vector<1x384xf32>
    %536 = arith.addf %531, %535 : vector<1x384xf32>
    %537 = arith.addf %493, %536 : vector<1x384xf32>
    %c0_238 = arith.constant 0 : index
    %c78_239 = arith.constant 78 : index
    %538 = vector.load %arg12[%c0_238, %c78_239] : memref<2x640xf32, #tpu.memory_space<vmem>>, vector<2x384xf32>
    %c54_240 = arith.constant 54 : index
    %539 = memref.load %arg8[%c54_240] : memref<98xf32, #tpu.memory_space<smem>>
    %540 = vector.extract_strided_slice %538 {offsets = [0, 0], sizes = [1, 384], strides = [1, 1]} : vector<2x384xf32> to vector<1x384xf32>
    %541 = vector.broadcast %539 : f32 to vector<1x384xf32>
    %542 = arith.mulf %541, %540 : vector<1x384xf32>
    %c55 = arith.constant 55 : index
    %543 = memref.load %arg8[%c55] : memref<98xf32, #tpu.memory_space<smem>>
    %544 = vector.extract_strided_slice %538 {offsets = [1, 0], sizes = [1, 384], strides = [1, 1]} : vector<2x384xf32> to vector<1x384xf32>
    %545 = vector.broadcast %543 : f32 to vector<1x384xf32>
    %546 = arith.mulf %545, %544 : vector<1x384xf32>
    %547 = arith.addf %542, %546 : vector<1x384xf32>
    %548 = arith.addf %504, %547 : vector<1x384xf32>
    %c0_241 = arith.constant 0 : index
    %c96_242 = arith.constant 96 : index
    %549 = vector.load %arg12[%c0_241, %c96_242] : memref<2x640xf32, #tpu.memory_space<vmem>>, vector<2x384xf32>
    %c56 = arith.constant 56 : index
    %550 = memref.load %arg8[%c56] : memref<98xf32, #tpu.memory_space<smem>>
    %551 = vector.extract_strided_slice %549 {offsets = [0, 0], sizes = [1, 384], strides = [1, 1]} : vector<2x384xf32> to vector<1x384xf32>
    %552 = vector.broadcast %550 : f32 to vector<1x384xf32>
    %553 = arith.mulf %552, %551 : vector<1x384xf32>
    %c57 = arith.constant 57 : index
    %554 = memref.load %arg8[%c57] : memref<98xf32, #tpu.memory_space<smem>>
    %555 = vector.extract_strided_slice %549 {offsets = [1, 0], sizes = [1, 384], strides = [1, 1]} : vector<2x384xf32> to vector<1x384xf32>
    %556 = vector.broadcast %554 : f32 to vector<1x384xf32>
    %557 = arith.mulf %556, %555 : vector<1x384xf32>
    %558 = arith.addf %553, %557 : vector<1x384xf32>
    %559 = arith.addf %515, %558 : vector<1x384xf32>
    %c0_243 = arith.constant 0 : index
    %c97_244 = arith.constant 97 : index
    %560 = vector.load %arg12[%c0_243, %c97_244] : memref<2x640xf32, #tpu.memory_space<vmem>>, vector<2x384xf32>
    %c58 = arith.constant 58 : index
    %561 = memref.load %arg8[%c58] : memref<98xf32, #tpu.memory_space<smem>>
    %562 = vector.extract_strided_slice %560 {offsets = [0, 0], sizes = [1, 384], strides = [1, 1]} : vector<2x384xf32> to vector<1x384xf32>
    %563 = vector.broadcast %561 : f32 to vector<1x384xf32>
    %564 = arith.mulf %563, %562 : vector<1x384xf32>
    %c59 = arith.constant 59 : index
    %565 = memref.load %arg8[%c59] : memref<98xf32, #tpu.memory_space<smem>>
    %566 = vector.extract_strided_slice %560 {offsets = [1, 0], sizes = [1, 384], strides = [1, 1]} : vector<2x384xf32> to vector<1x384xf32>
    %567 = vector.broadcast %565 : f32 to vector<1x384xf32>
    %568 = arith.mulf %567, %566 : vector<1x384xf32>
    %569 = arith.addf %564, %568 : vector<1x384xf32>
    %570 = arith.addf %526, %569 : vector<1x384xf32>
    %c0_245 = arith.constant 0 : index
    %c98_246 = arith.constant 98 : index
    %571 = vector.load %arg12[%c0_245, %c98_246] : memref<2x640xf32, #tpu.memory_space<vmem>>, vector<2x384xf32>
    %c60 = arith.constant 60 : index
    %572 = memref.load %arg8[%c60] : memref<98xf32, #tpu.memory_space<smem>>
    %573 = vector.extract_strided_slice %571 {offsets = [0, 0], sizes = [1, 384], strides = [1, 1]} : vector<2x384xf32> to vector<1x384xf32>
    %574 = vector.broadcast %572 : f32 to vector<1x384xf32>
    %575 = arith.mulf %574, %573 : vector<1x384xf32>
    %c61 = arith.constant 61 : index
    %576 = memref.load %arg8[%c61] : memref<98xf32, #tpu.memory_space<smem>>
    %577 = vector.extract_strided_slice %571 {offsets = [1, 0], sizes = [1, 384], strides = [1, 1]} : vector<2x384xf32> to vector<1x384xf32>
    %578 = vector.broadcast %576 : f32 to vector<1x384xf32>
    %579 = arith.mulf %578, %577 : vector<1x384xf32>
    %580 = arith.addf %575, %579 : vector<1x384xf32>
    %581 = arith.addf %537, %580 : vector<1x384xf32>
    %c0_247 = arith.constant 0 : index
    %c99_248 = arith.constant 99 : index
    %582 = vector.load %arg12[%c0_247, %c99_248] : memref<2x640xf32, #tpu.memory_space<vmem>>, vector<2x384xf32>
    %c62 = arith.constant 62 : index
    %583 = memref.load %arg8[%c62] : memref<98xf32, #tpu.memory_space<smem>>
    %584 = vector.extract_strided_slice %582 {offsets = [0, 0], sizes = [1, 384], strides = [1, 1]} : vector<2x384xf32> to vector<1x384xf32>
    %585 = vector.broadcast %583 : f32 to vector<1x384xf32>
    %586 = arith.mulf %585, %584 : vector<1x384xf32>
    %c63 = arith.constant 63 : index
    %587 = memref.load %arg8[%c63] : memref<98xf32, #tpu.memory_space<smem>>
    %588 = vector.extract_strided_slice %582 {offsets = [1, 0], sizes = [1, 384], strides = [1, 1]} : vector<2x384xf32> to vector<1x384xf32>
    %589 = vector.broadcast %587 : f32 to vector<1x384xf32>
    %590 = arith.mulf %589, %588 : vector<1x384xf32>
    %591 = arith.addf %586, %590 : vector<1x384xf32>
    %592 = arith.addf %548, %591 : vector<1x384xf32>
    %c0_249 = arith.constant 0 : index
    %c100_250 = arith.constant 100 : index
    %593 = vector.load %arg12[%c0_249, %c100_250] : memref<2x640xf32, #tpu.memory_space<vmem>>, vector<2x384xf32>
    %c64_251 = arith.constant 64 : index
    %594 = memref.load %arg8[%c64_251] : memref<98xf32, #tpu.memory_space<smem>>
    %595 = vector.extract_strided_slice %593 {offsets = [0, 0], sizes = [1, 384], strides = [1, 1]} : vector<2x384xf32> to vector<1x384xf32>
    %596 = vector.broadcast %594 : f32 to vector<1x384xf32>
    %597 = arith.mulf %596, %595 : vector<1x384xf32>
    %c65 = arith.constant 65 : index
    %598 = memref.load %arg8[%c65] : memref<98xf32, #tpu.memory_space<smem>>
    %599 = vector.extract_strided_slice %593 {offsets = [1, 0], sizes = [1, 384], strides = [1, 1]} : vector<2x384xf32> to vector<1x384xf32>
    %600 = vector.broadcast %598 : f32 to vector<1x384xf32>
    %601 = arith.mulf %600, %599 : vector<1x384xf32>
    %602 = arith.addf %597, %601 : vector<1x384xf32>
    %603 = arith.addf %559, %602 : vector<1x384xf32>
    %c0_252 = arith.constant 0 : index
    %c101_253 = arith.constant 101 : index
    %604 = vector.load %arg12[%c0_252, %c101_253] : memref<2x640xf32, #tpu.memory_space<vmem>>, vector<2x384xf32>
    %c66 = arith.constant 66 : index
    %605 = memref.load %arg8[%c66] : memref<98xf32, #tpu.memory_space<smem>>
    %606 = vector.extract_strided_slice %604 {offsets = [0, 0], sizes = [1, 384], strides = [1, 1]} : vector<2x384xf32> to vector<1x384xf32>
    %607 = vector.broadcast %605 : f32 to vector<1x384xf32>
    %608 = arith.mulf %607, %606 : vector<1x384xf32>
    %c67 = arith.constant 67 : index
    %609 = memref.load %arg8[%c67] : memref<98xf32, #tpu.memory_space<smem>>
    %610 = vector.extract_strided_slice %604 {offsets = [1, 0], sizes = [1, 384], strides = [1, 1]} : vector<2x384xf32> to vector<1x384xf32>
    %611 = vector.broadcast %609 : f32 to vector<1x384xf32>
    %612 = arith.mulf %611, %610 : vector<1x384xf32>
    %613 = arith.addf %608, %612 : vector<1x384xf32>
    %614 = arith.addf %570, %613 : vector<1x384xf32>
    %c0_254 = arith.constant 0 : index
    %c102_255 = arith.constant 102 : index
    %615 = vector.load %arg12[%c0_254, %c102_255] : memref<2x640xf32, #tpu.memory_space<vmem>>, vector<2x384xf32>
    %c68 = arith.constant 68 : index
    %616 = memref.load %arg8[%c68] : memref<98xf32, #tpu.memory_space<smem>>
    %617 = vector.extract_strided_slice %615 {offsets = [0, 0], sizes = [1, 384], strides = [1, 1]} : vector<2x384xf32> to vector<1x384xf32>
    %618 = vector.broadcast %616 : f32 to vector<1x384xf32>
    %619 = arith.mulf %618, %617 : vector<1x384xf32>
    %c69 = arith.constant 69 : index
    %620 = memref.load %arg8[%c69] : memref<98xf32, #tpu.memory_space<smem>>
    %621 = vector.extract_strided_slice %615 {offsets = [1, 0], sizes = [1, 384], strides = [1, 1]} : vector<2x384xf32> to vector<1x384xf32>
    %622 = vector.broadcast %620 : f32 to vector<1x384xf32>
    %623 = arith.mulf %622, %621 : vector<1x384xf32>
    %624 = arith.addf %619, %623 : vector<1x384xf32>
    %625 = arith.addf %581, %624 : vector<1x384xf32>
    %c0_256 = arith.constant 0 : index
    %c120_257 = arith.constant 120 : index
    %626 = vector.load %arg12[%c0_256, %c120_257] : memref<2x640xf32, #tpu.memory_space<vmem>>, vector<2x384xf32>
    %c70 = arith.constant 70 : index
    %627 = memref.load %arg8[%c70] : memref<98xf32, #tpu.memory_space<smem>>
    %628 = vector.extract_strided_slice %626 {offsets = [0, 0], sizes = [1, 384], strides = [1, 1]} : vector<2x384xf32> to vector<1x384xf32>
    %629 = vector.broadcast %627 : f32 to vector<1x384xf32>
    %630 = arith.mulf %629, %628 : vector<1x384xf32>
    %c71 = arith.constant 71 : index
    %631 = memref.load %arg8[%c71] : memref<98xf32, #tpu.memory_space<smem>>
    %632 = vector.extract_strided_slice %626 {offsets = [1, 0], sizes = [1, 384], strides = [1, 1]} : vector<2x384xf32> to vector<1x384xf32>
    %633 = vector.broadcast %631 : f32 to vector<1x384xf32>
    %634 = arith.mulf %633, %632 : vector<1x384xf32>
    %635 = arith.addf %630, %634 : vector<1x384xf32>
    %636 = arith.addf %592, %635 : vector<1x384xf32>
    %c0_258 = arith.constant 0 : index
    %c121_259 = arith.constant 121 : index
    %637 = vector.load %arg12[%c0_258, %c121_259] : memref<2x640xf32, #tpu.memory_space<vmem>>, vector<2x384xf32>
    %c72_260 = arith.constant 72 : index
    %638 = memref.load %arg8[%c72_260] : memref<98xf32, #tpu.memory_space<smem>>
    %639 = vector.extract_strided_slice %637 {offsets = [0, 0], sizes = [1, 384], strides = [1, 1]} : vector<2x384xf32> to vector<1x384xf32>
    %640 = vector.broadcast %638 : f32 to vector<1x384xf32>
    %641 = arith.mulf %640, %639 : vector<1x384xf32>
    %c73_261 = arith.constant 73 : index
    %642 = memref.load %arg8[%c73_261] : memref<98xf32, #tpu.memory_space<smem>>
    %643 = vector.extract_strided_slice %637 {offsets = [1, 0], sizes = [1, 384], strides = [1, 1]} : vector<2x384xf32> to vector<1x384xf32>
    %644 = vector.broadcast %642 : f32 to vector<1x384xf32>
    %645 = arith.mulf %644, %643 : vector<1x384xf32>
    %646 = arith.addf %641, %645 : vector<1x384xf32>
    %647 = arith.addf %603, %646 : vector<1x384xf32>
    %c0_262 = arith.constant 0 : index
    %c122_263 = arith.constant 122 : index
    %648 = vector.load %arg12[%c0_262, %c122_263] : memref<2x640xf32, #tpu.memory_space<vmem>>, vector<2x384xf32>
    %c74_264 = arith.constant 74 : index
    %649 = memref.load %arg8[%c74_264] : memref<98xf32, #tpu.memory_space<smem>>
    %650 = vector.extract_strided_slice %648 {offsets = [0, 0], sizes = [1, 384], strides = [1, 1]} : vector<2x384xf32> to vector<1x384xf32>
    %651 = vector.broadcast %649 : f32 to vector<1x384xf32>
    %652 = arith.mulf %651, %650 : vector<1x384xf32>
    %c75_265 = arith.constant 75 : index
    %653 = memref.load %arg8[%c75_265] : memref<98xf32, #tpu.memory_space<smem>>
    %654 = vector.extract_strided_slice %648 {offsets = [1, 0], sizes = [1, 384], strides = [1, 1]} : vector<2x384xf32> to vector<1x384xf32>
    %655 = vector.broadcast %653 : f32 to vector<1x384xf32>
    %656 = arith.mulf %655, %654 : vector<1x384xf32>
    %657 = arith.addf %652, %656 : vector<1x384xf32>
    %658 = arith.addf %614, %657 : vector<1x384xf32>
    %c0_266 = arith.constant 0 : index
    %c123_267 = arith.constant 123 : index
    %659 = vector.load %arg12[%c0_266, %c123_267] : memref<2x640xf32, #tpu.memory_space<vmem>>, vector<2x384xf32>
    %c76_268 = arith.constant 76 : index
    %660 = memref.load %arg8[%c76_268] : memref<98xf32, #tpu.memory_space<smem>>
    %661 = vector.extract_strided_slice %659 {offsets = [0, 0], sizes = [1, 384], strides = [1, 1]} : vector<2x384xf32> to vector<1x384xf32>
    %662 = vector.broadcast %660 : f32 to vector<1x384xf32>
    %663 = arith.mulf %662, %661 : vector<1x384xf32>
    %c77_269 = arith.constant 77 : index
    %664 = memref.load %arg8[%c77_269] : memref<98xf32, #tpu.memory_space<smem>>
    %665 = vector.extract_strided_slice %659 {offsets = [1, 0], sizes = [1, 384], strides = [1, 1]} : vector<2x384xf32> to vector<1x384xf32>
    %666 = vector.broadcast %664 : f32 to vector<1x384xf32>
    %667 = arith.mulf %666, %665 : vector<1x384xf32>
    %668 = arith.addf %663, %667 : vector<1x384xf32>
    %669 = arith.addf %625, %668 : vector<1x384xf32>
    %c0_270 = arith.constant 0 : index
    %c124_271 = arith.constant 124 : index
    %670 = vector.load %arg12[%c0_270, %c124_271] : memref<2x640xf32, #tpu.memory_space<vmem>>, vector<2x384xf32>
    %c78_272 = arith.constant 78 : index
    %671 = memref.load %arg8[%c78_272] : memref<98xf32, #tpu.memory_space<smem>>
    %672 = vector.extract_strided_slice %670 {offsets = [0, 0], sizes = [1, 384], strides = [1, 1]} : vector<2x384xf32> to vector<1x384xf32>
    %673 = vector.broadcast %671 : f32 to vector<1x384xf32>
    %674 = arith.mulf %673, %672 : vector<1x384xf32>
    %c79 = arith.constant 79 : index
    %675 = memref.load %arg8[%c79] : memref<98xf32, #tpu.memory_space<smem>>
    %676 = vector.extract_strided_slice %670 {offsets = [1, 0], sizes = [1, 384], strides = [1, 1]} : vector<2x384xf32> to vector<1x384xf32>
    %677 = vector.broadcast %675 : f32 to vector<1x384xf32>
    %678 = arith.mulf %677, %676 : vector<1x384xf32>
    %679 = arith.addf %674, %678 : vector<1x384xf32>
    %680 = arith.addf %636, %679 : vector<1x384xf32>
    %c0_273 = arith.constant 0 : index
    %c125_274 = arith.constant 125 : index
    %681 = vector.load %arg12[%c0_273, %c125_274] : memref<2x640xf32, #tpu.memory_space<vmem>>, vector<2x384xf32>
    %c80_275 = arith.constant 80 : index
    %682 = memref.load %arg8[%c80_275] : memref<98xf32, #tpu.memory_space<smem>>
    %683 = vector.extract_strided_slice %681 {offsets = [0, 0], sizes = [1, 384], strides = [1, 1]} : vector<2x384xf32> to vector<1x384xf32>
    %684 = vector.broadcast %682 : f32 to vector<1x384xf32>
    %685 = arith.mulf %684, %683 : vector<1x384xf32>
    %c81 = arith.constant 81 : index
    %686 = memref.load %arg8[%c81] : memref<98xf32, #tpu.memory_space<smem>>
    %687 = vector.extract_strided_slice %681 {offsets = [1, 0], sizes = [1, 384], strides = [1, 1]} : vector<2x384xf32> to vector<1x384xf32>
    %688 = vector.broadcast %686 : f32 to vector<1x384xf32>
    %689 = arith.mulf %688, %687 : vector<1x384xf32>
    %690 = arith.addf %685, %689 : vector<1x384xf32>
    %691 = arith.addf %647, %690 : vector<1x384xf32>
    %c0_276 = arith.constant 0 : index
    %c126_277 = arith.constant 126 : index
    %692 = vector.load %arg12[%c0_276, %c126_277] : memref<2x640xf32, #tpu.memory_space<vmem>>, vector<2x384xf32>
    %c82 = arith.constant 82 : index
    %693 = memref.load %arg8[%c82] : memref<98xf32, #tpu.memory_space<smem>>
    %694 = vector.extract_strided_slice %692 {offsets = [0, 0], sizes = [1, 384], strides = [1, 1]} : vector<2x384xf32> to vector<1x384xf32>
    %695 = vector.broadcast %693 : f32 to vector<1x384xf32>
    %696 = arith.mulf %695, %694 : vector<1x384xf32>
    %c83 = arith.constant 83 : index
    %697 = memref.load %arg8[%c83] : memref<98xf32, #tpu.memory_space<smem>>
    %698 = vector.extract_strided_slice %692 {offsets = [1, 0], sizes = [1, 384], strides = [1, 1]} : vector<2x384xf32> to vector<1x384xf32>
    %699 = vector.broadcast %697 : f32 to vector<1x384xf32>
    %700 = arith.mulf %699, %698 : vector<1x384xf32>
    %701 = arith.addf %696, %700 : vector<1x384xf32>
    %702 = arith.addf %658, %701 : vector<1x384xf32>
    %c0_278 = arith.constant 0 : index
    %c144_279 = arith.constant 144 : index
    %703 = vector.load %arg12[%c0_278, %c144_279] : memref<2x640xf32, #tpu.memory_space<vmem>>, vector<2x384xf32>
    %c84 = arith.constant 84 : index
    %704 = memref.load %arg8[%c84] : memref<98xf32, #tpu.memory_space<smem>>
    %705 = vector.extract_strided_slice %703 {offsets = [0, 0], sizes = [1, 384], strides = [1, 1]} : vector<2x384xf32> to vector<1x384xf32>
    %706 = vector.broadcast %704 : f32 to vector<1x384xf32>
    %707 = arith.mulf %706, %705 : vector<1x384xf32>
    %c85 = arith.constant 85 : index
    %708 = memref.load %arg8[%c85] : memref<98xf32, #tpu.memory_space<smem>>
    %709 = vector.extract_strided_slice %703 {offsets = [1, 0], sizes = [1, 384], strides = [1, 1]} : vector<2x384xf32> to vector<1x384xf32>
    %710 = vector.broadcast %708 : f32 to vector<1x384xf32>
    %711 = arith.mulf %710, %709 : vector<1x384xf32>
    %712 = arith.addf %707, %711 : vector<1x384xf32>
    %713 = arith.addf %669, %712 : vector<1x384xf32>
    %c0_280 = arith.constant 0 : index
    %c145_281 = arith.constant 145 : index
    %714 = vector.load %arg12[%c0_280, %c145_281] : memref<2x640xf32, #tpu.memory_space<vmem>>, vector<2x384xf32>
    %c86 = arith.constant 86 : index
    %715 = memref.load %arg8[%c86] : memref<98xf32, #tpu.memory_space<smem>>
    %716 = vector.extract_strided_slice %714 {offsets = [0, 0], sizes = [1, 384], strides = [1, 1]} : vector<2x384xf32> to vector<1x384xf32>
    %717 = vector.broadcast %715 : f32 to vector<1x384xf32>
    %718 = arith.mulf %717, %716 : vector<1x384xf32>
    %c87 = arith.constant 87 : index
    %719 = memref.load %arg8[%c87] : memref<98xf32, #tpu.memory_space<smem>>
    %720 = vector.extract_strided_slice %714 {offsets = [1, 0], sizes = [1, 384], strides = [1, 1]} : vector<2x384xf32> to vector<1x384xf32>
    %721 = vector.broadcast %719 : f32 to vector<1x384xf32>
    %722 = arith.mulf %721, %720 : vector<1x384xf32>
    %723 = arith.addf %718, %722 : vector<1x384xf32>
    %724 = arith.addf %680, %723 : vector<1x384xf32>
    %c0_282 = arith.constant 0 : index
    %c146_283 = arith.constant 146 : index
    %725 = vector.load %arg12[%c0_282, %c146_283] : memref<2x640xf32, #tpu.memory_space<vmem>>, vector<2x384xf32>
    %c88 = arith.constant 88 : index
    %726 = memref.load %arg8[%c88] : memref<98xf32, #tpu.memory_space<smem>>
    %727 = vector.extract_strided_slice %725 {offsets = [0, 0], sizes = [1, 384], strides = [1, 1]} : vector<2x384xf32> to vector<1x384xf32>
    %728 = vector.broadcast %726 : f32 to vector<1x384xf32>
    %729 = arith.mulf %728, %727 : vector<1x384xf32>
    %c89 = arith.constant 89 : index
    %730 = memref.load %arg8[%c89] : memref<98xf32, #tpu.memory_space<smem>>
    %731 = vector.extract_strided_slice %725 {offsets = [1, 0], sizes = [1, 384], strides = [1, 1]} : vector<2x384xf32> to vector<1x384xf32>
    %732 = vector.broadcast %730 : f32 to vector<1x384xf32>
    %733 = arith.mulf %732, %731 : vector<1x384xf32>
    %734 = arith.addf %729, %733 : vector<1x384xf32>
    %735 = arith.addf %691, %734 : vector<1x384xf32>
    %c0_284 = arith.constant 0 : index
    %c147_285 = arith.constant 147 : index
    %736 = vector.load %arg12[%c0_284, %c147_285] : memref<2x640xf32, #tpu.memory_space<vmem>>, vector<2x384xf32>
    %c90 = arith.constant 90 : index
    %737 = memref.load %arg8[%c90] : memref<98xf32, #tpu.memory_space<smem>>
    %738 = vector.extract_strided_slice %736 {offsets = [0, 0], sizes = [1, 384], strides = [1, 1]} : vector<2x384xf32> to vector<1x384xf32>
    %739 = vector.broadcast %737 : f32 to vector<1x384xf32>
    %740 = arith.mulf %739, %738 : vector<1x384xf32>
    %c91 = arith.constant 91 : index
    %741 = memref.load %arg8[%c91] : memref<98xf32, #tpu.memory_space<smem>>
    %742 = vector.extract_strided_slice %736 {offsets = [1, 0], sizes = [1, 384], strides = [1, 1]} : vector<2x384xf32> to vector<1x384xf32>
    %743 = vector.broadcast %741 : f32 to vector<1x384xf32>
    %744 = arith.mulf %743, %742 : vector<1x384xf32>
    %745 = arith.addf %740, %744 : vector<1x384xf32>
    %746 = arith.addf %702, %745 : vector<1x384xf32>
    %c0_286 = arith.constant 0 : index
    %c148_287 = arith.constant 148 : index
    %747 = vector.load %arg12[%c0_286, %c148_287] : memref<2x640xf32, #tpu.memory_space<vmem>>, vector<2x384xf32>
    %c92 = arith.constant 92 : index
    %748 = memref.load %arg8[%c92] : memref<98xf32, #tpu.memory_space<smem>>
    %749 = vector.extract_strided_slice %747 {offsets = [0, 0], sizes = [1, 384], strides = [1, 1]} : vector<2x384xf32> to vector<1x384xf32>
    %750 = vector.broadcast %748 : f32 to vector<1x384xf32>
    %751 = arith.mulf %750, %749 : vector<1x384xf32>
    %c93 = arith.constant 93 : index
    %752 = memref.load %arg8[%c93] : memref<98xf32, #tpu.memory_space<smem>>
    %753 = vector.extract_strided_slice %747 {offsets = [1, 0], sizes = [1, 384], strides = [1, 1]} : vector<2x384xf32> to vector<1x384xf32>
    %754 = vector.broadcast %752 : f32 to vector<1x384xf32>
    %755 = arith.mulf %754, %753 : vector<1x384xf32>
    %756 = arith.addf %751, %755 : vector<1x384xf32>
    %757 = arith.addf %713, %756 : vector<1x384xf32>
    %c0_288 = arith.constant 0 : index
    %c149_289 = arith.constant 149 : index
    %758 = vector.load %arg12[%c0_288, %c149_289] : memref<2x640xf32, #tpu.memory_space<vmem>>, vector<2x384xf32>
    %c94 = arith.constant 94 : index
    %759 = memref.load %arg8[%c94] : memref<98xf32, #tpu.memory_space<smem>>
    %760 = vector.extract_strided_slice %758 {offsets = [0, 0], sizes = [1, 384], strides = [1, 1]} : vector<2x384xf32> to vector<1x384xf32>
    %761 = vector.broadcast %759 : f32 to vector<1x384xf32>
    %762 = arith.mulf %761, %760 : vector<1x384xf32>
    %c95 = arith.constant 95 : index
    %763 = memref.load %arg8[%c95] : memref<98xf32, #tpu.memory_space<smem>>
    %764 = vector.extract_strided_slice %758 {offsets = [1, 0], sizes = [1, 384], strides = [1, 1]} : vector<2x384xf32> to vector<1x384xf32>
    %765 = vector.broadcast %763 : f32 to vector<1x384xf32>
    %766 = arith.mulf %765, %764 : vector<1x384xf32>
    %767 = arith.addf %762, %766 : vector<1x384xf32>
    %768 = arith.addf %724, %767 : vector<1x384xf32>
    %c0_290 = arith.constant 0 : index
    %c150_291 = arith.constant 150 : index
    %769 = vector.load %arg12[%c0_290, %c150_291] : memref<2x640xf32, #tpu.memory_space<vmem>>, vector<2x384xf32>
    %c96_292 = arith.constant 96 : index
    %770 = memref.load %arg8[%c96_292] : memref<98xf32, #tpu.memory_space<smem>>
    %771 = vector.extract_strided_slice %769 {offsets = [0, 0], sizes = [1, 384], strides = [1, 1]} : vector<2x384xf32> to vector<1x384xf32>
    %772 = vector.broadcast %770 : f32 to vector<1x384xf32>
    %773 = arith.mulf %772, %771 : vector<1x384xf32>
    %c97_293 = arith.constant 97 : index
    %774 = memref.load %arg8[%c97_293] : memref<98xf32, #tpu.memory_space<smem>>
    %775 = vector.extract_strided_slice %769 {offsets = [1, 0], sizes = [1, 384], strides = [1, 1]} : vector<2x384xf32> to vector<1x384xf32>
    %776 = vector.broadcast %774 : f32 to vector<1x384xf32>
    %777 = arith.mulf %776, %775 : vector<1x384xf32>
    %778 = arith.addf %773, %777 : vector<1x384xf32>
    %779 = arith.addf %735, %778 : vector<1x384xf32>
    %780 = arith.addf %779, %746 : vector<1x384xf32>
    %781 = arith.addf %780, %757 : vector<1x384xf32>
    %782 = arith.addf %781, %768 : vector<1x384xf32>
    %c0_294 = arith.constant 0 : index
    %783 = memref.load %arg9[%c0_294] : memref<1xf32, #tpu.memory_space<smem>>
    %784 = vector.broadcast %783 : f32 to vector<1x384xf32>
    %785 = arith.addf %782, %784 : vector<1x384xf32>
    %786 = arith.negf %785 : vector<1x384xf32>
    %787 = math.exp %786 : vector<1x384xf32>
    %cst_295 = arith.constant 1.000000e+00 : f32
    %788 = vector.broadcast %cst_295 : f32 to vector<1x384xf32>
    %789 = arith.addf %788, %787 : vector<1x384xf32>
    %790 = arith.divf %788, %789 : vector<1x384xf32>
    %791 = vector.broadcast %790 : vector<1x384xf32> to vector<8x384xf32>
    %792 = arith.mulf %226, %791 : vector<8x384xf32>
    %793 = arith.addf %792, %157 : vector<8x384xf32>
    %c0_296 = arith.constant 0 : index
    %c0_297 = arith.constant 0 : index
    %c0_298 = arith.constant 0 : index
    %794 = vector.load %arg10[%c0_296, %c0_297, %c0_298] : memref<1x8x384xf32, #tpu.memory_space<vmem>>, vector<1x8x384xf32>
    %795 = vector.shape_cast %794 : vector<1x8x384xf32> to vector<8x384xf32>
    %796 = vector.shape_cast %793 : vector<8x384xf32> to vector<1x8x384xf32>
    tpu.vector_store %arg10[%c0_296, %c0_297, %c0_298], %796 {strides = array<i32>} : memref<1x8x384xf32, #tpu.memory_space<vmem>>, vector<1x8x384xf32>,
    return
  }
  func.func @transform_0(%arg0: i32) -> (i32, i32, i32) {
    %c0_i32 = arith.constant 0 : i32
    %c0_i32_0 = arith.constant 0 : i32
    %c0_i32_1 = arith.constant 0 : i32
    return %arg0, %c0_i32, %c0_i32_0 : i32, i32, i32
  }
  func.func @transform_1(%arg0: i32) -> (i32, i32) {
    %c0_i32 = arith.constant 0 : i32
    %c0_i32_0 = arith.constant 0 : i32
    %c0_i32_1 = arith.constant 0 : i32
    return %c0_i32, %c0_i32_0 : i32, i32
  }
  func.func @transform_2(%arg0: i32) -> (i32, i32) {
    %c0_i32 = arith.constant 0 : i32
    %c0_i32_0 = arith.constant 0 : i32
    %c0_i32_1 = arith.constant 0 : i32
    return %c0_i32, %c0_i32_0 : i32, i32
  }
  func.func @transform_3(%arg0: i32) -> (i32, i32) {
    %c0_i32 = arith.constant 0 : i32
    %c0_i32_0 = arith.constant 0 : i32
    %c0_i32_1 = arith.constant 0 : i32
    return %c0_i32, %c0_i32_0 : i32, i32
  }
  func.func @transform_4(%arg0: i32) -> (i32, i32) {
    %c0_i32 = arith.constant 0 : i32
    %c0_i32_0 = arith.constant 0 : i32
    %c0_i32_1 = arith.constant 0 : i32
    return %c0_i32, %c0_i32_0 : i32, i32
  }
  func.func @transform_5(%arg0: i32) -> (i32, i32) {
    %c0_i32 = arith.constant 0 : i32
    %c0_i32_0 = arith.constant 0 : i32
    %c0_i32_1 = arith.constant 0 : i32
    return %c0_i32, %c0_i32_0 : i32, i32
  }
  func.func @transform_6(%arg0: i32) -> (i32, i32) {
    %c0_i32 = arith.constant 0 : i32
    %c0_i32_0 = arith.constant 0 : i32
    %c0_i32_1 = arith.constant 0 : i32
    return %c0_i32, %c0_i32_0 : i32, i32
  }
  func.func @transform_7(%arg0: i32) -> i32 {
    %c0_i32 = arith.constant 0 : i32
    %c0_i32_0 = arith.constant 0 : i32
    return %c0_i32 : i32
  }
  func.func @transform_8(%arg0: i32) -> i32 {
    %c0_i32 = arith.constant 0 : i32
    %c0_i32_0 = arith.constant 0 : i32
    return %c0_i32 : i32
  }
  func.func @transform_9(%arg0: i32) -> (i32, i32, i32) {
    %c0_i32 = arith.constant 0 : i32
    %c0_i32_0 = arith.constant 0 : i32
    %c0_i32_1 = arith.constant 0 : i32
    return %arg0, %c0_i32, %c0_i32_0 : i32, i32, i32
  }
}

</mosaic_0001>

<llo_original>
// kernel: tpu_custom_call.1
$region0: #{tpu_custom_call.1}
  #allocation0 [shape = 'u32[]', space=smem, size = 0x4, offset = 0x4, fixed_abs, tag = 'smem constant byte address 0x4 - core index']
  #allocation1 [shape = 'u32[144,128]{1,0:T(1,128)}', space=vmem, size = 0x12000, scoped, tag = 'internal scratch']
  %s0 = inlined_call_operand.hbm [shape: f32[8,128], index: 0, kind: input, shape index: {}]
  %s1 = inlined_call_operand.hbm [shape: f32[8,128], index: 1, kind: output, shape index: {}]
  %s2 = sld [smem:[#allocation0]]
  $region18: #{tpu_custom_call.1} parent=0
    _
  %s4 = ssub.s32 1, %s2
  %s5 = scalar_select 0, %s4, %s2
  $region1: #{tpu_custom_call.1} parent=0
    #allocation2 [shape = 'u8[4096]{0}', space=vmem, size = 0x1000, scoped, tag = 'input window, operand 0, single buffered']
    #allocation3 [shape = 's32[1]{0}', space=sflag, size = 0x4, scoped, tag = 'scoped memory for tpu_custom_call.1']
    #allocation4 [shape = 's32[1]{0}', space=sflag, size = 0x4, scoped, tag = 'scoped memory for tpu_custom_call.1']
    #allocation5 [shape = 'u8[4096]{0}', space=vmem, size = 0x1000, scoped, tag = 'output window, operand 0, single buffered']
    %6 = vsyncpa [#allocation3], 0
    %7 = vsyncpa [#allocation4], 0
    // Predicated region
    $region2: #{tpu_custom_call.1} parent=1 // pred_check
      _
    $region3: #{tpu_custom_call.1} parent=1 // pred_check_branch
      %9 = sbr.rel (0) target = $region5
    $region4: #{tpu_custom_call.1} parent=1 // pred_region
      %s11 = ssub.s32 128, 128
      %12 = vsyncadd [#allocation3], %s11
      %s14 = sshll.u32 [#allocation2], 4
      %s15 = int_to_ptr.vmem [resolvable:$true] %s14
      %17 = dma.hbm_to_vmem [thread:$0]  %s0, 128, %s15, [#allocation3]
    $region5: #{tpu_custom_call.1} parent=1 // pred_fallthru
      _
    // Predicated region
    $region6: #{tpu_custom_call.1} parent=1 // pred_check
      _
    $region7: #{tpu_custom_call.1} parent=1 // pred_check_branch
      %19 = sbr.rel (0) target = $region9
    $region8: #{tpu_custom_call.1} parent=1 // pred_region
      %20 = dma.done [#allocation3], 128
    $region9: #{tpu_custom_call.1} parent=1 // pred_fallthru
      _
    %v21 = vld [vmem:[#allocation2] sm:$0xff]
    %22 = vrot.lane.b32.xlu0 %v21, 1
    %v23 = vpop.permute.xlu0 %22
    %24 = vst [vmem:[#allocation5] sm:$0xff] %v23
    // Predicated region
    $region10: #{tpu_custom_call.1} parent=1 // pred_check
      _
    $region11: #{tpu_custom_call.1} parent=1 // pred_check_branch
      %26 = sbr.rel (0) target = $region13
    $region12: #{tpu_custom_call.1} parent=1 // pred_region
      %s28 = ssub.s32 128, 128
      %29 = vsyncadd [#allocation4], %s28
      %s31 = sshll.u32 [#allocation5], 4
      %s32 = int_to_ptr.vmem [resolvable:$true] %s31
      %34 = dma.vmem_to_hbm [thread:$0]  %s32, 128, %s1, [#allocation4]
    $region13: #{tpu_custom_call.1} parent=1 // pred_fallthru
      _
    // Predicated region
    $region14: #{tpu_custom_call.1} parent=1 // pred_check
      _
    $region15: #{tpu_custom_call.1} parent=1 // pred_check_branch
      %36 = sbr.rel (0) target = $region17
    $region16: #{tpu_custom_call.1} parent=1 // pred_region
      %37 = dma.done [#allocation4], 128
    $region17: #{tpu_custom_call.1} parent=1 // pred_fallthru
      _
    %38 = vsyncpa [#allocation3], 1
    %39 = vsyncpa [#allocation4], 1

// kernel: tpu_custom_call.1
$region0: #{tpu_custom_call.1}
  #allocation0 [shape = 'u32[]', space=smem, size = 0x4, offset = 0x4, fixed_abs, tag = 'smem constant byte address 0x4 - core index']
  #allocation1 [shape = 'u32[144,128]{1,0:T(1,128)}', space=vmem, size = 0x12000, scoped, tag = 'internal scratch']
  #allocation2 [shape = 'bf16[196,384]{1,0:T(8,128)(2,1)}', space=vmem, size = 0x25800, scoped, tag = 'scratch operand']
  #allocation3 [shape = 'f32[2,640]{1,0:T(2,128)}', space=vmem, size = 0x1400, scoped, tag = 'scratch operand']
  #allocation4 [shape = 'f32[1]{0:T(128)S(6)}', space=smem, size = 0x200, scoped, tag = 'scoped memory for tpu_custom_call.1']
  %s0 = inlined_call_operand.vmem [shape: f32[2,4,640], index: 0, kind: input, shape index: {}]
  %s1 = inlined_call_operand.hbm [shape: bf16[32,196], index: 1, kind: input, shape index: {}]
  %s2 = inlined_call_operand.vmem [shape: f32[32,1], index: 2, kind: input, shape index: {}]
  %s3 = inlined_call_operand.vmem [shape: bf16[8,32], index: 3, kind: input, shape index: {}]
  %s4 = inlined_call_operand.vmem [shape: f32[8,1], index: 4, kind: input, shape index: {}]
  %s5 = inlined_call_operand.vmem [shape: f32[1,8], index: 5, kind: input, shape index: {}]
  %s6 = inlined_call_operand.vmem [shape: f32[8,1], index: 6, kind: input, shape index: {}]
  %s7 = inlined_call_operand.vmem [shape: f32[98], index: 7, kind: input, shape index: {}]
  %s8 = inlined_call_operand.<no memory space> [shape: f32[1], index: 8, kind: input, shape index: {}]
  %s9 = inlined_call_operand.hbm [shape: f32[2,8,384], index: 9, kind: output, shape index: {}]
  %s10 = sld [smem:[#allocation0]]
  $region77: #{tpu_custom_call.1} parent=0
    _
  %s12 = ssub.s32 1, %s10
  %s13 = scalar_select 0, %s12, %s10
  %14 = sst [smem:[#allocation4]] %s8
  $region1: #{tpu_custom_call.1} parent=0
    #allocation5 [shape = 'u8[16384]{0}', space=vmem, size = 0x4000, scoped, tag = 'input window, operand 1, single buffered']
    #allocation6 [shape = 's32[2]{0}', space=sflag, size = 0x8, scoped, tag = 'scoped memory for tpu_custom_call.1']
    #allocation7 [shape = 's32[2]{0}', space=sflag, size = 0x8, scoped, tag = 'scoped memory for tpu_custom_call.1']
    #allocation8 [shape = 's32[2]{0}', space=sflag, size = 0x8, scoped, tag = 'scoped memory for tpu_custom_call.1']
    #allocation9 [shape = 'u8[512]{0}', space=smem, size = 0x200, scoped, tag = 'input window, operand 7, single buffered']
    #allocation10 [shape = 'u8[24576]{0}', space=vmem, size = 0x6000, scoped, tag = 'output window, operand 0']
    %15 = vsyncpa [#allocation6], 0
    %16 = vsyncpa [#allocation8], 0
    %17 = vsyncpa [#allocation7], 0
    %s18 = scalar_lea.sflag [#allocation7], 1
    %19 = vsyncpa %s18, 0
    loop: start=0, step=1, limit=4
    $region2: #{tpu_custom_call.1} parent=1 // loop_pre_header
      _
    $region3: #{tpu_custom_call.1} parent=1 // loop_header
      %s21 = sphi 0, %s25
      %p22 = scmp.ge.s32.totalorder %s21, 4
      %s31 = sphi 0, %s33
      %s34 = sphi 0, %s31
      %s35 = sphi 0, %s34
      %s51 = sphi 0, %s35
      %s55 = sphi 0, %s55
      %s57 = sphi 0, %s55
      %s58 = sphi 0, %s57
      %s72 = sphi 0, %s58
      %s76 = sphi 0, %s76
      %s78 = sphi 0, %s76
      %s79 = sphi 0, %s78
      %s93 = sphi 0, %s79
      %s97 = sphi 0, %s97
      %s99 = sphi 0, %s97
      %s100 = sphi 0, %s99
      %s114 = sphi 0, %s100
      %s118 = sphi 0, %s118
      %s120 = sphi 0, %s118
      %s121 = sphi 0, %s120
      %s135 = sphi 0, %s121
      %s139 = sphi 0, %s139
      %s141 = sphi 0, %s139
      %s142 = sphi 0, %s141
      %s156 = sphi 0, %s142
      %s160 = sphi 0, %s160
      %s162 = sphi 0, %s160
      %s163 = sphi 0, %s162
      %s177 = sphi 0, %s163
      %s181 = sphi 0, %s181
      %s183 = sphi 0, %s181
      %s184 = sphi 0, %s183
      %s198 = sphi 0, %s184
      %s202 = sphi 0, %s202
      %s204 = sphi 0, %s202
      %s205 = sphi 0, %s204
      %s219 = sphi 0, %s205
      %s225 = sphi 0, %s227
      %s228 = sphi 0, %s225
      %s229 = sphi 0, %s228
      %s245 = sphi 0, %s229
    $region4: #{tpu_custom_call.1} parent=1 // loop_header_branch
      %24 = sbr.rel (%p22) target = $region8
    $region5: #{tpu_custom_call.1} parent=1 // loop_body
      %s26 = ssub.s32 %s21, 1
      %s27 = ssub.s32 %s21, 2
      %s28 = sadd.s32 %s21, 1
      %s29 = ssub.s32 %s21, %s28
      %p30 = scmp.eq.s32.totalorder %s29, 0
      %s32 = sadd.s32 %s31, 1
      %s33 = scalar_select %p30, %s31, %s32
      %p36 = pneg %p30
      %p37 = scmp.eq.s32.totalorder %s21, 1
      %p38 = por %p36, %p37
      %p39 = scmp.ne.s32.totalorder %s31, %s34
      %p40 = scmp.eq.s32.totalorder %s21, 0
      %p41 = por %p39, %p40
      %p42 = scmp.ne.s32.totalorder %s31, %s34
      %p43 = scmp.eq.s32.totalorder %s26, 1
      %p44 = por %p42, %p43
      %p45 = scmp.ne.s32.totalorder %s34, %s35
      %p46 = scmp.eq.s32.totalorder %s26, 0
      %p47 = por %p45, %p46
      %p48 = scmp.ne.s32.totalorder %s34, %s35
      %p49 = scmp.eq.s32.totalorder %s27, 1
      %p50 = por %p48, %p49
      %p52 = scmp.ne.s32.totalorder %s35, %s51
      %p53 = scmp.eq.s32.totalorder %s27, 0
      %p54 = por %p52, %p53
      %s56 = sadd.s32 %s55, 1
      %p59 = scmp.eq.s32.totalorder %s21, 1
      %p60 = scmp.ne.s32.totalorder %s55, %s57
      %p61 = scmp.eq.s32.totalorder %s21, 0
      %p62 = por %p60, %p61
      %p63 = scmp.ne.s32.totalorder %s55, %s57
      %p64 = scmp.eq.s32.totalorder %s26, 1
      %p65 = por %p63, %p64
      %p66 = scmp.ne.s32.totalorder %s57, %s58
      %p67 = scmp.eq.s32.totalorder %s26, 0
      %p68 = por %p66, %p67
      %p69 = scmp.ne.s32.totalorder %s57, %s58
      %p70 = scmp.eq.s32.totalorder %s27, 1
      %p71 = por %p69, %p70
      %p73 = scmp.ne.s32.totalorder %s58, %s72
      %p74 = scmp.eq.s32.totalorder %s27, 0
      %p75 = por %p73, %p74
      %s77 = sadd.s32 %s76, 1
      %p80 = scmp.eq.s32.totalorder %s21, 1
      %p81 = scmp.ne.s32.totalorder %s76, %s78
      %p82 = scmp.eq.s32.totalorder %s21, 0
      %p83 = por %p81, %p82
      %p84 = scmp.ne.s32.totalorder %s76, %s78
      %p85 = scmp.eq.s32.totalorder %s26, 1
      %p86 = por %p84, %p85
      %p87 = scmp.ne.s32.totalorder %s78, %s79
      %p88 = scmp.eq.s32.totalorder %s26, 0
      %p89 = por %p87, %p88
      %p90 = scmp.ne.s32.totalorder %s78, %s79
      %p91 = scmp.eq.s32.totalorder %s27, 1
      %p92 = por %p90, %p91
      %p94 = scmp.ne.s32.totalorder %s79, %s93
      %p95 = scmp.eq.s32.totalorder %s27, 0
      %p96 = por %p94, %p95
      %s98 = sadd.s32 %s97, 1
      %p101 = scmp.eq.s32.totalorder %s21, 1
      %p102 = scmp.ne.s32.totalorder %s97, %s99
      %p103 = scmp.eq.s32.totalorder %s21, 0
      %p104 = por %p102, %p103
      %p105 = scmp.ne.s32.totalorder %s97, %s99
      %p106 = scmp.eq.s32.totalorder %s26, 1
      %p107 = por %p105, %p106
      %p108 = scmp.ne.s32.totalorder %s99, %s100
      %p109 = scmp.eq.s32.totalorder %s26, 0
      %p110 = por %p108, %p109
      %p111 = scmp.ne.s32.totalorder %s99, %s100
      %p112 = scmp.eq.s32.totalorder %s27, 1
      %p113 = por %p111, %p112
      %p115 = scmp.ne.s32.totalorder %s100, %s114
      %p116 = scmp.eq.s32.totalorder %s27, 0
      %p117 = por %p115, %p116
      %s119 = sadd.s32 %s118, 1
      %p122 = scmp.eq.s32.totalorder %s21, 1
      %p123 = scmp.ne.s32.totalorder %s118, %s120
      %p124 = scmp.eq.s32.totalorder %s21, 0
      %p125 = por %p123, %p124
      %p126 = scmp.ne.s32.totalorder %s118, %s120
      %p127 = scmp.eq.s32.totalorder %s26, 1
      %p128 = por %p126, %p127
      %p129 = scmp.ne.s32.totalorder %s120, %s121
      %p130 = scmp.eq.s32.totalorder %s26, 0
      %p131 = por %p129, %p130
      %p132 = scmp.ne.s32.totalorder %s120, %s121
      %p133 = scmp.eq.s32.totalorder %s27, 1
      %p134 = por %p132, %p133
      %p136 = scmp.ne.s32.totalorder %s121, %s135
      %p137 = scmp.eq.s32.totalorder %s27, 0
      %p138 = por %p136, %p137
      %s140 = sadd.s32 %s139, 1
      %p143 = scmp.eq.s32.totalorder %s21, 1
      %p144 = scmp.ne.s32.totalorder %s139, %s141
      %p145 = scmp.eq.s32.totalorder %s21, 0
      %p146 = por %p144, %p145
      %p147 = scmp.ne.s32.totalorder %s139, %s141
      %p148 = scmp.eq.s32.totalorder %s26, 1
      %p149 = por %p147, %p148
      %p150 = scmp.ne.s32.totalorder %s141, %s142
      %p151 = scmp.eq.s32.totalorder %s26, 0
      %p152 = por %p150, %p151
      %p153 = scmp.ne.s32.totalorder %s141, %s142
      %p154 = scmp.eq.s32.totalorder %s27, 1
      %p155 = por %p153, %p154
      %p157 = scmp.ne.s32.totalorder %s142, %s156
      %p158 = scmp.eq.s32.totalorder %s27, 0
      %p159 = por %p157, %p158
      %s161 = sadd.s32 %s160, 1
      %p164 = scmp.eq.s32.totalorder %s21, 1
      %p165 = scmp.ne.s32.totalorder %s160, %s162
      %p166 = scmp.eq.s32.totalorder %s21, 0
      %p167 = por %p165, %p166
      %p168 = scmp.ne.s32.totalorder %s160, %s162
      %p169 = scmp.eq.s32.totalorder %s26, 1
      %p170 = por %p168, %p169
      %p171 = scmp.ne.s32.totalorder %s162, %s163
      %p172 = scmp.eq.s32.totalorder %s26, 0
      %p173 = por %p171, %p172
      %p174 = scmp.ne.s32.totalorder %s162, %s163
      %p175 = scmp.eq.s32.totalorder %s27, 1
      %p176 = por %p174, %p175
      %p178 = scmp.ne.s32.totalorder %s163, %s177
      %p179 = scmp.eq.s32.totalorder %s27, 0
      %p180 = por %p178, %p179
      %s182 = sadd.s32 %s181, 1
      %p185 = scmp.eq.s32.totalorder %s21, 1
      %p186 = scmp.ne.s32.totalorder %s181, %s183
      %p187 = scmp.eq.s32.totalorder %s21, 0
      %p188 = por %p186, %p187
      %p189 = scmp.ne.s32.totalorder %s181, %s183
      %p190 = scmp.eq.s32.totalorder %s26, 1
      %p191 = por %p189, %p190
      %p192 = scmp.ne.s32.totalorder %s183, %s184
      %p193 = scmp.eq.s32.totalorder %s26, 0
      %p194 = por %p192, %p193
      %p195 = scmp.ne.s32.totalorder %s183, %s184
      %p196 = scmp.eq.s32.totalorder %s27, 1
      %p197 = por %p195, %p196
      %p199 = scmp.ne.s32.totalorder %s184, %s198
      %p200 = scmp.eq.s32.totalorder %s27, 0
      %p201 = por %p199, %p200
      %s203 = sadd.s32 %s202, 1
      %p206 = scmp.eq.s32.totalorder %s21, 1
      %p207 = scmp.ne.s32.totalorder %s202, %s204
      %p208 = scmp.eq.s32.totalorder %s21, 0
      %p209 = por %p207, %p208
      %p210 = scmp.ne.s32.totalorder %s202, %s204
      %p211 = scmp.eq.s32.totalorder %s26, 1
      %p212 = por %p210, %p211
      %p213 = scmp.ne.s32.totalorder %s204, %s205
      %p214 = scmp.eq.s32.totalorder %s26, 0
      %p215 = por %p213, %p214
      %p216 = scmp.ne.s32.totalorder %s204, %s205
      %p217 = scmp.eq.s32.totalorder %s27, 1
      %p218 = por %p216, %p217
      %p220 = scmp.ne.s32.totalorder %s205, %s219
      %p221 = scmp.eq.s32.totalorder %s27, 0
      %p222 = por %p220, %p221
      %s223 = ssub.s32 %s21, %s28
      %p224 = scmp.eq.s32.totalorder %s223, 0
      %s226 = sadd.s32 %s225, 1
      %s227 = scalar_select %p224, %s225, %s226
      %p230 = pneg %p224
      %p231 = scmp.eq.s32.totalorder %s21, 1
      %p232 = por %p230, %p231
      %p233 = scmp.ne.s32.totalorder %s225, %s228
      %p234 = scmp.eq.s32.totalorder %s21, 0
      %p235 = por %p233, %p234
      %p236 = scmp.ne.s32.totalorder %s225, %s228
      %p237 = scmp.eq.s32.totalorder %s26, 1
      %p238 = por %p236, %p237
      %p239 = scmp.ne.s32.totalorder %s228, %s229
      %p240 = scmp.eq.s32.totalorder %s26, 0
      %p241 = por %p239, %p240
      %p242 = scmp.ne.s32.totalorder %s228, %s229
      %p243 = scmp.eq.s32.totalorder %s27, 1
      %p244 = por %p242, %p243
      %p246 = scmp.ne.s32.totalorder %s229, %s245
      %p247 = scmp.eq.s32.totalorder %s27, 0
      %p248 = por %p246, %p247
      %p249 = scmp.le.s32.totalorder 1, %s21
      %p250 = scmp.lt.s32.totalorder %s21, 3
      %p251 = pnand %p249, %p250
      %p252 = pneg %p251
      // Predicated region
      $region9: #{tpu_custom_call.1} parent=5 // pred_check
        _
      $region10: #{tpu_custom_call.1} parent=5 // pred_check_branch
        %254 = sbr.rel (%p251) target = $region12
      $region11: #{tpu_custom_call.1} parent=5 // pred_region
        %s255 = ssub.s32 %s21, 1
        // Predicated region
        $region13: #{tpu_custom_call.1} parent=11 // pred_check
          %p256 = pneg %p68
        $region14: #{tpu_custom_call.1} parent=11 // pred_check_branch
          %258 = sbr.rel (%p256) target = $region16
        $region15: #{tpu_custom_call.1} parent=11 // pred_region
          %s260 = ssub.s32 512, 512
          %261 = vsyncadd [#allocation6], %s260
          %s262 = sshll.u32 [#allocation5], 4
          %s263 = int_to_ptr.vmem [resolvable:$true] %s262
          %268 = dma.hbm_to_vmem [thread:$0]  %s1, 512, %s263, [#allocation6], 128, 128, 8
        $region16: #{tpu_custom_call.1} parent=11 // pred_fallthru
          _
        // Predicated region
        $region17: #{tpu_custom_call.1} parent=11 // pred_check
          %p269 = pneg %p89
        $region18: #{tpu_custom_call.1} parent=11 // pred_check_branch
          %271 = sbr.rel (%p269) target = $region20
        $region19: #{tpu_custom_call.1} parent=11 // pred_region
          _
        $region20: #{tpu_custom_call.1} parent=11 // pred_fallthru
          _
        // Predicated region
        $region21: #{tpu_custom_call.1} parent=11 // pred_check
          %p272 = pneg %p110
        $region22: #{tpu_custom_call.1} parent=11 // pred_check_branch
          %274 = sbr.rel (%p272) target = $region24
        $region23: #{tpu_custom_call.1} parent=11 // pred_region
          _
        $region24: #{tpu_custom_call.1} parent=11 // pred_fallthru
          _
        // Predicated region
        $region25: #{tpu_custom_call.1} parent=11 // pred_check
          %p275 = pneg %p131
        $region26: #{tpu_custom_call.1} parent=11 // pred_check_branch
          %277 = sbr.rel (%p275) target = $region28
        $region27: #{tpu_custom_call.1} parent=11 // pred_region
          _
        $region28: #{tpu_custom_call.1} parent=11 // pred_fallthru
          _
        // Predicated region
        $region29: #{tpu_custom_call.1} parent=11 // pred_check
          %p278 = pneg %p152
        $region30: #{tpu_custom_call.1} parent=11 // pred_check_branch
          %280 = sbr.rel (%p278) target = $region32
        $region31: #{tpu_custom_call.1} parent=11 // pred_region
          _
        $region32: #{tpu_custom_call.1} parent=11 // pred_fallthru
          _
        // Predicated region
        $region33: #{tpu_custom_call.1} parent=11 // pred_check
          %p281 = pneg %p173
        $region34: #{tpu_custom_call.1} parent=11 // pred_check_branch
          %283 = sbr.rel (%p281) target = $region36
        $region35: #{tpu_custom_call.1} parent=11 // pred_region
          _
        $region36: #{tpu_custom_call.1} parent=11 // pred_fallthru
          _
        // Predicated region
        $region37: #{tpu_custom_call.1} parent=11 // pred_check
          %p284 = pneg %p194
        $region38: #{tpu_custom_call.1} parent=11 // pred_check_branch
          %286 = sbr.rel (%p284) target = $region40
        $region39: #{tpu_custom_call.1} parent=11 // pred_region
          %s288 = ssub.s32 16, 16
          %289 = vsyncadd [#allocation8], %s288
          %s291 = sshll.u32 %s7, 4
          %s292 = int_to_ptr.vmem [resolvable:$true] %s291
          %294 = dma.vmem_to_smem %s292, 16, [#allocation9], [#allocation8]
        $region40: #{tpu_custom_call.1} parent=11 // pred_fallthru
          _
        // Predicated region
        $region41: #{tpu_custom_call.1} parent=11 // pred_check
          %p295 = pneg %p215
        $region42: #{tpu_custom_call.1} parent=11 // pred_check_branch
          %297 = sbr.rel (%p295) target = $region44
        $region43: #{tpu_custom_call.1} parent=11 // pred_region
          _
        $region44: #{tpu_custom_call.1} parent=11 // pred_fallthru
          _
      $region12: #{tpu_custom_call.1} parent=5 // pred_fallthru
        _
      %p298 = scmp.lt.s32.totalorder %s21, 2
      // Predicated region
      $region45: #{tpu_custom_call.1} parent=5 // pred_check
        %p299 = pneg %p298
      $region46: #{tpu_custom_call.1} parent=5 // pred_check_branch
        %301 = sbr.rel (%p299) target = $region48
      $region47: #{tpu_custom_call.1} parent=5 // pred_region
        // Predicated region
        $region49: #{tpu_custom_call.1} parent=47 // pred_check
          %p302 = pneg %p41
        $region50: #{tpu_custom_call.1} parent=47 // pred_check_branch
          %304 = sbr.rel (%p302) target = $region52
        $region51: #{tpu_custom_call.1} parent=47 // pred_region
          %p305 = scmp.lt.s32.totalorder %s21, 1
          %s306 = scalar_select %p305, %s21, 1
          %s307 = smul.addr %s306, 5
          %s308 = smul.addr %s307, 4
          %s309 = scalar_lea.vmem %s0, %s308
        $region52: #{tpu_custom_call.1} parent=47 // pred_fallthru
          _
      $region48: #{tpu_custom_call.1} parent=5 // pred_fallthru
        _
      %p310 = scmp.le.s32.totalorder 1, %s21
      %p311 = scmp.lt.s32.totalorder %s21, 3
      %p312 = pnand %p310, %p311
      %p313 = pneg %p312
      // Predicated region
      $region53: #{tpu_custom_call.1} parent=5 // pred_check
        _
      $region54: #{tpu_custom_call.1} parent=5 // pred_check_branch
        %315 = sbr.rel (%p312) target = $region56
      $region55: #{tpu_custom_call.1} parent=5 // pred_region
        %s316 = ssub.s32 %s21, 1
        // Predicated region
        $region57: #{tpu_custom_call.1} parent=55 // pred_check
          %p317 = pneg %p68
        $region58: #{tpu_custom_call.1} parent=55 // pred_check_branch
          %319 = sbr.rel (%p317) target = $region60
        $region59: #{tpu_custom_call.1} parent=55 // pred_region
          %320 = dma.done [#allocation6], 512
        $region60: #{tpu_custom_call.1} parent=55 // pred_fallthru
          _
        // Predicated region
        $region61: #{tpu_custom_call.1} parent=55 // pred_check
          %p321 = pneg %p194
        $region62: #{tpu_custom_call.1} parent=55 // pred_check_branch
          %323 = sbr.rel (%p321) target = $region64
        $region63: #{tpu_custom_call.1} parent=55 // pred_region
          %324 = dma.done [#allocation8], 16
        $region64: #{tpu_custom_call.1} parent=55 // pred_fallthru
          _
        %325 = sfence
        %p326 = scmp.lt.s32.totalorder %s26, 1
        %s327 = scalar_select %p326, %s26, 1
        %s328 = smul.addr %s327, 5
        %s329 = smul.addr %s328, 4
        %s330 = scalar_lea.vmem %s0, %s329
        %p331 = pneg %p47
        %p332 = pneg %p44
        %p333 = pneg %p68
        %p334 = pneg %p65
        %p335 = pneg %p89
        %p336 = pneg %p86
        %p337 = pneg %p110
        %p338 = pneg %p107
        %p339 = pneg %p131
        %p340 = pneg %p128
        %p341 = pneg %p152
        %p342 = pneg %p149
        %p343 = pneg %p173
        %p344 = pneg %p170
        %p345 = pneg %p194
        %p346 = pneg %p191
        %p347 = pneg %p215
        %p348 = pneg %p212
        %p349 = pneg %p241
        %p350 = pneg %p238
        %s351 = sand.u32 %s228, 1
        %s352 = scalar_lea.sflag [#allocation7], %s351
        %s353 = sand.u32 %s228, 1
        %s354 = smul.addr %s353, 24
        %s355 = scalar_lea.vmem [#allocation10], %s354
        %p356 = scmp.lt.s32.totalorder %s26, 1
        %s357 = scalar_select %p356, %s26, 1
        %s358 = smul.addr %s357, 5
        %s359 = smul.addr %s358, 4
        %s360 = scalar_lea.vmem %s0, %s359
        %v362 = vld [vmem:[%s360] sm:$0xff]
        %v363 = vld [vmem:[%s360 + $0x8] sm:$0xf]
        %v364 = vld [vmem:[%s360 + $0x8] sm:$0xff]
        %v366 = vcombine.high %v362, %v362
        %v369 = vcombine.low %v362, %v362
        %v370 = vcombine.low %v364, %v364
        %371 = vrot.lane.b32.xlu0 %v369, 127
        %v372 = vpop.permute.xlu0 %371
        %373 = vrot.lane.b32.xlu0 %v362, 127
        %v374 = vpop.permute.xlu0 %373
        %375 = vrot.lane.b32.xlu0 %v370, 127
        %v376 = vpop.permute.xlu0 %375
        %377 = vrot.lane.b32.xlu0 %v364, 127
        %v378 = vpop.permute.xlu0 %377
        %vm379 = vcmask 1039360
        %v380 = vsel %vm379, %v372, %v374
        %v381 = vsel %vm379, %v374, %v376
        %v382 = vsel %vm379, %v376, %v378
        %v386 = vcombine.high %v364, %v364
        %387 = vrot.lane.b32.xlu0 %v362, 126
        %v388 = vpop.permute.xlu0 %387
        %389 = vrot.lane.b32.xlu0 %v366, 126
        %v390 = vpop.permute.xlu0 %389
        %391 = vrot.lane.b32.xlu0 %v364, 126
        %v392 = vpop.permute.xlu0 %391
        %393 = vrot.lane.b32.xlu0 %v386, 126
        %v394 = vpop.permute.xlu0 %393
        %vm395 = vcmask 1031168
        %v396 = vsel %vm395, %v388, %v390
        %v397 = vsel %vm395, %v390, %v392
        %v398 = vsel %vm395, %v392, %v394
        %402 = vrot.lane.b32.xlu0 %v369, 125
        %v403 = vpop.permute.xlu0 %402
        %404 = vrot.lane.b32.xlu0 %v362, 125
        %v405 = vpop.permute.xlu0 %404
        %406 = vrot.lane.b32.xlu0 %v370, 125
        %v407 = vpop.permute.xlu0 %406
        %408 = vrot.lane.b32.xlu0 %v364, 125
        %v409 = vpop.permute.xlu0 %408
        %vm410 = vcmask 1022976
        %v411 = vsel %vm410, %v403, %v405
        %v412 = vsel %vm410, %v405, %v407
        %v413 = vsel %vm410, %v407, %v409
        %vm417 = vcmask 1043456
        %v418 = vsel %vm417, %v362, %v380
        %v419 = vsel %vm417, %v366, %v381
        %v420 = vsel %vm417, %v363, %v382
        %v421 = vsel %vm417, %v396, %v411
        %v422 = vsel %vm417, %v397, %v412
        %v423 = vsel %vm417, %v398, %v413
        %v424 = vpack.c.bf16 %v421, %v418
        %v425 = vpack.c.bf16 %v422, %v419
        %v426 = vpack.c.bf16 %v423, %v420
        %v430 = vunpack.c.l.b16 %v424
        %v431 = vunpack.c.l.b16 %v425
        %v432 = vunpack.c.l.b16 %v426
        %v433 = vunpack.c.h.b16 %v424
        %v434 = vunpack.c.h.b16 %v425
        %v435 = vunpack.c.h.b16 %v426
        %v436 = vpack.c.b16 %v431, %v430
        %v437 = vpack.c.b16 %v432, %v432
        %v438 = vpack.c.b16 %v434, %v433
        %v439 = vpack.c.b16 %v435, %v435
        %444 = vst [vmem:[#allocation2] sm:$0xff] %v436
        %445 = vst [vmem:[#allocation2 + $0x8] sm:$0xf] %v437
        %446 = vst [vmem:[#allocation2 + $0xc] sm:$0xff] %v438
        %447 = vst [vmem:[#allocation2 + $0x14] sm:$0xf] %v439
        %v448 = vld [vmem:[%s360] sm:$0xff]
        %v449 = vld [vmem:[%s360 + $0x8] sm:$0xff]
        %v452 = vcombine.high %v448, %v448
        %v453 = vcombine.high %v449, %v449
        %v456 = vcombine.low %v448, %v448
        %v457 = vcombine.low %v449, %v449
        %458 = vrot.lane.b32.xlu0 %v456, 127
        %v459 = vpop.permute.xlu0 %458
        %460 = vrot.lane.b32.xlu0 %v448, 127
        %v461 = vpop.permute.xlu0 %460
        %462 = vrot.lane.b32.xlu0 %v457, 127
        %v463 = vpop.permute.xlu0 %462
        %464 = vrot.lane.b32.xlu0 %v449, 127
        %v465 = vpop.permute.xlu0 %464
        %v466 = vsel %vm379, %v459, %v461
        %v467 = vsel %vm379, %v461, %v463
        %v468 = vsel %vm379, %v463, %v465
        %473 = vrot.lane.b32.xlu0 %v448, 126
        %v474 = vpop.permute.xlu0 %473
        %475 = vrot.lane.b32.xlu0 %v452, 126
        %v476 = vpop.permute.xlu0 %475
        %477 = vrot.lane.b32.xlu0 %v449, 126
        %v478 = vpop.permute.xlu0 %477
        %479 = vrot.lane.b32.xlu0 %v453, 126
        %v480 = vpop.permute.xlu0 %479
        %v481 = vsel %vm395, %v474, %v476
        %v482 = vsel %vm395, %v476, %v478
        %v483 = vsel %vm395, %v478, %v480
        %488 = vrot.lane.b32.xlu0 %v456, 108
        %v489 = vpop.permute.xlu0 %488
        %490 = vrot.lane.b32.xlu0 %v448, 108
        %v491 = vpop.permute.xlu0 %490
        %492 = vrot.lane.b32.xlu0 %v457, 108
        %v493 = vpop.permute.xlu0 %492
        %494 = vrot.lane.b32.xlu0 %v449, 108
        %v495 = vpop.permute.xlu0 %494
        %vm496 = vcmask 883712
        %v497 = vsel %vm496, %v489, %v491
        %v498 = vsel %vm496, %v491, %v493
        %v499 = vsel %vm496, %v493, %v495
        %v504 = vsel %vm417, %v448, %v466
        %v505 = vsel %vm417, %v452, %v467
        %v506 = vsel %vm417, %v449, %v468
        %v507 = vsel %vm417, %v453, %v465
        %v508 = vsel %vm417, %v481, %v497
        %v509 = vsel %vm417, %v482, %v498
        %v510 = vsel %vm417, %v483, %v499
        %v511 = vsel %vm417, %v480, %v495
        %v512 = vpack.c.bf16 %v508, %v504
        %v513 = vpack.c.bf16 %v509, %v505
        %v514 = vpack.c.bf16 %v510, %v506
        %v515 = vpack.c.bf16 %v511, %v507
        %v520 = vunpack.c.l.b16 %v512
        %v521 = vunpack.c.l.b16 %v513
        %v522 = vunpack.c.l.b16 %v514
        %v523 = vunpack.c.l.b16 %v515
        %v524 = vunpack.c.h.b16 %v512
        %v525 = vunpack.c.h.b16 %v513
        %v526 = vunpack.c.h.b16 %v514
        %v527 = vunpack.c.h.b16 %v515
        %v528 = vpack.c.b16 %v521, %v520
        %v529 = vpack.c.b16 %v523, %v522
        %v530 = vpack.c.b16 %v525, %v524
        %v531 = vpack.c.b16 %v527, %v526
        %532 = vrot.lane.b32.xlu0 %v528, 124
        %v533 = vpop.permute.xlu0 %532
        %534 = vrot.lane.b32.xlu0 %v529, 124
        %v535 = vpop.permute.xlu0 %534
        %536 = vrot.lane.b32.xlu0 %v530, 124
        %v537 = vpop.permute.xlu0 %536
        %538 = vrot.lane.b32.xlu0 %v531, 124
        %v539 = vpop.permute.xlu0 %538
        %v540 = vrot.slane %v533, 4
        %v541 = vrot.slane %v535, 4
        %v542 = vrot.slane %v537, 4
        %v543 = vrot.slane %v539, 4
        %vm544 = vcmask 1043456
        %v545 = vsel %vm544, %v540, %v541
        %vm546 = vcmask 1014784
        %v547 = vsel %vm546, %v533, %v545
        %v548 = vsel %vm546, %v535, %v541
        %v549 = vsel %vm544, %v542, %v543
        %v550 = vsel %vm546, %v537, %v549
        %v551 = vsel %vm546, %v539, %v543
        %556 = vst [vmem:[#allocation2 + $0x18] sm:$0xff] %v547
        %557 = vst [vmem:[#allocation2 + $0x20] sm:$0xf] %v548
        %558 = vst [vmem:[#allocation2 + $0x24] sm:$0xff] %v550
        %559 = vst [vmem:[#allocation2 + $0x2c] sm:$0xf] %v551
        %v560 = vld [vmem:[%s360] sm:$0xff]
        %v561 = vld [vmem:[%s360 + $0x8] sm:$0xff]
        %v564 = vcombine.high %v560, %v560
        %v565 = vcombine.high %v561, %v561
        %v568 = vcombine.low %v560, %v560
        %v569 = vcombine.low %v561, %v561
        %570 = vrot.lane.b32.xlu0 %v568, 127
        %v571 = vpop.permute.xlu0 %570
        %572 = vrot.lane.b32.xlu0 %v560, 127
        %v573 = vpop.permute.xlu0 %572
        %574 = vrot.lane.b32.xlu0 %v569, 127
        %v575 = vpop.permute.xlu0 %574
        %576 = vrot.lane.b32.xlu0 %v561, 127
        %v577 = vpop.permute.xlu0 %576
        %v578 = vsel %vm379, %v571, %v573
        %v579 = vsel %vm379, %v573, %v575
        %v580 = vsel %vm379, %v575, %v577
        %585 = vrot.lane.b32.xlu0 %v560, 126
        %v586 = vpop.permute.xlu0 %585
        %587 = vrot.lane.b32.xlu0 %v564, 126
        %v588 = vpop.permute.xlu0 %587
        %589 = vrot.lane.b32.xlu0 %v561, 126
        %v590 = vpop.permute.xlu0 %589
        %591 = vrot.lane.b32.xlu0 %v565, 126
        %v592 = vpop.permute.xlu0 %591
        %v593 = vsel %vm395, %v586, %v588
        %v594 = vsel %vm395, %v588, %v590
        %v595 = vsel %vm395, %v590, %v592
        %600 = vrot.lane.b32.xlu0 %v568, 125
        %v601 = vpop.permute.xlu0 %600
        %602 = vrot.lane.b32.xlu0 %v560, 125
        %v603 = vpop.permute.xlu0 %602
        %604 = vrot.lane.b32.xlu0 %v569, 125
        %v605 = vpop.permute.xlu0 %604
        %606 = vrot.lane.b32.xlu0 %v561, 125
        %v607 = vpop.permute.xlu0 %606
        %v608 = vsel %vm410, %v601, %v603
        %v609 = vsel %vm410, %v603, %v605
        %v610 = vsel %vm410, %v605, %v607
        %v615 = vsel %vm417, %v560, %v578
        %v616 = vsel %vm417, %v564, %v579
        %v617 = vsel %vm417, %v561, %v580
        %v618 = vsel %vm417, %v565, %v577
        %v619 = vsel %vm417, %v593, %v608
        %v620 = vsel %vm417, %v594, %v609
        %v621 = vsel %vm417, %v595, %v610
        %v622 = vsel %vm417, %v592, %v607
        %v623 = vpack.c.bf16 %v619, %v615
        %v624 = vpack.c.bf16 %v620, %v616
        %v625 = vpack.c.bf16 %v621, %v617
        %v626 = vpack.c.bf16 %v622, %v618
        %v631 = vunpack.c.l.b16 %v623
        %v632 = vunpack.c.l.b16 %v624
        %v633 = vunpack.c.l.b16 %v625
        %v634 = vunpack.c.l.b16 %v626
        %v635 = vunpack.c.h.b16 %v623
        %v636 = vunpack.c.h.b16 %v624
        %v637 = vunpack.c.h.b16 %v625
        %v638 = vunpack.c.h.b16 %v626
        %v639 = vpack.c.b16 %v632, %v631
        %v640 = vpack.c.b16 %v634, %v633
        %v641 = vpack.c.b16 %v636, %v635
        %v642 = vpack.c.b16 %v638, %v637
        %643 = vrot.lane.b32.xlu0 %v639, 103
        %v644 = vpop.permute.xlu0 %643
        %645 = vrot.lane.b32.xlu0 %v640, 103
        %v646 = vpop.permute.xlu0 %645
        %647 = vrot.lane.b32.xlu0 %v641, 103
        %v648 = vpop.permute.xlu0 %647
        %649 = vrot.lane.b32.xlu0 %v642, 103
        %v650 = vpop.permute.xlu0 %649
        %v651 = vrot.slane %v644, 4
        %v652 = vrot.slane %v646, 4
        %v653 = vrot.slane %v648, 4
        %v654 = vrot.slane %v650, 4
        %v655 = vsel %vm544, %v651, %v652
        %vm656 = vcmask 842752
        %v657 = vsel %vm656, %v644, %v655
        %v658 = vsel %vm656, %v646, %v652
        %v659 = vsel %vm544, %v653, %v654
        %v660 = vsel %vm656, %v648, %v659
        %v661 = vsel %vm656, %v650, %v654
        %666 = vst [vmem:[#allocation2 + $0x30] sm:$0xff] %v657
        %667 = vst [vmem:[#allocation2 + $0x38] sm:$0xf] %v658
        %668 = vst [vmem:[#allocation2 + $0x3c] sm:$0xff] %v660
        %669 = vst [vmem:[#allocation2 + $0x44] sm:$0xf] %v661
        %v670 = vld [vmem:[%s360] sm:$0xff]
        %v671 = vld [vmem:[%s360 + $0x8] sm:$0xff]
        %v674 = vcombine.high %v670, %v670
        %v675 = vcombine.high %v671, %v671
        %v678 = vcombine.low %v670, %v670
        %v679 = vcombine.low %v671, %v671
        %680 = vrot.lane.b32.xlu0 %v678, 127
        %v681 = vpop.permute.xlu0 %680
        %682 = vrot.lane.b32.xlu0 %v670, 127
        %v683 = vpop.permute.xlu0 %682
        %684 = vrot.lane.b32.xlu0 %v679, 127
        %v685 = vpop.permute.xlu0 %684
        %686 = vrot.lane.b32.xlu0 %v671, 127
        %v687 = vpop.permute.xlu0 %686
        %v688 = vsel %vm379, %v681, %v683
        %v689 = vsel %vm379, %v683, %v685
        %v690 = vsel %vm379, %v685, %v687
        %695 = vrot.lane.b32.xlu0 %v670, 109
        %v696 = vpop.permute.xlu0 %695
        %697 = vrot.lane.b32.xlu0 %v674, 109
        %v698 = vpop.permute.xlu0 %697
        %699 = vrot.lane.b32.xlu0 %v671, 109
        %v700 = vpop.permute.xlu0 %699
        %701 = vrot.lane.b32.xlu0 %v675, 109
        %v702 = vpop.permute.xlu0 %701
        %vm703 = vcmask 891904
        %v704 = vsel %vm703, %v696, %v698
        %v705 = vsel %vm703, %v698, %v700
        %v706 = vsel %vm703, %v700, %v702
        %711 = vrot.lane.b32.xlu0 %v678, 108
        %v712 = vpop.permute.xlu0 %711
        %713 = vrot.lane.b32.xlu0 %v670, 108
        %v714 = vpop.permute.xlu0 %713
        %715 = vrot.lane.b32.xlu0 %v679, 108
        %v716 = vpop.permute.xlu0 %715
        %717 = vrot.lane.b32.xlu0 %v671, 108
        %v718 = vpop.permute.xlu0 %717
        %v719 = vsel %vm496, %v712, %v714
        %v720 = vsel %vm496, %v714, %v716
        %v721 = vsel %vm496, %v716, %v718
        %v726 = vsel %vm417, %v670, %v688
        %v727 = vsel %vm417, %v674, %v689
        %v728 = vsel %vm417, %v671, %v690
        %v729 = vsel %vm417, %v675, %v687
        %v730 = vsel %vm417, %v704, %v719
        %v731 = vsel %vm417, %v705, %v720
        %v732 = vsel %vm417, %v706, %v721
        %v733 = vsel %vm417, %v702, %v718
        %v734 = vpack.c.bf16 %v730, %v726
        %v735 = vpack.c.bf16 %v731, %v727
        %v736 = vpack.c.bf16 %v732, %v728
        %v737 = vpack.c.bf16 %v733, %v729
        %v742 = vunpack.c.l.b16 %v734
        %v743 = vunpack.c.l.b16 %v735
        %v744 = vunpack.c.l.b16 %v736
        %v745 = vunpack.c.l.b16 %v737
        %v746 = vunpack.c.h.b16 %v734
        %v747 = vunpack.c.h.b16 %v735
        %v748 = vunpack.c.h.b16 %v736
        %v749 = vunpack.c.h.b16 %v737
        %v750 = vpack.c.b16 %v743, %v742
        %v751 = vpack.c.b16 %v745, %v744
        %v752 = vpack.c.b16 %v747, %v746
        %v753 = vpack.c.b16 %v749, %v748
        %754 = vrot.lane.b32.xlu0 %v750, 99
        %v755 = vpop.permute.xlu0 %754
        %756 = vrot.lane.b32.xlu0 %v751, 99
        %v757 = vpop.permute.xlu0 %756
        %758 = vrot.lane.b32.xlu0 %v752, 99
        %v759 = vpop.permute.xlu0 %758
        %760 = vrot.lane.b32.xlu0 %v753, 99
        %v761 = vpop.permute.xlu0 %760
        %v762 = vrot.slane %v755, 4
        %v763 = vrot.slane %v757, 4
        %v764 = vrot.slane %v759, 4
        %v765 = vrot.slane %v761, 4
        %v766 = vsel %vm544, %v762, %v763
        %vm767 = vcmask 809984
        %v768 = vsel %vm767, %v755, %v766
        %v769 = vsel %vm767, %v757, %v763
        %v770 = vsel %vm544, %v764, %v765
        %v771 = vsel %vm767, %v759, %v770
        %v772 = vsel %vm767, %v761, %v765
        %777 = vst [vmem:[#allocation2 + $0x48] sm:$0xff] %v768
        %778 = vst [vmem:[#allocation2 + $0x50] sm:$0xf] %v769
        %779 = vst [vmem:[#allocation2 + $0x54] sm:$0xff] %v771
        %780 = vst [vmem:[#allocation2 + $0x5c] sm:$0xf] %v772
        %v781 = vld [vmem:[%s360] sm:$0xff]
        %v782 = vld [vmem:[%s360 + $0x8] sm:$0xff]
        %v785 = vcombine.high %v781, %v781
        %v786 = vcombine.high %v782, %v782
        %v789 = vcombine.low %v781, %v781
        %v790 = vcombine.low %v782, %v782
        %791 = vrot.lane.b32.xlu0 %v789, 127
        %v792 = vpop.permute.xlu0 %791
        %793 = vrot.lane.b32.xlu0 %v781, 127
        %v794 = vpop.permute.xlu0 %793
        %795 = vrot.lane.b32.xlu0 %v790, 127
        %v796 = vpop.permute.xlu0 %795
        %797 = vrot.lane.b32.xlu0 %v782, 127
        %v798 = vpop.permute.xlu0 %797
        %v799 = vsel %vm379, %v792, %v794
        %v800 = vsel %vm379, %v794, %v796
        %v801 = vsel %vm379, %v796, %v798
        %806 = vrot.lane.b32.xlu0 %v781, 126
        %v807 = vpop.permute.xlu0 %806
        %808 = vrot.lane.b32.xlu0 %v785, 126
        %v809 = vpop.permute.xlu0 %808
        %810 = vrot.lane.b32.xlu0 %v782, 126
        %v811 = vpop.permute.xlu0 %810
        %812 = vrot.lane.b32.xlu0 %v786, 126
        %v813 = vpop.permute.xlu0 %812
        %v814 = vsel %vm395, %v807, %v809
        %v815 = vsel %vm395, %v809, %v811
        %v816 = vsel %vm395, %v811, %v813
        %821 = vrot.lane.b32.xlu0 %v789, 125
        %v822 = vpop.permute.xlu0 %821
        %823 = vrot.lane.b32.xlu0 %v781, 125
        %v824 = vpop.permute.xlu0 %823
        %825 = vrot.lane.b32.xlu0 %v790, 125
        %v826 = vpop.permute.xlu0 %825
        %827 = vrot.lane.b32.xlu0 %v782, 125
        %v828 = vpop.permute.xlu0 %827
        %v829 = vsel %vm410, %v822, %v824
        %v830 = vsel %vm410, %v824, %v826
        %v831 = vsel %vm410, %v826, %v828
        %v836 = vsel %vm417, %v781, %v799
        %v837 = vsel %vm417, %v785, %v800
        %v838 = vsel %vm417, %v782, %v801
        %v839 = vsel %vm417, %v786, %v798
        %v840 = vsel %vm417, %v814, %v829
        %v841 = vsel %vm417, %v815, %v830
        %v842 = vsel %vm417, %v816, %v831
        %v843 = vsel %vm417, %v813, %v828
        %v844 = vpack.c.bf16 %v840, %v836
        %v845 = vpack.c.bf16 %v841, %v837
        %v846 = vpack.c.bf16 %v842, %v838
        %v847 = vpack.c.bf16 %v843, %v839
        %v852 = vunpack.c.l.b16 %v844
        %v853 = vunpack.c.l.b16 %v845
        %v854 = vunpack.c.l.b16 %v846
        %v855 = vunpack.c.l.b16 %v847
        %v856 = vunpack.c.h.b16 %v844
        %v857 = vunpack.c.h.b16 %v845
        %v858 = vunpack.c.h.b16 %v846
        %v859 = vunpack.c.h.b16 %v847
        %v860 = vpack.c.b16 %v853, %v852
        %v861 = vpack.c.b16 %v855, %v854
        %v862 = vpack.c.b16 %v857, %v856
        %v863 = vpack.c.b16 %v859, %v858
        %864 = vrot.lane.b32.xlu0 %v860, 78
        %v865 = vpop.permute.xlu0 %864
        %866 = vrot.lane.b32.xlu0 %v861, 78
        %v867 = vpop.permute.xlu0 %866
        %868 = vrot.lane.b32.xlu0 %v862, 78
        %v869 = vpop.permute.xlu0 %868
        %870 = vrot.lane.b32.xlu0 %v863, 78
        %v871 = vpop.permute.xlu0 %870
        %v872 = vrot.slane %v865, 4
        %v873 = vrot.slane %v867, 4
        %v874 = vrot.slane %v869, 4
        %v875 = vrot.slane %v871, 4
        %v876 = vsel %vm544, %v872, %v873
        %vm877 = vcmask 637952
        %v878 = vsel %vm877, %v865, %v876
        %v879 = vsel %vm877, %v867, %v873
        %v880 = vsel %vm544, %v874, %v875
        %v881 = vsel %vm877, %v869, %v880
        %v882 = vsel %vm877, %v871, %v875
        %887 = vst [vmem:[#allocation2 + $0x60] sm:$0xff] %v878
        %888 = vst [vmem:[#allocation2 + $0x68] sm:$0xf] %v879
        %889 = vst [vmem:[#allocation2 + $0x6c] sm:$0xff] %v881
        %890 = vst [vmem:[#allocation2 + $0x74] sm:$0xf] %v882
        %v891 = vld [vmem:[%s360] sm:$0xff]
        %v892 = vld [vmem:[%s360 + $0x8] sm:$0xff]
        %v895 = vcombine.high %v891, %v891
        %v896 = vcombine.high %v892, %v892
        %v899 = vcombine.low %v891, %v891
        %v900 = vcombine.low %v892, %v892
        %901 = vrot.lane.b32.xlu0 %v899, 110
        %v902 = vpop.permute.xlu0 %901
        %903 = vrot.lane.b32.xlu0 %v891, 110
        %v904 = vpop.permute.xlu0 %903
        %905 = vrot.lane.b32.xlu0 %v900, 110
        %v906 = vpop.permute.xlu0 %905
        %907 = vrot.lane.b32.xlu0 %v892, 110
        %v908 = vpop.permute.xlu0 %907
        %vm909 = vcmask 900096
        %v910 = vsel %vm909, %v902, %v904
        %v911 = vsel %vm909, %v904, %v906
        %v912 = vsel %vm909, %v906, %v908
        %917 = vrot.lane.b32.xlu0 %v891, 109
        %v918 = vpop.permute.xlu0 %917
        %919 = vrot.lane.b32.xlu0 %v895, 109
        %v920 = vpop.permute.xlu0 %919
        %921 = vrot.lane.b32.xlu0 %v892, 109
        %v922 = vpop.permute.xlu0 %921
        %923 = vrot.lane.b32.xlu0 %v896, 109
        %v924 = vpop.permute.xlu0 %923
        %v925 = vsel %vm703, %v918, %v920
        %v926 = vsel %vm703, %v920, %v922
        %v927 = vsel %vm703, %v922, %v924
        %932 = vrot.lane.b32.xlu0 %v899, 108
        %v933 = vpop.permute.xlu0 %932
        %934 = vrot.lane.b32.xlu0 %v891, 108
        %v935 = vpop.permute.xlu0 %934
        %936 = vrot.lane.b32.xlu0 %v900, 108
        %v937 = vpop.permute.xlu0 %936
        %938 = vrot.lane.b32.xlu0 %v892, 108
        %v939 = vpop.permute.xlu0 %938
        %v940 = vsel %vm496, %v933, %v935
        %v941 = vsel %vm496, %v935, %v937
        %v942 = vsel %vm496, %v937, %v939
        %v947 = vsel %vm417, %v891, %v910
        %v948 = vsel %vm417, %v895, %v911
        %v949 = vsel %vm417, %v892, %v912
        %v950 = vsel %vm417, %v896, %v908
        %v951 = vsel %vm417, %v925, %v940
        %v952 = vsel %vm417, %v926, %v941
        %v953 = vsel %vm417, %v927, %v942
        %v954 = vsel %vm417, %v924, %v939
        %v955 = vpack.c.bf16 %v951, %v947
        %v956 = vpack.c.bf16 %v952, %v948
        %v957 = vpack.c.bf16 %v953, %v949
        %v958 = vpack.c.bf16 %v954, %v950
        %v963 = vunpack.c.l.b16 %v955
        %v964 = vunpack.c.l.b16 %v956
        %v965 = vunpack.c.l.b16 %v957
        %v966 = vunpack.c.l.b16 %v958
        %v967 = vunpack.c.h.b16 %v955
        %v968 = vunpack.c.h.b16 %v956
        %v969 = vunpack.c.h.b16 %v957
        %v970 = vunpack.c.h.b16 %v958
        %v971 = vpack.c.b16 %v964, %v963
        %v972 = vpack.c.b16 %v966, %v965
        %v973 = vpack.c.b16 %v968, %v967
        %v974 = vpack.c.b16 %v970, %v969
        %975 = vrot.lane.b32.xlu0 %v971, 74
        %v976 = vpop.permute.xlu0 %975
        %977 = vrot.lane.b32.xlu0 %v972, 74
        %v978 = vpop.permute.xlu0 %977
        %979 = vrot.lane.b32.xlu0 %v973, 74
        %v980 = vpop.permute.xlu0 %979
        %981 = vrot.lane.b32.xlu0 %v974, 74
        %v982 = vpop.permute.xlu0 %981
        %v983 = vrot.slane %v976, 4
        %v984 = vrot.slane %v978, 4
        %v985 = vrot.slane %v980, 4
        %v986 = vrot.slane %v982, 4
        %v987 = vsel %vm544, %v983, %v984
        %vm988 = vcmask 605184
        %v989 = vsel %vm988, %v976, %v987
        %v990 = vsel %vm988, %v978, %v984
        %v991 = vsel %vm544, %v985, %v986
        %v992 = vsel %vm988, %v980, %v991
        %v993 = vsel %vm988, %v982, %v986
        %998 = vst [vmem:[#allocation2 + $0x78] sm:$0xff] %v989
        %999 = vst [vmem:[#allocation2 + $0x80] sm:$0xf] %v990
        %1000 = vst [vmem:[#allocation2 + $0x84] sm:$0xff] %v992
        %1001 = vst [vmem:[#allocation2 + $0x8c] sm:$0xf] %v993
        %v1002 = vld [vmem:[%s360] sm:$0xff]
        %v1003 = vld [vmem:[%s360 + $0x8] sm:$0xff]
        %v1006 = vcombine.high %v1002, %v1002
        %v1007 = vcombine.high %v1003, %v1003
        %v1010 = vcombine.low %v1002, %v1002
        %v1011 = vcombine.low %v1003, %v1003
        %1012 = vrot.lane.b32.xlu0 %v1010, 127
        %v1013 = vpop.permute.xlu0 %1012
        %1014 = vrot.lane.b32.xlu0 %v1002, 127
        %v1015 = vpop.permute.xlu0 %1014
        %1016 = vrot.lane.b32.xlu0 %v1011, 127
        %v1017 = vpop.permute.xlu0 %1016
        %1018 = vrot.lane.b32.xlu0 %v1003, 127
        %v1019 = vpop.permute.xlu0 %1018
        %v1020 = vsel %vm379, %v1013, %v1015
        %v1021 = vsel %vm379, %v1015, %v1017
        %v1022 = vsel %vm379, %v1017, %v1019
        %1027 = vrot.lane.b32.xlu0 %v1002, 126
        %v1028 = vpop.permute.xlu0 %1027
        %1029 = vrot.lane.b32.xlu0 %v1006, 126
        %v1030 = vpop.permute.xlu0 %1029
        %1031 = vrot.lane.b32.xlu0 %v1003, 126
        %v1032 = vpop.permute.xlu0 %1031
        %1033 = vrot.lane.b32.xlu0 %v1007, 126
        %v1034 = vpop.permute.xlu0 %1033
        %v1035 = vsel %vm395, %v1028, %v1030
        %v1036 = vsel %vm395, %v1030, %v1032
        %v1037 = vsel %vm395, %v1032, %v1034
        %1042 = vrot.lane.b32.xlu0 %v1010, 125
        %v1043 = vpop.permute.xlu0 %1042
        %1044 = vrot.lane.b32.xlu0 %v1002, 125
        %v1045 = vpop.permute.xlu0 %1044
        %1046 = vrot.lane.b32.xlu0 %v1011, 125
        %v1047 = vpop.permute.xlu0 %1046
        %1048 = vrot.lane.b32.xlu0 %v1003, 125
        %v1049 = vpop.permute.xlu0 %1048
        %v1050 = vsel %vm410, %v1043, %v1045
        %v1051 = vsel %vm410, %v1045, %v1047
        %v1052 = vsel %vm410, %v1047, %v1049
        %v1057 = vsel %vm417, %v1002, %v1020
        %v1058 = vsel %vm417, %v1006, %v1021
        %v1059 = vsel %vm417, %v1003, %v1022
        %v1060 = vsel %vm417, %v1007, %v1019
        %v1061 = vsel %vm417, %v1035, %v1050
        %v1062 = vsel %vm417, %v1036, %v1051
        %v1063 = vsel %vm417, %v1037, %v1052
        %v1064 = vsel %vm417, %v1034, %v1049
        %v1065 = vpack.c.bf16 %v1061, %v1057
        %v1066 = vpack.c.bf16 %v1062, %v1058
        %v1067 = vpack.c.bf16 %v1063, %v1059
        %v1068 = vpack.c.bf16 %v1064, %v1060
        %v1073 = vunpack.c.l.b16 %v1065
        %v1074 = vunpack.c.l.b16 %v1066
        %v1075 = vunpack.c.l.b16 %v1067
        %v1076 = vunpack.c.l.b16 %v1068
        %v1077 = vunpack.c.h.b16 %v1065
        %v1078 = vunpack.c.h.b16 %v1066
        %v1079 = vunpack.c.h.b16 %v1067
        %v1080 = vunpack.c.h.b16 %v1068
        %v1081 = vpack.c.b16 %v1074, %v1073
        %v1082 = vpack.c.b16 %v1076, %v1075
        %v1083 = vpack.c.b16 %v1078, %v1077
        %v1084 = vpack.c.b16 %v1080, %v1079
        %1085 = vrot.lane.b32.xlu0 %v1081, 53
        %v1086 = vpop.permute.xlu0 %1085
        %1087 = vrot.lane.b32.xlu0 %v1082, 53
        %v1088 = vpop.permute.xlu0 %1087
        %1089 = vrot.lane.b32.xlu0 %v1083, 53
        %v1090 = vpop.permute.xlu0 %1089
        %1091 = vrot.lane.b32.xlu0 %v1084, 53
        %v1092 = vpop.permute.xlu0 %1091
        %v1093 = vrot.slane %v1086, 4
        %v1094 = vrot.slane %v1088, 4
        %v1095 = vrot.slane %v1090, 4
        %v1096 = vrot.slane %v1092, 4
        %v1097 = vsel %vm544, %v1093, %v1094
        %vm1098 = vcmask 433152
        %v1099 = vsel %vm1098, %v1086, %v1097
        %v1100 = vsel %vm1098, %v1088, %v1094
        %v1101 = vsel %vm544, %v1095, %v1096
        %v1102 = vsel %vm1098, %v1090, %v1101
        %v1103 = vsel %vm1098, %v1092, %v1096
        %1108 = vst [vmem:[#allocation2 + $0x90] sm:$0xff] %v1099
        %1109 = vst [vmem:[#allocation2 + $0x98] sm:$0xf] %v1100
        %1110 = vst [vmem:[#allocation2 + $0x9c] sm:$0xff] %v1102
        %1111 = vst [vmem:[#allocation2 + $0xa4] sm:$0xf] %v1103
        %v1112 = vld [vmem:[%s360] sm:$0xff]
        %v1113 = vld [vmem:[%s360 + $0x8] sm:$0xff]
        %v1116 = vcombine.high %v1112, %v1112
        %v1117 = vcombine.high %v1113, %v1113
        %v1120 = vcombine.low %v1112, %v1112
        %v1121 = vcombine.low %v1113, %v1113
        %1122 = vrot.lane.b32.xlu0 %v1120, 127
        %v1123 = vpop.permute.xlu0 %1122
        %1124 = vrot.lane.b32.xlu0 %v1112, 127
        %v1125 = vpop.permute.xlu0 %1124
        %1126 = vrot.lane.b32.xlu0 %v1121, 127
        %v1127 = vpop.permute.xlu0 %1126
        %1128 = vrot.lane.b32.xlu0 %v1113, 127
        %v1129 = vpop.permute.xlu0 %1128
        %v1130 = vsel %vm379, %v1123, %v1125
        %v1131 = vsel %vm379, %v1125, %v1127
        %v1132 = vsel %vm379, %v1127, %v1129
        %1137 = vrot.lane.b32.xlu0 %v1112, 126
        %v1138 = vpop.permute.xlu0 %1137
        %1139 = vrot.lane.b32.xlu0 %v1116, 126
        %v1140 = vpop.permute.xlu0 %1139
        %1141 = vrot.lane.b32.xlu0 %v1113, 126
        %v1142 = vpop.permute.xlu0 %1141
        %1143 = vrot.lane.b32.xlu0 %v1117, 126
        %v1144 = vpop.permute.xlu0 %1143
        %v1145 = vsel %vm395, %v1138, %v1140
        %v1146 = vsel %vm395, %v1140, %v1142
        %v1147 = vsel %vm395, %v1142, %v1144
        %1152 = vrot.lane.b32.xlu0 %v1120, 125
        %v1153 = vpop.permute.xlu0 %1152
        %1154 = vrot.lane.b32.xlu0 %v1112, 125
        %v1155 = vpop.permute.xlu0 %1154
        %1156 = vrot.lane.b32.xlu0 %v1121, 125
        %v1157 = vpop.permute.xlu0 %1156
        %1158 = vrot.lane.b32.xlu0 %v1113, 125
        %v1159 = vpop.permute.xlu0 %1158
        %v1160 = vsel %vm410, %v1153, %v1155
        %v1161 = vsel %vm410, %v1155, %v1157
        %v1162 = vsel %vm410, %v1157, %v1159
        %v1167 = vsel %vm417, %v1112, %v1130
        %v1168 = vsel %vm417, %v1116, %v1131
        %v1169 = vsel %vm417, %v1113, %v1132
        %v1170 = vsel %vm417, %v1117, %v1129
        %v1171 = vsel %vm417, %v1145, %v1160
        %v1172 = vsel %vm417, %v1146, %v1161
        %v1173 = vsel %vm417, %v1147, %v1162
        %v1174 = vsel %vm417, %v1144, %v1159
        %v1175 = vpack.c.bf16 %v1171, %v1167
        %v1176 = vpack.c.bf16 %v1172, %v1168
        %v1177 = vpack.c.bf16 %v1173, %v1169
        %v1178 = vpack.c.bf16 %v1174, %v1170
        %v1183 = vunpack.c.l.b16 %v1175
        %v1184 = vunpack.c.l.b16 %v1176
        %v1185 = vunpack.c.l.b16 %v1177
        %v1186 = vunpack.c.l.b16 %v1178
        %v1187 = vunpack.c.h.b16 %v1175
        %v1188 = vunpack.c.h.b16 %v1176
        %v1189 = vunpack.c.h.b16 %v1177
        %v1190 = vunpack.c.h.b16 %v1178
        %v1191 = vpack.c.b16 %v1184, %v1183
        %v1192 = vpack.c.b16 %v1186, %v1185
        %v1193 = vpack.c.b16 %v1188, %v1187
        %v1194 = vpack.c.b16 %v1190, %v1189
        %1195 = vrot.lane.b32.xlu0 %v1191, 32
        %v1196 = vpop.permute.xlu0 %1195
        %1197 = vrot.lane.b32.xlu0 %v1192, 32
        %v1198 = vpop.permute.xlu0 %1197
        %1199 = vrot.lane.b32.xlu0 %v1193, 32
        %v1200 = vpop.permute.xlu0 %1199
        %1201 = vrot.lane.b32.xlu0 %v1194, 32
        %v1202 = vpop.permute.xlu0 %1201
        %v1203 = vrot.slane %v1196, 4
        %v1204 = vrot.slane %v1198, 4
        %v1205 = vrot.slane %v1200, 4
        %v1206 = vrot.slane %v1202, 4
        %v1207 = vsel %vm544, %v1203, %v1204
        %vm1208 = vcmask 261120
        %v1209 = vsel %vm1208, %v1196, %v1207
        %v1210 = vsel %vm1208, %v1198, %v1204
        %v1211 = vsel %vm544, %v1205, %v1206
        %v1212 = vsel %vm1208, %v1200, %v1211
        %v1213 = vsel %vm1208, %v1202, %v1206
        %1218 = vst [vmem:[#allocation2 + $0xa8] sm:$0xff] %v1209
        %1219 = vst [vmem:[#allocation2 + $0xb0] sm:$0xf] %v1210
        %1220 = vst [vmem:[#allocation2 + $0xb4] sm:$0xff] %v1212
        %1221 = vst [vmem:[#allocation2 + $0xbc] sm:$0xf] %v1213
        %v1222 = vld [vmem:[%s360] sm:$0xff]
        %v1223 = vld [vmem:[%s360 + $0x8] sm:$0xff]
        %v1226 = vcombine.high %v1222, %v1222
        %v1227 = vcombine.high %v1223, %v1223
        %v1230 = vcombine.low %v1222, %v1222
        %v1231 = vcombine.low %v1223, %v1223
        %1232 = vrot.lane.b32.xlu0 %v1230, 127
        %v1233 = vpop.permute.xlu0 %1232
        %1234 = vrot.lane.b32.xlu0 %v1222, 127
        %v1235 = vpop.permute.xlu0 %1234
        %1236 = vrot.lane.b32.xlu0 %v1231, 127
        %v1237 = vpop.permute.xlu0 %1236
        %1238 = vrot.lane.b32.xlu0 %v1223, 127
        %v1239 = vpop.permute.xlu0 %1238
        %v1240 = vsel %vm379, %v1233, %v1235
        %v1241 = vsel %vm379, %v1235, %v1237
        %v1242 = vsel %vm379, %v1237, %v1239
        %1247 = vrot.lane.b32.xlu0 %v1222, 126
        %v1248 = vpop.permute.xlu0 %1247
        %1249 = vrot.lane.b32.xlu0 %v1226, 126
        %v1250 = vpop.permute.xlu0 %1249
        %1251 = vrot.lane.b32.xlu0 %v1223, 126
        %v1252 = vpop.permute.xlu0 %1251
        %1253 = vrot.lane.b32.xlu0 %v1227, 126
        %v1254 = vpop.permute.xlu0 %1253
        %v1255 = vsel %vm395, %v1248, %v1250
        %v1256 = vsel %vm395, %v1250, %v1252
        %v1257 = vsel %vm395, %v1252, %v1254
        %1262 = vrot.lane.b32.xlu0 %v1230, 108
        %v1263 = vpop.permute.xlu0 %1262
        %1264 = vrot.lane.b32.xlu0 %v1222, 108
        %v1265 = vpop.permute.xlu0 %1264
        %1266 = vrot.lane.b32.xlu0 %v1231, 108
        %v1267 = vpop.permute.xlu0 %1266
        %1268 = vrot.lane.b32.xlu0 %v1223, 108
        %v1269 = vpop.permute.xlu0 %1268
        %v1270 = vsel %vm496, %v1263, %v1265
        %v1271 = vsel %vm496, %v1265, %v1267
        %v1272 = vsel %vm496, %v1267, %v1269
        %v1277 = vsel %vm417, %v1222, %v1240
        %v1278 = vsel %vm417, %v1226, %v1241
        %v1279 = vsel %vm417, %v1223, %v1242
        %v1280 = vsel %vm417, %v1227, %v1239
        %v1281 = vsel %vm417, %v1255, %v1270
        %v1282 = vsel %vm417, %v1256, %v1271
        %v1283 = vsel %vm417, %v1257, %v1272
        %v1284 = vsel %vm417, %v1254, %v1269
        %v1285 = vpack.c.bf16 %v1281, %v1277
        %v1286 = vpack.c.bf16 %v1282, %v1278
        %v1287 = vpack.c.bf16 %v1283, %v1279
        %v1288 = vpack.c.bf16 %v1284, %v1280
        %v1293 = vunpack.c.l.b16 %v1285
        %v1294 = vunpack.c.l.b16 %v1286
        %v1295 = vunpack.c.l.b16 %v1287
        %v1296 = vunpack.c.l.b16 %v1288
        %v1297 = vunpack.c.h.b16 %v1285
        %v1298 = vunpack.c.h.b16 %v1286
        %v1299 = vunpack.c.h.b16 %v1287
        %v1300 = vunpack.c.h.b16 %v1288
        %v1301 = vpack.c.b16 %v1294, %v1293
        %v1302 = vpack.c.b16 %v1296, %v1295
        %v1303 = vpack.c.b16 %v1298, %v1297
        %v1304 = vpack.c.b16 %v1300, %v1299
        %1305 = vrot.lane.b32.xlu0 %v1301, 28
        %v1306 = vpop.permute.xlu0 %1305
        %1307 = vrot.lane.b32.xlu0 %v1302, 28
        %v1308 = vpop.permute.xlu0 %1307
        %1309 = vrot.lane.b32.xlu0 %v1303, 28
        %v1310 = vpop.permute.xlu0 %1309
        %1311 = vrot.lane.b32.xlu0 %v1304, 28
        %v1312 = vpop.permute.xlu0 %1311
        %v1313 = vrot.slane %v1306, 4
        %v1314 = vrot.slane %v1308, 4
        %v1315 = vrot.slane %v1310, 4
        %v1316 = vrot.slane %v1312, 4
        %v1317 = vsel %vm544, %v1313, %v1314
        %vm1318 = vcmask 228352
        %v1319 = vsel %vm1318, %v1306, %v1317
        %v1320 = vsel %vm1318, %v1308, %v1314
        %v1321 = vsel %vm544, %v1315, %v1316
        %v1322 = vsel %vm1318, %v1310, %v1321
        %v1323 = vsel %vm1318, %v1312, %v1316
        %1328 = vst [vmem:[#allocation2 + $0xc0] sm:$0xff] %v1319
        %1329 = vst [vmem:[#allocation2 + $0xc8] sm:$0xf] %v1320
        %1330 = vst [vmem:[#allocation2 + $0xcc] sm:$0xff] %v1322
        %1331 = vst [vmem:[#allocation2 + $0xd4] sm:$0xf] %v1323
        %v1332 = vld [vmem:[%s360] sm:$0xff]
        %v1333 = vld [vmem:[%s360 + $0x8] sm:$0xff]
        %v1336 = vcombine.high %v1332, %v1332
        %v1337 = vcombine.high %v1333, %v1333
        %v1340 = vcombine.low %v1332, %v1332
        %v1341 = vcombine.low %v1333, %v1333
        %1342 = vrot.lane.b32.xlu0 %v1340, 127
        %v1343 = vpop.permute.xlu0 %1342
        %1344 = vrot.lane.b32.xlu0 %v1332, 127
        %v1345 = vpop.permute.xlu0 %1344
        %1346 = vrot.lane.b32.xlu0 %v1341, 127
        %v1347 = vpop.permute.xlu0 %1346
        %1348 = vrot.lane.b32.xlu0 %v1333, 127
        %v1349 = vpop.permute.xlu0 %1348
        %v1350 = vsel %vm379, %v1343, %v1345
        %v1351 = vsel %vm379, %v1345, %v1347
        %v1352 = vsel %vm379, %v1347, %v1349
        %1357 = vrot.lane.b32.xlu0 %v1332, 126
        %v1358 = vpop.permute.xlu0 %1357
        %1359 = vrot.lane.b32.xlu0 %v1336, 126
        %v1360 = vpop.permute.xlu0 %1359
        %1361 = vrot.lane.b32.xlu0 %v1333, 126
        %v1362 = vpop.permute.xlu0 %1361
        %1363 = vrot.lane.b32.xlu0 %v1337, 126
        %v1364 = vpop.permute.xlu0 %1363
        %v1365 = vsel %vm395, %v1358, %v1360
        %v1366 = vsel %vm395, %v1360, %v1362
        %v1367 = vsel %vm395, %v1362, %v1364
        %1372 = vrot.lane.b32.xlu0 %v1340, 125
        %v1373 = vpop.permute.xlu0 %1372
        %1374 = vrot.lane.b32.xlu0 %v1332, 125
        %v1375 = vpop.permute.xlu0 %1374
        %1376 = vrot.lane.b32.xlu0 %v1341, 125
        %v1377 = vpop.permute.xlu0 %1376
        %1378 = vrot.lane.b32.xlu0 %v1333, 125
        %v1379 = vpop.permute.xlu0 %1378
        %v1380 = vsel %vm410, %v1373, %v1375
        %v1381 = vsel %vm410, %v1375, %v1377
        %v1382 = vsel %vm410, %v1377, %v1379
        %v1387 = vsel %vm417, %v1332, %v1350
        %v1388 = vsel %vm417, %v1336, %v1351
        %v1389 = vsel %vm417, %v1333, %v1352
        %v1390 = vsel %vm417, %v1337, %v1349
        %v1391 = vsel %vm417, %v1365, %v1380
        %v1392 = vsel %vm417, %v1366, %v1381
        %v1393 = vsel %vm417, %v1367, %v1382
        %v1394 = vsel %vm417, %v1364, %v1379
        %v1395 = vpack.c.bf16 %v1391, %v1387
        %v1396 = vpack.c.bf16 %v1392, %v1388
        %v1397 = vpack.c.bf16 %v1393, %v1389
        %v1398 = vpack.c.bf16 %v1394, %v1390
        %v1403 = vunpack.c.l.b16 %v1395
        %v1404 = vunpack.c.l.b16 %v1396
        %v1405 = vunpack.c.l.b16 %v1397
        %v1406 = vunpack.c.l.b16 %v1398
        %v1407 = vunpack.c.h.b16 %v1395
        %v1408 = vunpack.c.h.b16 %v1396
        %v1409 = vunpack.c.h.b16 %v1397
        %v1410 = vunpack.c.h.b16 %v1398
        %v1411 = vpack.c.b16 %v1404, %v1403
        %v1412 = vpack.c.b16 %v1406, %v1405
        %v1413 = vpack.c.b16 %v1408, %v1407
        %v1414 = vpack.c.b16 %v1410, %v1409
        %1415 = vrot.lane.b32.xlu0 %v1411, 7
        %v1416 = vpop.permute.xlu0 %1415
        %1417 = vrot.lane.b32.xlu0 %v1412, 7
        %v1418 = vpop.permute.xlu0 %1417
        %1419 = vrot.lane.b32.xlu0 %v1413, 7
        %v1420 = vpop.permute.xlu0 %1419
        %1421 = vrot.lane.b32.xlu0 %v1414, 7
        %v1422 = vpop.permute.xlu0 %1421
        %v1423 = vrot.slane %v1416, 4
        %v1424 = vrot.slane %v1418, 4
        %v1425 = vrot.slane %v1420, 4
        %v1426 = vrot.slane %v1422, 4
        %v1427 = vsel %vm544, %v1423, %v1424
        %vm1428 = vcmask 56320
        %v1429 = vsel %vm1428, %v1416, %v1427
        %v1430 = vsel %vm1428, %v1418, %v1424
        %v1431 = vsel %vm544, %v1425, %v1426
        %v1432 = vsel %vm1428, %v1420, %v1431
        %v1433 = vsel %vm1428, %v1422, %v1426
        %1438 = vst [vmem:[#allocation2 + $0xd8] sm:$0xff] %v1429
        %1439 = vst [vmem:[#allocation2 + $0xe0] sm:$0xf] %v1430
        %1440 = vst [vmem:[#allocation2 + $0xe4] sm:$0xff] %v1432
        %1441 = vst [vmem:[#allocation2 + $0xec] sm:$0xf] %v1433
        %v1442 = vld [vmem:[%s360] sm:$0xff]
        %v1443 = vld [vmem:[%s360 + $0x8] sm:$0xff]
        %v1444 = vld [vmem:[%s360 + $0x4] sm:$0xff]
        %v1445 = vld [vmem:[%s360 + $0xc] sm:$0xff]
        %v1448 = vcombine.high %v1442, %v1442
        %v1449 = vcombine.high %v1443, %v1443
        %v1452 = vcombine.low %v1442, %v1442
        %v1453 = vcombine.low %v1443, %v1443
        %1454 = vrot.lane.b32.xlu0 %v1452, 127
        %v1455 = vpop.permute.xlu0 %1454
        %1456 = vrot.lane.b32.xlu0 %v1442, 127
        %v1457 = vpop.permute.xlu0 %1456
        %1458 = vrot.lane.b32.xlu0 %v1453, 127
        %v1459 = vpop.permute.xlu0 %1458
        %1460 = vrot.lane.b32.xlu0 %v1443, 127
        %v1461 = vpop.permute.xlu0 %1460
        %v1462 = vsel %vm379, %v1455, %v1457
        %v1463 = vsel %vm379, %v1457, %v1459
        %v1464 = vsel %vm379, %v1459, %v1461
        %v1471 = vcombine.high %v1444, %v1444
        %v1472 = vcombine.high %v1445, %v1445
        %1473 = vrot.lane.b32.xlu0 %v1444, 109
        %v1474 = vpop.permute.xlu0 %1473
        %1475 = vrot.lane.b32.xlu0 %v1471, 109
        %v1476 = vpop.permute.xlu0 %1475
        %1477 = vrot.lane.b32.xlu0 %v1445, 109
        %v1478 = vpop.permute.xlu0 %1477
        %1479 = vrot.lane.b32.xlu0 %v1472, 109
        %v1480 = vpop.permute.xlu0 %1479
        %v1481 = vsel %vm703, %v1474, %v1476
        %v1482 = vsel %vm703, %v1476, %v1478
        %v1483 = vsel %vm703, %v1478, %v1480
        %v1488 = vcombine.low %v1444, %v1444
        %v1489 = vcombine.low %v1445, %v1445
        %1490 = vrot.lane.b32.xlu0 %v1488, 108
        %v1491 = vpop.permute.xlu0 %1490
        %1492 = vrot.lane.b32.xlu0 %v1444, 108
        %v1493 = vpop.permute.xlu0 %1492
        %1494 = vrot.lane.b32.xlu0 %v1489, 108
        %v1495 = vpop.permute.xlu0 %1494
        %1496 = vrot.lane.b32.xlu0 %v1445, 108
        %v1497 = vpop.permute.xlu0 %1496
        %v1498 = vsel %vm496, %v1491, %v1493
        %v1499 = vsel %vm496, %v1493, %v1495
        %v1500 = vsel %vm496, %v1495, %v1497
        %v1505 = vsel %vm417, %v1442, %v1462
        %v1506 = vsel %vm417, %v1448, %v1463
        %v1507 = vsel %vm417, %v1443, %v1464
        %v1508 = vsel %vm417, %v1449, %v1461
        %v1509 = vsel %vm417, %v1474, %v1491
        %v1510 = vsel %vm417, %v1481, %v1498
        %v1511 = vsel %vm417, %v1482, %v1499
        %v1512 = vsel %vm417, %v1483, %v1500
        %v1513 = vpack.c.bf16 %v1509, %v1505
        %v1514 = vpack.c.bf16 %v1510, %v1506
        %v1515 = vpack.c.bf16 %v1511, %v1507
        %v1516 = vpack.c.bf16 %v1512, %v1508
        %v1521 = vunpack.c.l.b16 %v1513
        %v1522 = vunpack.c.l.b16 %v1514
        %v1523 = vunpack.c.l.b16 %v1515
        %v1524 = vunpack.c.l.b16 %v1516
        %v1525 = vunpack.c.h.b16 %v1513
        %v1526 = vunpack.c.h.b16 %v1514
        %v1527 = vunpack.c.h.b16 %v1515
        %v1528 = vunpack.c.h.b16 %v1516
        %v1529 = vpack.c.b16 %v1522, %v1521
        %v1530 = vpack.c.b16 %v1524, %v1523
        %v1531 = vpack.c.b16 %v1526, %v1525
        %v1532 = vpack.c.b16 %v1528, %v1527
        %1533 = vrot.lane.b32.xlu0 %v1529, 3
        %v1534 = vpop.permute.xlu0 %1533
        %1535 = vrot.lane.b32.xlu0 %v1530, 3
        %v1536 = vpop.permute.xlu0 %1535
        %1537 = vrot.lane.b32.xlu0 %v1531, 3
        %v1538 = vpop.permute.xlu0 %1537
        %1539 = vrot.lane.b32.xlu0 %v1532, 3
        %v1540 = vpop.permute.xlu0 %1539
        %v1541 = vrot.slane %v1534, 4
        %v1542 = vrot.slane %v1536, 4
        %v1543 = vrot.slane %v1538, 4
        %v1544 = vrot.slane %v1540, 4
        %v1545 = vsel %vm544, %v1541, %v1542
        %vm1546 = vcmask 23552
        %v1547 = vsel %vm1546, %v1534, %v1545
        %v1548 = vsel %vm1546, %v1536, %v1542
        %v1549 = vsel %vm544, %v1543, %v1544
        %v1550 = vsel %vm1546, %v1538, %v1549
        %v1551 = vsel %vm1546, %v1540, %v1544
        %1556 = vst [vmem:[#allocation2 + $0xf0] sm:$0xff] %v1547
        %1557 = vst [vmem:[#allocation2 + $0xf8] sm:$0xf] %v1548
        %1558 = vst [vmem:[#allocation2 + $0xfc] sm:$0xff] %v1550
        %1559 = vst [vmem:[#allocation2 + $0x104] sm:$0xf] %v1551
        %v1560 = vld [vmem:[%s360 + $0x4] sm:$0xff]
        %v1561 = vld [vmem:[%s360 + $0xc] sm:$0xff]
        %v1564 = vcombine.high %v1560, %v1560
        %v1565 = vcombine.high %v1561, %v1561
        %v1568 = vcombine.low %v1560, %v1560
        %v1569 = vcombine.low %v1561, %v1561
        %1570 = vrot.lane.b32.xlu0 %v1568, 127
        %v1571 = vpop.permute.xlu0 %1570
        %1572 = vrot.lane.b32.xlu0 %v1560, 127
        %v1573 = vpop.permute.xlu0 %1572
        %1574 = vrot.lane.b32.xlu0 %v1569, 127
        %v1575 = vpop.permute.xlu0 %1574
        %1576 = vrot.lane.b32.xlu0 %v1561, 127
        %v1577 = vpop.permute.xlu0 %1576
        %v1578 = vsel %vm379, %v1571, %v1573
        %v1579 = vsel %vm379, %v1573, %v1575
        %v1580 = vsel %vm379, %v1575, %v1577
        %1585 = vrot.lane.b32.xlu0 %v1560, 126
        %v1586 = vpop.permute.xlu0 %1585
        %1587 = vrot.lane.b32.xlu0 %v1564, 126
        %v1588 = vpop.permute.xlu0 %1587
        %1589 = vrot.lane.b32.xlu0 %v1561, 126
        %v1590 = vpop.permute.xlu0 %1589
        %1591 = vrot.lane.b32.xlu0 %v1565, 126
        %v1592 = vpop.permute.xlu0 %1591
        %v1593 = vsel %vm395, %v1586, %v1588
        %v1594 = vsel %vm395, %v1588, %v1590
        %v1595 = vsel %vm395, %v1590, %v1592
        %1600 = vrot.lane.b32.xlu0 %v1568, 125
        %v1601 = vpop.permute.xlu0 %1600
        %1602 = vrot.lane.b32.xlu0 %v1560, 125
        %v1603 = vpop.permute.xlu0 %1602
        %1604 = vrot.lane.b32.xlu0 %v1569, 125
        %v1605 = vpop.permute.xlu0 %1604
        %1606 = vrot.lane.b32.xlu0 %v1561, 125
        %v1607 = vpop.permute.xlu0 %1606
        %v1608 = vsel %vm410, %v1601, %v1603
        %v1609 = vsel %vm410, %v1603, %v1605
        %v1610 = vsel %vm410, %v1605, %v1607
        %v1615 = vsel %vm417, %v1560, %v1578
        %v1616 = vsel %vm417, %v1564, %v1579
        %v1617 = vsel %vm417, %v1561, %v1580
        %v1618 = vsel %vm417, %v1565, %v1577
        %v1619 = vsel %vm417, %v1593, %v1608
        %v1620 = vsel %vm417, %v1594, %v1609
        %v1621 = vsel %vm417, %v1595, %v1610
        %v1622 = vsel %vm417, %v1592, %v1607
        %v1623 = vpack.c.bf16 %v1619, %v1615
        %v1624 = vpack.c.bf16 %v1620, %v1616
        %v1625 = vpack.c.bf16 %v1621, %v1617
        %v1626 = vpack.c.bf16 %v1622, %v1618
        %v1631 = vunpack.c.l.b16 %v1623
        %v1632 = vunpack.c.l.b16 %v1624
        %v1633 = vunpack.c.l.b16 %v1625
        %v1634 = vunpack.c.l.b16 %v1626
        %v1635 = vunpack.c.h.b16 %v1623
        %v1636 = vunpack.c.h.b16 %v1624
        %v1637 = vunpack.c.h.b16 %v1625
        %v1638 = vunpack.c.h.b16 %v1626
        %v1639 = vpack.c.b16 %v1632, %v1631
        %v1640 = vpack.c.b16 %v1634, %v1633
        %v1641 = vpack.c.b16 %v1636, %v1635
        %v1642 = vpack.c.b16 %v1638, %v1637
        %1643 = vrot.lane.b32.xlu0 %v1639, 110
        %v1644 = vpop.permute.xlu0 %1643
        %1645 = vrot.lane.b32.xlu0 %v1640, 110
        %v1646 = vpop.permute.xlu0 %1645
        %1647 = vrot.lane.b32.xlu0 %v1641, 110
        %v1648 = vpop.permute.xlu0 %1647
        %1649 = vrot.lane.b32.xlu0 %v1642, 110
        %v1650 = vpop.permute.xlu0 %1649
        %v1651 = vrot.slane %v1644, 4
        %v1652 = vrot.slane %v1646, 4
        %v1653 = vrot.slane %v1648, 4
        %v1654 = vrot.slane %v1650, 4
        %v1655 = vsel %vm544, %v1651, %v1652
        %vm1656 = vcmask 900096
        %v1657 = vsel %vm1656, %v1644, %v1655
        %v1658 = vsel %vm1656, %v1646, %v1652
        %v1659 = vsel %vm544, %v1653, %v1654
        %v1660 = vsel %vm1656, %v1648, %v1659
        %v1661 = vsel %vm1656, %v1650, %v1654
        %1666 = vst [vmem:[#allocation2 + $0x108] sm:$0xff] %v1657
        %1667 = vst [vmem:[#allocation2 + $0x110] sm:$0xf] %v1658
        %1668 = vst [vmem:[#allocation2 + $0x114] sm:$0xff] %v1660
        %1669 = vst [vmem:[#allocation2 + $0x11c] sm:$0xf] %v1661
        %v1670 = vld [vmem:[%s360 + $0x4] sm:$0xff]
        %v1671 = vld [vmem:[%s360 + $0xc] sm:$0xff]
        %v1674 = vcombine.high %v1670, %v1670
        %v1675 = vcombine.high %v1671, %v1671
        %v1678 = vpack.c.bf16 %v1670, %v1670
        %v1679 = vpack.c.bf16 %v1674, %v1674
        %v1680 = vpack.c.bf16 %v1671, %v1671
        %v1681 = vpack.c.bf16 %v1675, %v1675
        %v1686 = vunpack.c.l.b16 %v1678
        %v1687 = vunpack.c.l.b16 %v1679
        %v1688 = vunpack.c.l.b16 %v1680
        %v1689 = vunpack.c.l.b16 %v1681
        %v1690 = vpack.c.b16 %v1687, %v1686
        %v1691 = vpack.c.b16 %v1689, %v1688
        %1692 = vrot.lane.b32.xlu0 %v1690, 106
        %v1693 = vpop.permute.xlu0 %1692
        %1694 = vrot.lane.b32.xlu0 %v1691, 106
        %v1695 = vpop.permute.xlu0 %1694
        %v1696 = vrot.slane %v1693, 4
        %v1697 = vrot.slane %v1695, 4
        %v1698 = vsel %vm544, %v1696, %v1697
        %vm1699 = vcmask 867328
        %v1700 = vsel %vm1699, %v1693, %v1698
        %v1701 = vsel %vm1699, %v1695, %v1697
        %1704 = vst [vmem:[#allocation2 + $0x120] sm:$0x33] %v1700
        %1705 = vst [vmem:[#allocation2 + $0x128] sm:$0x3] %v1701
        %v1706 = vld [vmem:[#allocation5] sm:$0xff]
        %v1707 = vld [vmem:[#allocation5 + $0x8] sm:$0xff]
        %v1708 = vld [vmem:[#allocation5 + $0x10] sm:$0xff]
        %v1709 = vld [vmem:[#allocation5 + $0x18] sm:$0xff]
        %v1710 = vld [vmem:[#allocation2] sm:$0xff]
        %v1711 = vld [vmem:[#allocation2 + $0x8] sm:$0xf]
        %v1712 = vld [vmem:[#allocation2 + $0xc] sm:$0xff]
        %v1713 = vld [vmem:[#allocation2 + $0x14] sm:$0xf]
        %v1714 = vld [vmem:[#allocation2 + $0x18] sm:$0xff]
        %v1715 = vld [vmem:[#allocation2 + $0x20] sm:$0xf]
        %v1716 = vld [vmem:[#allocation2 + $0x24] sm:$0xff]
        %v1717 = vld [vmem:[#allocation2 + $0x2c] sm:$0xf]
        %v1718 = vld [vmem:[#allocation2 + $0x30] sm:$0xff]
        %v1719 = vld [vmem:[#allocation2 + $0x38] sm:$0xf]
        %v1720 = vld [vmem:[#allocation2 + $0x3c] sm:$0xff]
        %v1721 = vld [vmem:[#allocation2 + $0x44] sm:$0xf]
        %v1722 = vld [vmem:[#allocation2 + $0x48] sm:$0xff]
        %v1723 = vld [vmem:[#allocation2 + $0x50] sm:$0xf]
        %v1724 = vld [vmem:[#allocation2 + $0x54] sm:$0xff]
        %v1725 = vld [vmem:[#allocation2 + $0x5c] sm:$0xf]
        %v1726 = vld [vmem:[#allocation2 + $0x60] sm:$0xff]
        %v1727 = vld [vmem:[#allocation2 + $0x68] sm:$0xf]
        %v1728 = vld [vmem:[#allocation2 + $0x6c] sm:$0xff]
        %v1729 = vld [vmem:[#allocation2 + $0x74] sm:$0xf]
        %v1730 = vld [vmem:[#allocation2 + $0x78] sm:$0xff]
        %v1731 = vld [vmem:[#allocation2 + $0x80] sm:$0xf]
        %v1732 = vld [vmem:[#allocation2 + $0x84] sm:$0xff]
        %v1733 = vld [vmem:[#allocation2 + $0x8c] sm:$0xf]
        %v1734 = vld [vmem:[#allocation2 + $0x90] sm:$0xff]
        %v1735 = vld [vmem:[#allocation2 + $0x98] sm:$0xf]
        %v1736 = vld [vmem:[#allocation2 + $0x9c] sm:$0xff]
        %v1737 = vld [vmem:[#allocation2 + $0xa4] sm:$0xf]
        %v1738 = vld [vmem:[#allocation2 + $0xa8] sm:$0xff]
        %v1739 = vld [vmem:[#allocation2 + $0xb0] sm:$0xf]
        %v1740 = vld [vmem:[#allocation2 + $0xb4] sm:$0xff]
        %v1741 = vld [vmem:[#allocation2 + $0xbc] sm:$0xf]
        %v1742 = vld [vmem:[#allocation2 + $0xc0] sm:$0xff]
        %v1743 = vld [vmem:[#allocation2 + $0xc8] sm:$0xf]
        %v1744 = vld [vmem:[#allocation2 + $0xcc] sm:$0xff]
        %v1745 = vld [vmem:[#allocation2 + $0xd4] sm:$0xf]
        %v1746 = vld [vmem:[#allocation2 + $0xd8] sm:$0xff]
        %v1747 = vld [vmem:[#allocation2 + $0xe0] sm:$0xf]
        %v1748 = vld [vmem:[#allocation2 + $0xe4] sm:$0xff]
        %v1749 = vld [vmem:[#allocation2 + $0xec] sm:$0xf]
        %v1750 = vld [vmem:[#allocation2 + $0xf0] sm:$0xff]
        %v1751 = vld [vmem:[#allocation2 + $0xf8] sm:$0xf]
        %v1752 = vld [vmem:[#allocation2 + $0xfc] sm:$0xff]
        %v1753 = vld [vmem:[#allocation2 + $0x104] sm:$0xf]
        %v1754 = vld [vmem:[#allocation2 + $0x108] sm:$0xff]
        %v1755 = vld [vmem:[#allocation2 + $0x110] sm:$0xf]
        %v1756 = vld [vmem:[#allocation2 + $0x114] sm:$0xff]
        %v1757 = vld [vmem:[#allocation2 + $0x11c] sm:$0xf]
        %v1758 = vld [vmem:[#allocation2 + $0x120] sm:$0x33]
        %v1759 = vld [vmem:[#allocation2 + $0x128] sm:$0x3]
        %v1760 = vld [vmem:[%s2] sm:$0xff]
        %v1761 = vld [vmem:[%s2 + $0x8] sm:$0xff]
        %v1762 = vld [vmem:[%s2 + $0x10] sm:$0xff]
        %v1763 = vld [vmem:[%s2 + $0x18] sm:$0xff]
        %1765 = vset.pattern.permute.xlu0 0
        %1766 = vperm.xlu0 %1765, %v1760
        %v1767 = vpop.permute.xlu0 %1766
        %1770 = vset.pattern.permute.xlu0 0
        %1771 = vperm.xlu0 %1770, %v1761
        %v1772 = vpop.permute.xlu0 %1771
        %1775 = vset.pattern.permute.xlu0 0
        %1776 = vperm.xlu0 %1775, %v1762
        %v1777 = vpop.permute.xlu0 %1776
        %1780 = vset.pattern.permute.xlu0 0
        %1781 = vperm.xlu0 %1780, %v1763
        %v1782 = vpop.permute.xlu0 %1781
        %v1788 = vunpack.c.l.b16 %v1706
        %v1789 = vunpack.c.h.b16 %v1706
        %v1790 = vunpack.c.l.b16 %v1707
        %v1791 = vunpack.c.h.b16 %v1707
        %v1792 = vunpack.c.l.b16 %v1708
        %v1793 = vunpack.c.h.b16 %v1708
        %v1794 = vunpack.c.l.b16 %v1709
        %v1795 = vunpack.c.h.b16 %v1709
        %v1796 = vpack.c.b16 %v1790, %v1788
        %v1797 = vpack.c.b16 %v1791, %v1789
        %v1798 = vpack.c.b16 %v1794, %v1792
        %v1799 = vpack.c.b16 %v1795, %v1793
        %v1852 = vunpack.c.l.b16 %v1710
        %v1853 = vunpack.c.h.b16 %v1710
        %v1854 = vunpack.c.l.b16 %v1711
        %v1855 = vunpack.c.l.b16 %v1712
        %v1856 = vunpack.c.h.b16 %v1712
        %v1857 = vunpack.c.l.b16 %v1713
        %v1858 = vunpack.c.l.b16 %v1714
        %v1859 = vunpack.c.h.b16 %v1714
        %v1860 = vunpack.c.l.b16 %v1715
        %v1861 = vunpack.c.l.b16 %v1716
        %v1862 = vunpack.c.h.b16 %v1716
        %v1863 = vunpack.c.l.b16 %v1717
        %v1864 = vunpack.c.l.b16 %v1718
        %v1865 = vunpack.c.h.b16 %v1718
        %v1866 = vunpack.c.l.b16 %v1719
        %v1867 = vunpack.c.l.b16 %v1720
        %v1868 = vunpack.c.h.b16 %v1720
        %v1869 = vunpack.c.l.b16 %v1721
        %v1870 = vunpack.c.l.b16 %v1722
        %v1871 = vunpack.c.h.b16 %v1722
        %v1872 = vunpack.c.l.b16 %v1723
        %v1873 = vunpack.c.l.b16 %v1724
        %v1874 = vunpack.c.h.b16 %v1724
        %v1875 = vunpack.c.l.b16 %v1725
        %v1876 = vunpack.c.l.b16 %v1726
        %v1877 = vunpack.c.h.b16 %v1726
        %v1878 = vunpack.c.l.b16 %v1727
        %v1879 = vunpack.c.l.b16 %v1728
        %v1880 = vunpack.c.h.b16 %v1728
        %v1881 = vunpack.c.l.b16 %v1729
        %v1882 = vunpack.c.l.b16 %v1730
        %v1883 = vunpack.c.h.b16 %v1730
        %v1884 = vunpack.c.l.b16 %v1731
        %v1885 = vunpack.c.l.b16 %v1732
        %v1886 = vunpack.c.h.b16 %v1732
        %v1887 = vunpack.c.l.b16 %v1733
        %v1888 = vunpack.c.l.b16 %v1734
        %v1889 = vunpack.c.h.b16 %v1734
        %v1890 = vunpack.c.l.b16 %v1735
        %v1891 = vunpack.c.l.b16 %v1736
        %v1892 = vunpack.c.h.b16 %v1736
        %v1893 = vunpack.c.l.b16 %v1737
        %v1894 = vunpack.c.l.b16 %v1738
        %v1895 = vunpack.c.h.b16 %v1738
        %v1896 = vunpack.c.l.b16 %v1739
        %v1897 = vunpack.c.l.b16 %v1740
        %v1898 = vunpack.c.h.b16 %v1740
        %v1899 = vunpack.c.l.b16 %v1741
        %v1900 = vunpack.c.l.b16 %v1742
        %v1901 = vunpack.c.h.b16 %v1742
        %v1902 = vunpack.c.l.b16 %v1743
        %v1903 = vunpack.c.l.b16 %v1744
        %v1904 = vunpack.c.h.b16 %v1744
        %v1905 = vunpack.c.l.b16 %v1745
        %v1906 = vunpack.c.l.b16 %v1746
        %v1907 = vunpack.c.h.b16 %v1746
        %v1908 = vunpack.c.l.b16 %v1747
        %v1909 = vunpack.c.l.b16 %v1748
        %v1910 = vunpack.c.h.b16 %v1748
        %v1911 = vunpack.c.l.b16 %v1749
        %v1912 = vunpack.c.l.b16 %v1750
        %v1913 = vunpack.c.h.b16 %v1750
        %v1914 = vunpack.c.l.b16 %v1751
        %v1915 = vunpack.c.l.b16 %v1752
        %v1916 = vunpack.c.h.b16 %v1752
        %v1917 = vunpack.c.l.b16 %v1753
        %v1918 = vunpack.c.l.b16 %v1754
        %v1919 = vunpack.c.h.b16 %v1754
        %v1920 = vunpack.c.l.b16 %v1755
        %v1921 = vunpack.c.l.b16 %v1756
        %v1922 = vunpack.c.h.b16 %v1756
        %v1923 = vunpack.c.l.b16 %v1757
        %v1924 = vunpack.c.l.b16 %v1758
        %v1925 = vunpack.c.h.b16 %v1758
        %v1926 = vunpack.c.l.b16 %v1759
        %v1927 = vpack.c.b16 %v1855, %v1852
        %v1928 = vpack.c.b16 %v1856, %v1853
        %v1929 = vpack.c.b16 %v1857, %v1854
        %v1930 = vpack.c.b16 %v1861, %v1858
        %v1931 = vpack.c.b16 %v1862, %v1859
        %v1932 = vpack.c.b16 %v1863, %v1860
        %v1933 = vpack.c.b16 %v1867, %v1864
        %v1934 = vpack.c.b16 %v1868, %v1865
        %v1935 = vpack.c.b16 %v1869, %v1866
        %v1936 = vpack.c.b16 %v1873, %v1870
        %v1937 = vpack.c.b16 %v1874, %v1871
        %v1938 = vpack.c.b16 %v1875, %v1872
        %v1939 = vpack.c.b16 %v1879, %v1876
        %v1940 = vpack.c.b16 %v1880, %v1877
        %v1941 = vpack.c.b16 %v1881, %v1878
        %v1942 = vpack.c.b16 %v1885, %v1882
        %v1943 = vpack.c.b16 %v1886, %v1883
        %v1944 = vpack.c.b16 %v1887, %v1884
        %v1945 = vpack.c.b16 %v1891, %v1888
        %v1946 = vpack.c.b16 %v1892, %v1889
        %v1947 = vpack.c.b16 %v1893, %v1890
        %v1948 = vpack.c.b16 %v1897, %v1894
        %v1949 = vpack.c.b16 %v1898, %v1895
        %v1950 = vpack.c.b16 %v1899, %v1896
        %v1951 = vpack.c.b16 %v1903, %v1900
        %v1952 = vpack.c.b16 %v1904, %v1901
        %v1953 = vpack.c.b16 %v1905, %v1902
        %v1954 = vpack.c.b16 %v1909, %v1906
        %v1955 = vpack.c.b16 %v1910, %v1907
        %v1956 = vpack.c.b16 %v1911, %v1908
        %v1957 = vpack.c.b16 %v1915, %v1912
        %v1958 = vpack.c.b16 %v1916, %v1913
        %v1959 = vpack.c.b16 %v1917, %v1914
        %v1960 = vpack.c.b16 %v1921, %v1918
        %v1961 = vpack.c.b16 %v1922, %v1919
        %v1962 = vpack.c.b16 %v1923, %v1920
        %v1963 = vpack.c.b16 %v1924, %v1924
        %v1964 = vpack.c.b16 %v1925, %v1925
        %v1965 = vpack.c.b16 %v1926, %v1926
        %vm2002 = vcmask 556032
        %v2004 = vsel %vm2002, %v1797, 0
        %v2007 = vsel %vm2002, %v1799, 0
        %vm2009 = vcmask 1041408
        %v2011 = vsel %vm2009, %v1963, 0
        %v2014 = vsel %vm2009, %v1964, 0
        %v2017 = vsel %vm2009, %v1965, 0
        %2019 = vmatprep.subr.bf16.mxu0 %v1928
        %2020 = vmatpush1.bf16.msra.mxu0 %v1927
        %2021 = vmatprep.subr.bf16.mxu0 %v1931
        %2022 = vmatpush1.bf16.msra.mxu0 %v1930
        %2023 = vmatprep.subr.bf16.mxu0 %v1934
        %2024 = vmatpush1.bf16.msra.mxu0 %v1933
        %2025 = vmatprep.subr.bf16.mxu0 %v1937
        %2026 = vmatpush1.bf16.msra.mxu0 %v1936
        %2027 = vmatprep.subr.bf16.mxu0 %v1940
        %2028 = vmatpush1.bf16.msra.mxu0 %v1939
        %2029 = vmatprep.subr.bf16.mxu0 %v1943
        %2030 = vmatpush1.bf16.msra.mxu0 %v1942
        %2031 = vmatprep.subr.bf16.mxu0 %v1946
        %2032 = vmatpush1.bf16.msra.mxu0 %v1945
        %2033 = vmatprep.subr.bf16.mxu0 %v1949
        %2034 = vmatpush1.bf16.msra.mxu0 %v1948
        %2035 = vmatprep.subr.bf16.mxu0 %v1952
        %2036 = vmatpush1.bf16.msra.mxu0 %v1951
        %2037 = vmatprep.subr.bf16.mxu0 %v1955
        %2038 = vmatpush1.bf16.msra.mxu0 %v1954
        %2039 = vmatprep.subr.bf16.mxu0 %v1958
        %2040 = vmatpush1.bf16.msra.mxu0 %v1957
        %2041 = vmatprep.subr.bf16.mxu0 %v1961
        %2042 = vmatpush1.bf16.msra.mxu0 %v1960
        %2043 = vmatprep.subr.bf16.mxu0 %v2014
        %2044 = vmatpush1.bf16.msra.mxu0 %v2011
        %2045 = vmatprep.subr.bf16.mxu0 0
        %2046 = vmatpush1.bf16.msra.mxu0 0
        %2047 = vmatprep.subr.bf16.mxu0 0
        %2048 = vmatpush1.bf16.msra.mxu0 0
        %2049 = vmatprep.subr.bf16.mxu0 0
        %2050 = vmatpush1.bf16.msra.mxu0 0
        %2051 = vmatprep.mubr.bf16.mxu0 %v2004
        %2052 = vmatmul.mubr.bf16.gmra.mrb[0].mxu0 %v1796
        %v2053 = vpop.f32.mrb[0].mxu0
        %v2054 = vadd.f32 %v1767, %v2053
        %v2055 = vpop.f32.mrb[0].mxu0
        %v2056 = vadd.f32 %v1767, %v2055
        %v2057 = vpop.f32.mrb[0].mxu0
        %v2058 = vadd.f32 %v1772, %v2057
        %v2059 = vpop.f32.mrb[0].mxu0
        %v2060 = vadd.f32 %v1772, %v2059
        %2061 = vmatprep.mubr.bf16.mxu0 %v2007
        %2062 = vmatmul.mubr.bf16.gmra.mrb[0].mxu0 %v1798
        %v2063 = vpop.f32.mrb[0].mxu0
        %v2064 = vadd.f32 %v1777, %v2063
        %v2065 = vpop.f32.mrb[0].mxu0
        %v2066 = vadd.f32 %v1777, %v2065
        %v2067 = vpop.f32.mrb[0].mxu0
        %v2068 = vadd.f32 %v1782, %v2067
        %v2069 = vpop.f32.mrb[0].mxu0
        %v2070 = vadd.f32 %v1782, %v2069
        %2071 = vdwg.mxu0
        %2072 = vmatprep.subr.bf16.mxu0 0
        %2073 = vmatpush1.bf16.msra.mxu0 %v1929
        %2074 = vmatprep.subr.bf16.mxu0 0
        %2075 = vmatpush1.bf16.msra.mxu0 %v1932
        %2076 = vmatprep.subr.bf16.mxu0 0
        %2077 = vmatpush1.bf16.msra.mxu0 %v1935
        %2078 = vmatprep.subr.bf16.mxu0 0
        %2079 = vmatpush1.bf16.msra.mxu0 %v1938
        %2080 = vmatprep.subr.bf16.mxu0 0
        %2081 = vmatpush1.bf16.msra.mxu0 %v1941
        %2082 = vmatprep.subr.bf16.mxu0 0
        %2083 = vmatpush1.bf16.msra.mxu0 %v1944
        %2084 = vmatprep.subr.bf16.mxu0 0
        %2085 = vmatpush1.bf16.msra.mxu0 %v1947
        %2086 = vmatprep.subr.bf16.mxu0 0
        %2087 = vmatpush1.bf16.msra.mxu0 %v1950
        %2088 = vmatprep.subr.bf16.mxu0 0
        %2089 = vmatpush1.bf16.msra.mxu0 %v1953
        %2090 = vmatprep.subr.bf16.mxu0 0
        %2091 = vmatpush1.bf16.msra.mxu0 %v1956
        %2092 = vmatprep.subr.bf16.mxu0 0
        %2093 = vmatpush1.bf16.msra.mxu0 %v1959
        %2094 = vmatprep.subr.bf16.mxu0 0
        %2095 = vmatpush1.bf16.msra.mxu0 %v1962
        %2096 = vmatprep.subr.bf16.mxu0 0
        %2097 = vmatpush1.bf16.msra.mxu0 %v2017
        %2098 = vmatprep.subr.bf16.mxu0 0
        %2099 = vmatpush1.bf16.msra.mxu0 0
        %2100 = vmatprep.subr.bf16.mxu0 0
        %2101 = vmatpush1.bf16.msra.mxu0 0
        %2102 = vmatprep.subr.bf16.mxu0 0
        %2103 = vmatpush1.bf16.msra.mxu0 0
        %2104 = vmatprep.mubr.bf16.mxu0 %v2004
        %2105 = vmatmul.mubr.bf16.gmra.mrb[0].mxu0 %v1796
        %v2106 = vpop.f32.mrb[0].mxu0
        %v2107 = vadd.f32 %v1767, %v2106
        %v2108 = vpop.f32.mrb[0].mxu0
        %v2109 = vpop.f32.mrb[0].mxu0
        %v2110 = vadd.f32 %v1772, %v2109
        %v2111 = vpop.f32.mrb[0].mxu0
        %2112 = vmatprep.mubr.bf16.mxu0 %v2007
        %2113 = vmatmul.mubr.bf16.gmra.mrb[0].mxu0 %v1798
        %v2114 = vpop.f32.mrb[0].mxu0
        %v2115 = vadd.f32 %v1777, %v2114
        %v2116 = vpop.f32.mrb[0].mxu0
        %v2117 = vpop.f32.mrb[0].mxu0
        %v2118 = vadd.f32 %v1782, %v2117
        %v2119 = vpop.f32.mrb[0].mxu0
        %2120 = vdwg.mxu0
        %vm2121 = vcmp.ge.f32.partialorder %v2054, 0.0
        %vm2122 = vcmp.ge.f32.partialorder %v2056, 0.0
        %vm2123 = vcmp.ge.f32.partialorder %v2107, 0.0
        %vm2124 = vcmp.ge.f32.partialorder %v2058, 0.0
        %vm2125 = vcmp.ge.f32.partialorder %v2060, 0.0
        %vm2126 = vcmp.ge.f32.partialorder %v2110, 0.0
        %vm2127 = vcmp.ge.f32.partialorder %v2064, 0.0
        %vm2128 = vcmp.ge.f32.partialorder %v2066, 0.0
        %vm2129 = vcmp.ge.f32.partialorder %v2115, 0.0
        %vm2130 = vcmp.ge.f32.partialorder %v2068, 0.0
        %vm2131 = vcmp.ge.f32.partialorder %v2070, 0.0
        %vm2132 = vcmp.ge.f32.partialorder %v2118, 0.0
        %v2133 = vmul.f32 %v2054, 0.1
        %v2134 = vmul.f32 %v2056, 0.1
        %v2135 = vmul.f32 %v2107, 0.1
        %v2136 = vmul.f32 %v2058, 0.1
        %v2137 = vmul.f32 %v2060, 0.1
        %v2138 = vmul.f32 %v2110, 0.1
        %v2139 = vmul.f32 %v2064, 0.1
        %v2140 = vmul.f32 %v2066, 0.1
        %v2141 = vmul.f32 %v2115, 0.1
        %v2142 = vmul.f32 %v2068, 0.1
        %v2143 = vmul.f32 %v2070, 0.1
        %v2144 = vmul.f32 %v2118, 0.1
        %v2145 = vsel %vm2121, %v2054, %v2133
        %v2146 = vsel %vm2122, %v2056, %v2134
        %v2147 = vsel %vm2123, %v2107, %v2135
        %v2148 = vsel %vm2124, %v2058, %v2136
        %v2149 = vsel %vm2125, %v2060, %v2137
        %v2150 = vsel %vm2126, %v2110, %v2138
        %v2151 = vsel %vm2127, %v2064, %v2139
        %v2152 = vsel %vm2128, %v2066, %v2140
        %v2153 = vsel %vm2129, %v2115, %v2141
        %v2154 = vsel %vm2130, %v2068, %v2142
        %v2155 = vsel %vm2131, %v2070, %v2143
        %v2156 = vsel %vm2132, %v2118, %v2144
        %v2157 = vld [vmem:[%s3] sm:$0xf]
        %v2158 = vpack.c.bf16 %v2148, %v2145
        %v2159 = vpack.c.bf16 %v2149, %v2146
        %v2160 = vpack.c.bf16 %v2150, %v2147
        %v2161 = vpack.c.bf16 %v2154, %v2151
        %v2162 = vpack.c.bf16 %v2155, %v2152
        %v2163 = vpack.c.bf16 %v2156, %v2153
        %v2164 = vld [vmem:[%s4] sm:$0xff]
        %2166 = vset.pattern.permute.xlu0 0
        %2167 = vperm.xlu0 %2166, %v2164
        %v2168 = vpop.permute.xlu0 %2167
        %vm2170 = vcmask 261120
        %v2172 = vsel %vm2170, %v2157, 0
        %2174 = vmatprep.subr.bf16.mxu0 %v2159
        %2175 = vmatpush1.bf16.msra.mxu0 %v2158
        %2176 = vmatprep.subr.bf16.mxu0 %v2162
        %2177 = vmatpush1.bf16.msra.mxu0 %v2161
        %2178 = vmatprep.subr.bf16.mxu0 0
        %2179 = vmatpush1.bf16.msra.mxu0 0
        %2180 = vmatprep.subr.bf16.mxu0 0
        %2181 = vmatpush1.bf16.msra.mxu0 0
        %2182 = vmatprep.subr.bf16.mxu0 0
        %2183 = vmatpush1.bf16.msra.mxu0 0
        %2184 = vmatprep.subr.bf16.mxu0 0
        %2185 = vmatpush1.bf16.msra.mxu0 0
        %2186 = vmatprep.subr.bf16.mxu0 0
        %2187 = vmatpush1.bf16.msra.mxu0 0
        %2188 = vmatprep.subr.bf16.mxu0 0
        %2189 = vmatpush1.bf16.msra.mxu0 0
        %2190 = vmatprep.subr.bf16.mxu0 0
        %2191 = vmatpush1.bf16.msra.mxu0 0
        %2192 = vmatprep.subr.bf16.mxu0 0
        %2193 = vmatpush1.bf16.msra.mxu0 0
        %2194 = vmatprep.subr.bf16.mxu0 0
        %2195 = vmatpush1.bf16.msra.mxu0 0
        %2196 = vmatprep.subr.bf16.mxu0 0
        %2197 = vmatpush1.bf16.msra.mxu0 0
        %2198 = vmatprep.subr.bf16.mxu0 0
        %2199 = vmatpush1.bf16.msra.mxu0 0
        %2200 = vmatprep.subr.bf16.mxu0 0
        %2201 = vmatpush1.bf16.msra.mxu0 0
        %2202 = vmatprep.subr.bf16.mxu0 0
        %2203 = vmatpush1.bf16.msra.mxu0 0
        %2204 = vmatprep.subr.bf16.mxu0 0
        %2205 = vmatpush1.bf16.msra.mxu0 0
        %2206 = vmatprep.mubr.bf16.mxu0 0
        %2207 = vmatmul.mubr.bf16.gmra.mrb[0].mxu0 %v2172
        %v2208 = vpop.f32.mrb[0].mxu0
        %v2209 = vadd.f32 %v2168, %v2208
        %v2210 = vpop.f32.mrb[0].mxu0
        %v2211 = vadd.f32 %v2168, %v2210
        %v2212 = vpop.f32.mrb[0].mxu0
        %v2213 = vpop.f32.mrb[0].mxu0
        %2214 = vdwg.mxu0
        %2215 = vmatprep.subr.bf16.mxu0 0
        %2216 = vmatpush1.bf16.msra.mxu0 %v2160
        %2217 = vmatprep.subr.bf16.mxu0 0
        %2218 = vmatpush1.bf16.msra.mxu0 %v2163
        %2219 = vmatprep.subr.bf16.mxu0 0
        %2220 = vmatpush1.bf16.msra.mxu0 0
        %2221 = vmatprep.subr.bf16.mxu0 0
        %2222 = vmatpush1.bf16.msra.mxu0 0
        %2223 = vmatprep.subr.bf16.mxu0 0
        %2224 = vmatpush1.bf16.msra.mxu0 0
        %2225 = vmatprep.subr.bf16.mxu0 0
        %2226 = vmatpush1.bf16.msra.mxu0 0
        %2227 = vmatprep.subr.bf16.mxu0 0
        %2228 = vmatpush1.bf16.msra.mxu0 0
        %2229 = vmatprep.subr.bf16.mxu0 0
        %2230 = vmatpush1.bf16.msra.mxu0 0
        %2231 = vmatprep.subr.bf16.mxu0 0
        %2232 = vmatpush1.bf16.msra.mxu0 0
        %2233 = vmatprep.subr.bf16.mxu0 0
        %2234 = vmatpush1.bf16.msra.mxu0 0
        %2235 = vmatprep.subr.bf16.mxu0 0
        %2236 = vmatpush1.bf16.msra.mxu0 0
        %2237 = vmatprep.subr.bf16.mxu0 0
        %2238 = vmatpush1.bf16.msra.mxu0 0
        %2239 = vmatprep.subr.bf16.mxu0 0
        %2240 = vmatpush1.bf16.msra.mxu0 0
        %2241 = vmatprep.subr.bf16.mxu0 0
        %2242 = vmatpush1.bf16.msra.mxu0 0
        %2243 = vmatprep.subr.bf16.mxu0 0
        %2244 = vmatpush1.bf16.msra.mxu0 0
        %2245 = vmatprep.subr.bf16.mxu0 0
        %2246 = vmatpush1.bf16.msra.mxu0 0
        %2247 = vmatprep.mubr.bf16.mxu0 0
        %2248 = vmatmul.mubr.bf16.gmra.mrb[0].mxu0 %v2172
        %v2249 = vpop.f32.mrb[0].mxu0
        %v2250 = vadd.f32 %v2168, %v2249
        %v2251 = vpop.f32.mrb[0].mxu0
        %v2252 = vpop.f32.mrb[0].mxu0
        %v2253 = vpop.f32.mrb[0].mxu0
        %2254 = vdwg.mxu0
        %vm2255 = vcmp.ge.f32.partialorder %v2209, 0.0
        %vm2256 = vcmp.ge.f32.partialorder %v2211, 0.0
        %vm2257 = vcmp.ge.f32.partialorder %v2250, 0.0
        %v2258 = vmul.f32 %v2209, 0.01
        %v2259 = vmul.f32 %v2211, 0.01
        %v2260 = vmul.f32 %v2250, 0.01
        %v2261 = vsel %vm2255, %v2209, %v2258
        %v2262 = vsel %vm2256, %v2211, %v2259
        %v2263 = vsel %vm2257, %v2250, %v2260
        %v2264 = vlaneseq
        %v2265 = vand.u32 %v2264, 127
        %v2266 = vadd.s32 %v2265, 128
        %v2267 = vadd.s32 %v2265, 256
        %vm2268 = vcmp.lt.s32.totalorder %v2265, 0
        %v2269 = vsub.s32 0, %v2265
        %v2270 = vsel %vm2268, %v2269, %v2265
        %v2271 = vmul.u32.u64.compose %v2270, 2863311531
        %v2272 = vextract.low.u32 %v2271
        %v2273 = vextract.high.u32 %v2271
        %v2274 = vshrl.u32 %v2273, 4
        %v2275 = vmul.u32 %v2274, 24
        %v2276 = vsub.s32 %v2270, %v2275
        %v2277 = vsub.s32 0, %v2276
        %v2278 = vsel %vm2268, %v2277, %v2276
        %vm2279 = vcmp.lt.s32.totalorder %v2266, 0
        %v2280 = vsub.s32 0, %v2266
        %v2281 = vsel %vm2279, %v2280, %v2266
        %v2282 = vmul.u32.u64.compose %v2281, 2863311531
        %v2283 = vextract.low.u32 %v2282
        %v2284 = vextract.high.u32 %v2282
        %v2285 = vshrl.u32 %v2284, 4
        %v2286 = vmul.u32 %v2285, 24
        %v2287 = vsub.s32 %v2281, %v2286
        %v2288 = vsub.s32 0, %v2287
        %v2289 = vsel %vm2279, %v2288, %v2287
        %vm2290 = vcmp.lt.s32.totalorder %v2267, 0
        %v2291 = vsub.s32 0, %v2267
        %v2292 = vsel %vm2290, %v2291, %v2267
        %v2293 = vmul.u32.u64.compose %v2292, 2863311531
        %v2294 = vextract.low.u32 %v2293
        %v2295 = vextract.high.u32 %v2293
        %v2296 = vshrl.u32 %v2295, 4
        %v2297 = vmul.u32 %v2296, 24
        %v2298 = vsub.s32 %v2292, %v2297
        %v2299 = vsub.s32 0, %v2298
        %v2300 = vsel %vm2290, %v2299, %v2298
        %vm2301 = vcmp.ne.s32.totalorder %v2278, 0
        %vm2302 = vcmp.ne.s32.totalorder %v2289, 0
        %vm2303 = vcmp.ne.s32.totalorder %v2300, 0
        %vm2304 = vcmp.lt.s32.totalorder %v2278, 0
        %vm2305 = vcmp.lt.s32.totalorder %v2289, 0
        %vm2306 = vcmp.lt.s32.totalorder %v2300, 0
        %vm2307 = vmand %vm2304, %vm2301
        %vm2308 = vmand %vm2305, %vm2302
        %vm2309 = vmand %vm2306, %vm2303
        %v2310 = vadd.s32 %v2278, 24
        %v2311 = vadd.s32 %v2289, 24
        %v2312 = vadd.s32 %v2300, 24
        %v2313 = vsel %vm2307, %v2310, %v2278
        %v2314 = vsel %vm2308, %v2311, %v2289
        %v2315 = vsel %vm2309, %v2312, %v2300
        %vm2316 = vcmp.lt.s32.totalorder %v2313, 16
        %vm2317 = vcmp.lt.s32.totalorder %v2314, 16
        %vm2318 = vcmp.lt.s32.totalorder %v2315, 16
        %v2319 = vsel %vm2316, 1, 0
        %v2320 = vsel %vm2317, 1, 0
        %v2321 = vsel %vm2318, 1, 0
        %v2322 = vcvt.s32.f32 %v2319
        %v2323 = vcvt.s32.f32 %v2320
        %v2324 = vcvt.s32.f32 %v2321
        %vm2325 = vcmp.eq.s32.totalorder %v2319, 1
        %vm2326 = vcmp.eq.s32.totalorder %v2320, 1
        %vm2327 = vcmp.eq.s32.totalorder %v2321, 1
        %v2328 = vsel %vm2325, %v2261, -3e+38
        %v2329 = vsel %vm2326, %v2262, -3e+38
        %v2330 = vsel %vm2327, %v2263, -3e+38
        %v2331 = vmax.f32 %v2328, %v2329
        %v2332 = vmax.f32 %v2331, %v2330
        %2333 = vmax.xlane.f32.xlu0 %v2332
        %v2334 = vpop.xlane.xlu0 %2333
        %v2335 = vmul.f32 %v2261, %v2322
        %v2336 = vmul.f32 %v2262, %v2323
        %v2337 = vmul.f32 %v2263, %v2324
        %v2338 = vadd.f32 %v2335, %v2336
        %v2339 = vadd.f32 %v2338, %v2337
        %2340 = vadd.xlane.f32.xlu0 %v2339
        %v2341 = vpop.xlane.xlu0 %2340
        %v2342 = vmul.f32 %v2341, 0.00390625
        %vm2343 = vcmp.eq.s32.totalorder %v2265, 0
        %v2344 = vsel %vm2343, 1, 0
        %v2345 = vcvt.s32.f32 %v2344
        %v2346 = vmul.f32 %v2334, %v2345
        %v2347 = vadd.f32 %v2346, 0.0
        %vm2348 = vcmp.eq.s32.totalorder %v2265, 1
        %v2349 = vsel %vm2348, 1, 0
        %v2350 = vcvt.s32.f32 %v2349
        %v2351 = vmul.f32 %v2342, %v2350
        %v2352 = vadd.f32 %v2347, %v2351
        %v2353 = vld [vmem:[%s5] sm:$0x1]
        %vm2354 = vcmask 64512
        %v2356 = vsel %vm2354, %v2353, 0
        %2358 = vmatprep.subr.mxu0 0.0
        %2359 = vmatpush1.msra.mxu0 %v2352
        %2360 = vmatprep.subr.mxu0 0.0
        %2361 = vmatpush1.msra.mxu0 0.0
        %2362 = vmatprep.subr.mxu0 0.0
        %2363 = vmatpush1.msra.mxu0 0.0
        %2364 = vmatprep.subr.mxu0 0.0
        %2365 = vmatpush1.msra.mxu0 0.0
        %2366 = vmatprep.subr.mxu0 0.0
        %2367 = vmatpush1.msra.mxu0 0.0
        %2368 = vmatprep.subr.mxu0 0.0
        %2369 = vmatpush1.msra.mxu0 0.0
        %2370 = vmatprep.subr.mxu0 0.0
        %2371 = vmatpush1.msra.mxu0 0.0
        %2372 = vmatprep.subr.mxu0 0.0
        %2373 = vmatpush1.msra.mxu0 0.0
        %2374 = vmatprep.subr.mxu0 0.0
        %2375 = vmatpush1.msra.mxu0 0.0
        %2376 = vmatprep.subr.mxu0 0.0
        %2377 = vmatpush1.msra.mxu0 0.0
        %2378 = vmatprep.subr.mxu0 0.0
        %2379 = vmatpush1.msra.mxu0 0.0
        %2380 = vmatprep.subr.mxu0 0.0
        %2381 = vmatpush1.msra.mxu0 0.0
        %2382 = vmatprep.subr.mxu0 0.0
        %2383 = vmatpush1.msra.mxu0 0.0
        %2384 = vmatprep.subr.mxu0 0.0
        %2385 = vmatpush1.msra.mxu0 0.0
        %2386 = vmatprep.subr.mxu0 0.0
        %2387 = vmatpush1.msra.mxu0 0.0
        %2388 = vmatprep.subr.mxu0 0.0
        %2389 = vmatpush1.msra.mxu0 0.0
        %2390 = vmatprep.subr.mxu0 0.0
        %2391 = vmatpush1.msra.mxu0 0.0
        %2392 = vmatprep.subr.mxu0 0.0
        %2393 = vmatpush1.msra.mxu0 0.0
        %2394 = vmatprep.subr.mxu0 0.0
        %2395 = vmatpush1.msra.mxu0 0.0
        %2396 = vmatprep.subr.mxu0 0.0
        %2397 = vmatpush1.msra.mxu0 0.0
        %2398 = vmatprep.subr.mxu0 0.0
        %2399 = vmatpush1.msra.mxu0 0.0
        %2400 = vmatprep.subr.mxu0 0.0
        %2401 = vmatpush1.msra.mxu0 0.0
        %2402 = vmatprep.subr.mxu0 0.0
        %2403 = vmatpush1.msra.mxu0 0.0
        %2404 = vmatprep.subr.mxu0 0.0
        %2405 = vmatpush1.msra.mxu0 0.0
        %2406 = vmatprep.subr.mxu0 0.0
        %2407 = vmatpush1.msra.mxu0 0.0
        %2408 = vmatprep.subr.mxu0 0.0
        %2409 = vmatpush1.msra.mxu0 0.0
        %2410 = vmatprep.subr.mxu0 0.0
        %2411 = vmatpush1.msra.mxu0 0.0
        %2412 = vmatprep.subr.mxu0 0.0
        %2413 = vmatpush1.msra.mxu0 0.0
        %2414 = vmatprep.subr.mxu0 0.0
        %2415 = vmatpush1.msra.mxu0 0.0
        %2416 = vmatprep.subr.mxu0 0.0
        %2417 = vmatpush1.msra.mxu0 0.0
        %2418 = vmatprep.subr.mxu0 0.0
        %2419 = vmatpush1.msra.mxu0 0.0
        %2420 = vmatprep.subr.mxu0 0.0
        %2421 = vmatpush1.msra.mxu0 0.0
        %2422 = vmatprep.mubr.f32.mxu0 0.0
        %2423 = vmatmul.mubr.f32.gmra.mrb[0].mxu0 %v2356
        %v2424 = vpop.f32.mrb[0].mxu0
        %v2425 = vadd.f32 0.0, %v2424
        %v2426 = vpop.f32.mrb[0].mxu0
        %2427 = vdwg.mxu0
        %v2428 = vmax.f32 %v2425, 0.0
        %v2429 = vld [vmem:[%s6] sm:$0xff]
        %vm2430 = vcmask 7168
        %v2432 = vsel %vm2430, %v2429, 0
        %vm2434 = vcmask 1040384
        %v2436 = vsel %vm2434, %v2428, 0
        %2438 = vmatprep.subr.mxu0 0.0
        %2439 = vmatpush1.msra.mxu0 %v2436
        %2440 = vmatprep.subr.mxu0 0.0
        %2441 = vmatpush1.msra.mxu0 0.0
        %2442 = vmatprep.subr.mxu0 0.0
        %2443 = vmatpush1.msra.mxu0 0.0
        %2444 = vmatprep.subr.mxu0 0.0
        %2445 = vmatpush1.msra.mxu0 0.0
        %2446 = vmatprep.subr.mxu0 0.0
        %2447 = vmatpush1.msra.mxu0 0.0
        %2448 = vmatprep.subr.mxu0 0.0
        %2449 = vmatpush1.msra.mxu0 0.0
        %2450 = vmatprep.subr.mxu0 0.0
        %2451 = vmatpush1.msra.mxu0 0.0
        %2452 = vmatprep.subr.mxu0 0.0
        %2453 = vmatpush1.msra.mxu0 0.0
        %2454 = vmatprep.subr.mxu0 0.0
        %2455 = vmatpush1.msra.mxu0 0.0
        %2456 = vmatprep.subr.mxu0 0.0
        %2457 = vmatpush1.msra.mxu0 0.0
        %2458 = vmatprep.subr.mxu0 0.0
        %2459 = vmatpush1.msra.mxu0 0.0
        %2460 = vmatprep.subr.mxu0 0.0
        %2461 = vmatpush1.msra.mxu0 0.0
        %2462 = vmatprep.subr.mxu0 0.0
        %2463 = vmatpush1.msra.mxu0 0.0
        %2464 = vmatprep.subr.mxu0 0.0
        %2465 = vmatpush1.msra.mxu0 0.0
        %2466 = vmatprep.subr.mxu0 0.0
        %2467 = vmatpush1.msra.mxu0 0.0
        %2468 = vmatprep.subr.mxu0 0.0
        %2469 = vmatpush1.msra.mxu0 0.0
        %2470 = vmatprep.subr.mxu0 0.0
        %2471 = vmatpush1.msra.mxu0 0.0
        %2472 = vmatprep.subr.mxu0 0.0
        %2473 = vmatpush1.msra.mxu0 0.0
        %2474 = vmatprep.subr.mxu0 0.0
        %2475 = vmatpush1.msra.mxu0 0.0
        %2476 = vmatprep.subr.mxu0 0.0
        %2477 = vmatpush1.msra.mxu0 0.0
        %2478 = vmatprep.subr.mxu0 0.0
        %2479 = vmatpush1.msra.mxu0 0.0
        %2480 = vmatprep.subr.mxu0 0.0
        %2481 = vmatpush1.msra.mxu0 0.0
        %2482 = vmatprep.subr.mxu0 0.0
        %2483 = vmatpush1.msra.mxu0 0.0
        %2484 = vmatprep.subr.mxu0 0.0
        %2485 = vmatpush1.msra.mxu0 0.0
        %2486 = vmatprep.subr.mxu0 0.0
        %2487 = vmatpush1.msra.mxu0 0.0
        %2488 = vmatprep.subr.mxu0 0.0
        %2489 = vmatpush1.msra.mxu0 0.0
        %2490 = vmatprep.subr.mxu0 0.0
        %2491 = vmatpush1.msra.mxu0 0.0
        %2492 = vmatprep.subr.mxu0 0.0
        %2493 = vmatpush1.msra.mxu0 0.0
        %2494 = vmatprep.subr.mxu0 0.0
        %2495 = vmatpush1.msra.mxu0 0.0
        %2496 = vmatprep.subr.mxu0 0.0
        %2497 = vmatpush1.msra.mxu0 0.0
        %2498 = vmatprep.subr.mxu0 0.0
        %2499 = vmatpush1.msra.mxu0 0.0
        %2500 = vmatprep.subr.mxu0 0.0
        %2501 = vmatpush1.msra.mxu0 0.0
        %2502 = vmatprep.mubr.f32.mxu0 0.0
        %2503 = vmatmul.mubr.f32.gmra.mrb[0].mxu0 %v2432
        %v2504 = vpop.f32.mrb[0].mxu0
        %v2505 = vadd.f32 0.0, %v2504
        %v2506 = vpop.f32.mrb[0].mxu0
        %2507 = vdwg.mxu0
        %2508 = vst [vmem:[#allocation3] sm:$0xff] 0.0
        %2509 = vst [vmem:[#allocation3 + $0x8] sm:$0x3] 0.0
        %2511 = vrot.lane.b32.xlu0 %v2505, 127
        %v2512 = vpop.permute.xlu0 %2511
        %v2514 = vadd.f32 %v2505, %v2512
        %v2515 = vxor.u32 %v2514, 2147483648
        %v2516 = vmul.f32 %v2515, 1.442695
        %v2517 = vpow.pop %v2516
        %v2518 = vadd.f32 %v2517, 1.0
        %v2519 = vrcp.pop %v2518
        %v2520 = vmul.f32 1.0, %v2519
        %2522 = vset.pattern.permute.xlu0 0
        %2523 = vperm.xlu0 %2522, %v2520
        %v2524 = vpop.permute.xlu0 %2523
        %v2526 = vmul.f32 %v2261, %v2524
        %v2527 = vmul.f32 %v2262, %v2524
        %v2528 = vmul.f32 %v2263, %v2524
        %v2529 = vrot.slane %v2526, 4
        %v2530 = vmax.f32 %v2526, %v2529
        %v2531 = vrot.slane %v2530, 2
        %v2532 = vmax.f32 %v2530, %v2531
        %v2533 = vrot.slane %v2532, 1
        %v2534 = vmax.f32 %v2532, %v2533
        %v2535 = vrot.slane %v2527, 4
        %v2536 = vmax.f32 %v2527, %v2535
        %v2537 = vrot.slane %v2536, 2
        %v2538 = vmax.f32 %v2536, %v2537
        %v2539 = vrot.slane %v2538, 1
        %v2540 = vmax.f32 %v2538, %v2539
        %v2541 = vrot.slane %v2528, 4
        %v2542 = vmax.f32 %v2528, %v2541
        %v2543 = vrot.slane %v2542, 2
        %v2544 = vmax.f32 %v2542, %v2543
        %v2545 = vrot.slane %v2544, 1
        %v2546 = vmax.f32 %v2544, %v2545
        %v2547 = vmul.f32 %v2534, %v2322
        %v2548 = vmul.f32 %v2540, %v2323
        %v2549 = vmul.f32 %v2546, %v2324
        %v2553 = vcombine.low %v2547, %v2548
        %v2555 = vunpack.c.l.s4 1966171168
        %v2556 = vunpack.c.0.s8 %v2555
        %v2557 = vlaneseq
        %v2558 = vshrl.u32 %v2557, 7
        %v2559 = vsub.s32 %v2556, %v2558
        %v2560 = vrot.slane %v2553, %v2559
        %v2562 = vunpack.c.l.s4 1966171168
        %v2563 = vunpack.c.0.s8 %v2562
        %v2564 = vlaneseq
        %v2565 = vshrl.u32 %v2564, 7
        %v2566 = vsub.s32 %v2563, %v2565
        %v2567 = vrot.slane %v2549, %v2566
        %v2568 = vcombine.low %v2560, %v2567
        %v2570 = vunpack.c.l.s4 1966171168
        %v2571 = vunpack.c.0.s8 %v2570
        %v2572 = vlaneseq
        %v2573 = vshrl.u32 %v2572, 7
        %v2574 = vsub.s32 %v2571, %v2573
        %v2575 = vrot.slane %v2568, %v2574
        %2576 = vrot.lane.b32.xlu0 %v2575, 75
        %v2577 = vpop.permute.xlu0 %2576
        %v2578 = vrot.slane %v2577, 7
        %vm2579 = vcmask 613376
        %v2580 = vsel %vm2579, %v2578, %v2577
        %v2582 = vlaneseq
        %vm2583 = vcmp.ge.s32.totalorder %v2582, 75
        %vm2584 = vcmp.lt.s32.totalorder %v2582, 459
        %vm2585 = vmand %vm2583, %vm2584
        %2586 = vst.msk [vmem:[#allocation3] ss:$2 sm:$0xf] %vm2585, %v2580
        %v2587 = vrot.slane %v2526, 4
        %v2588 = vadd.f32 %v2526, %v2587
        %v2589 = vrot.slane %v2588, 2
        %v2590 = vadd.f32 %v2588, %v2589
        %v2591 = vrot.slane %v2590, 1
        %v2592 = vadd.f32 %v2590, %v2591
        %v2593 = vrot.slane %v2527, 4
        %v2594 = vadd.f32 %v2527, %v2593
        %v2595 = vrot.slane %v2594, 2
        %v2596 = vadd.f32 %v2594, %v2595
        %v2597 = vrot.slane %v2596, 1
        %v2598 = vadd.f32 %v2596, %v2597
        %v2599 = vrot.slane %v2528, 4
        %v2600 = vadd.f32 %v2528, %v2599
        %v2601 = vrot.slane %v2600, 2
        %v2602 = vadd.f32 %v2600, %v2601
        %v2603 = vrot.slane %v2602, 1
        %v2604 = vadd.f32 %v2602, %v2603
        %v2605 = vrcp.pop 8.0
        %v2606 = vmul.f32 %v2592, %v2605
        %v2607 = vmul.f32 %v2598, %v2605
        %v2608 = vmul.f32 %v2604, %v2605
        %v2609 = vmul.f32 %v2606, %v2322
        %v2610 = vmul.f32 %v2607, %v2323
        %v2611 = vmul.f32 %v2608, %v2324
        %v2615 = vcombine.low %v2609, %v2610
        %v2617 = vunpack.c.l.s4 1966171168
        %v2618 = vunpack.c.0.s8 %v2617
        %v2619 = vlaneseq
        %v2620 = vshrl.u32 %v2619, 7
        %v2621 = vsub.s32 %v2618, %v2620
        %v2622 = vrot.slane %v2615, %v2621
        %v2624 = vunpack.c.l.s4 1966171168
        %v2625 = vunpack.c.0.s8 %v2624
        %v2626 = vlaneseq
        %v2627 = vshrl.u32 %v2626, 7
        %v2628 = vsub.s32 %v2625, %v2627
        %v2629 = vrot.slane %v2611, %v2628
        %v2630 = vcombine.low %v2622, %v2629
        %v2632 = vunpack.c.l.s4 1966171168
        %v2633 = vunpack.c.0.s8 %v2632
        %v2634 = vlaneseq
        %v2635 = vshrl.u32 %v2634, 7
        %v2636 = vsub.s32 %v2633, %v2635
        %v2637 = vrot.slane %v2630, %v2636
        %2638 = vrot.lane.b32.xlu0 %v2637, 75
        %v2639 = vpop.permute.xlu0 %2638
        %v2640 = vrot.slane %v2639, 7
        %v2641 = vsel %vm2579, %v2640, %v2639
        %s2643 = scalar_lea.vmem [#allocation3], 1
        %2644 = vst.msk [vmem:[%s2643] ss:$2 sm:$0xf] %vm2585, %v2641
        %v2645 = vld [vmem:[#allocation3] sm:$0x3f]
        %s2646 = sld [smem:[#allocation9]]
        %v2647 = vstv %s2646
        %v2648 = vmul.f32 %v2647, %v2645
        %s2649 = sld [smem:[#allocation9 + $0x1]]
        %v2650 = vstv %s2649
        %v2651 = vmul.f32 %v2650, %v2645
        %v2653 = vrot.slane %v2651, 7
        %v2654 = vrot.slane %v2653, 2
        %v2656 = vadd.f32 %v2648, %v2654
        %v2657 = vadd.f32 %v2656, 0.0
        %v2658 = vld [vmem:[#allocation3] sm:$0xff]
        %s2659 = sld [smem:[#allocation9 + $0x2]]
        %v2660 = vstv %s2659
        %v2661 = vmul.f32 %v2660, %v2658
        %s2662 = sld [smem:[#allocation9 + $0x3]]
        %v2663 = vstv %s2662
        %v2664 = vmul.f32 %v2663, %v2658
        %v2666 = vrot.slane %v2664, 7
        %v2667 = vrot.slane %v2666, 2
        %v2669 = vadd.f32 %v2661, %v2667
        %v2670 = vadd.f32 %v2669, 0.0
        %s2671 = sld [smem:[#allocation9 + $0x4]]
        %v2672 = vstv %s2671
        %v2673 = vmul.f32 %v2672, %v2658
        %s2674 = sld [smem:[#allocation9 + $0x5]]
        %v2675 = vstv %s2674
        %v2676 = vmul.f32 %v2675, %v2658
        %v2678 = vrot.slane %v2676, 7
        %v2679 = vrot.slane %v2678, 2
        %v2681 = vadd.f32 %v2673, %v2679
        %v2682 = vadd.f32 %v2681, 0.0
        %s2683 = sld [smem:[#allocation9 + $0x6]]
        %v2684 = vstv %s2683
        %v2685 = vmul.f32 %v2684, %v2658
        %s2686 = sld [smem:[#allocation9 + $0x7]]
        %v2687 = vstv %s2686
        %v2688 = vmul.f32 %v2687, %v2658
        %v2690 = vrot.slane %v2688, 7
        %v2691 = vrot.slane %v2690, 2
        %v2693 = vadd.f32 %v2685, %v2691
        %v2694 = vadd.f32 %v2693, 0.0
        %s2695 = sld [smem:[#allocation9 + $0x8]]
        %v2696 = vstv %s2695
        %v2697 = vmul.f32 %v2696, %v2658
        %s2698 = sld [smem:[#allocation9 + $0x9]]
        %v2699 = vstv %s2698
        %v2700 = vmul.f32 %v2699, %v2658
        %v2702 = vrot.slane %v2700, 7
        %v2703 = vrot.slane %v2702, 2
        %v2705 = vadd.f32 %v2697, %v2703
        %2707 = vrot.lane.b32.xlu0 %v2705, 124
        %v2708 = vpop.permute.xlu0 %2707
        %v2709 = vrot.slane %v2708, 2
        %vm2710 = vcmask 1014784
        %v2711 = vsel %vm2710, %v2708, %v2709
        %v2713 = vadd.f32 %v2657, %v2711
        %s2714 = sld [smem:[#allocation9 + $0xa]]
        %v2715 = vstv %s2714
        %v2716 = vmul.f32 %v2715, %v2658
        %s2717 = sld [smem:[#allocation9 + $0xb]]
        %v2718 = vstv %s2717
        %v2719 = vmul.f32 %v2718, %v2658
        %v2721 = vrot.slane %v2719, 7
        %v2722 = vrot.slane %v2721, 2
        %v2724 = vadd.f32 %v2716, %v2722
        %2726 = vrot.lane.b32.xlu0 %v2724, 124
        %v2727 = vpop.permute.xlu0 %2726
        %v2728 = vrot.slane %v2727, 2
        %v2729 = vsel %vm2710, %v2727, %v2728
        %v2731 = vadd.f32 %v2670, %v2729
        %s2732 = sld [smem:[#allocation9 + $0xc]]
        %v2733 = vstv %s2732
        %v2734 = vmul.f32 %v2733, %v2658
        %s2735 = sld [smem:[#allocation9 + $0xd]]
        %v2736 = vstv %s2735
        %v2737 = vmul.f32 %v2736, %v2658
        %v2739 = vrot.slane %v2737, 7
        %v2740 = vrot.slane %v2739, 2
        %v2742 = vadd.f32 %v2734, %v2740
        %2744 = vrot.lane.b32.xlu0 %v2742, 124
        %v2745 = vpop.permute.xlu0 %2744
        %v2746 = vrot.slane %v2745, 2
        %v2747 = vsel %vm2710, %v2745, %v2746
        %v2749 = vadd.f32 %v2682, %v2747
        %s2750 = sld [smem:[#allocation9 + $0xe]]
        %v2751 = vstv %s2750
        %v2752 = vmul.f32 %v2751, %v2658
        %s2753 = sld [smem:[#allocation9 + $0xf]]
        %v2754 = vstv %s2753
        %v2755 = vmul.f32 %v2754, %v2658
        %v2757 = vrot.slane %v2755, 7
        %v2758 = vrot.slane %v2757, 2
        %v2760 = vadd.f32 %v2752, %v2758
        %2762 = vrot.lane.b32.xlu0 %v2760, 107
        %v2763 = vpop.permute.xlu0 %2762
        %v2764 = vrot.slane %v2763, 2
        %vm2765 = vcmask 875520
        %v2766 = vsel %vm2765, %v2763, %v2764
        %v2768 = vadd.f32 %v2694, %v2766
        %s2769 = sld [smem:[#allocation9 + $0x10]]
        %v2770 = vstv %s2769
        %v2771 = vmul.f32 %v2770, %v2658
        %s2772 = sld [smem:[#allocation9 + $0x11]]
        %v2773 = vstv %s2772
        %v2774 = vmul.f32 %v2773, %v2658
        %v2776 = vrot.slane %v2774, 7
        %v2777 = vrot.slane %v2776, 2
        %v2779 = vadd.f32 %v2771, %v2777
        %2781 = vrot.lane.b32.xlu0 %v2779, 103
        %v2782 = vpop.permute.xlu0 %2781
        %v2783 = vrot.slane %v2782, 2
        %vm2784 = vcmask 842752
        %v2785 = vsel %vm2784, %v2782, %v2783
        %v2787 = vadd.f32 %v2713, %v2785
        %s2788 = sld [smem:[#allocation9 + $0x12]]
        %v2789 = vstv %s2788
        %v2790 = vmul.f32 %v2789, %v2658
        %s2791 = sld [smem:[#allocation9 + $0x13]]
        %v2792 = vstv %s2791
        %v2793 = vmul.f32 %v2792, %v2658
        %v2795 = vrot.slane %v2793, 7
        %v2796 = vrot.slane %v2795, 2
        %v2798 = vadd.f32 %v2790, %v2796
        %2800 = vrot.lane.b32.xlu0 %v2798, 103
        %v2801 = vpop.permute.xlu0 %2800
        %v2802 = vrot.slane %v2801, 2
        %v2803 = vsel %vm2784, %v2801, %v2802
        %v2805 = vadd.f32 %v2731, %v2803
        %s2806 = sld [smem:[#allocation9 + $0x14]]
        %v2807 = vstv %s2806
        %v2808 = vmul.f32 %v2807, %v2658
        %s2809 = sld [smem:[#allocation9 + $0x15]]
        %v2810 = vstv %s2809
        %v2811 = vmul.f32 %v2810, %v2658
        %v2813 = vrot.slane %v2811, 7
        %v2814 = vrot.slane %v2813, 2
        %v2816 = vadd.f32 %v2808, %v2814
        %2818 = vrot.lane.b32.xlu0 %v2816, 103
        %v2819 = vpop.permute.xlu0 %2818
        %v2820 = vrot.slane %v2819, 2
        %v2821 = vsel %vm2784, %v2819, %v2820
        %v2823 = vadd.f32 %v2749, %v2821
        %s2824 = sld [smem:[#allocation9 + $0x16]]
        %v2825 = vstv %s2824
        %v2826 = vmul.f32 %v2825, %v2658
        %s2827 = sld [smem:[#allocation9 + $0x17]]
        %v2828 = vstv %s2827
        %v2829 = vmul.f32 %v2828, %v2658
        %v2831 = vrot.slane %v2829, 7
        %v2832 = vrot.slane %v2831, 2
        %v2834 = vadd.f32 %v2826, %v2832
        %2836 = vrot.lane.b32.xlu0 %v2834, 103
        %v2837 = vpop.permute.xlu0 %2836
        %v2838 = vrot.slane %v2837, 2
        %v2839 = vsel %vm2784, %v2837, %v2838
        %v2841 = vadd.f32 %v2768, %v2839
        %s2842 = sld [smem:[#allocation9 + $0x18]]
        %v2843 = vstv %s2842
        %v2844 = vmul.f32 %v2843, %v2658
        %s2845 = sld [smem:[#allocation9 + $0x19]]
        %v2846 = vstv %s2845
        %v2847 = vmul.f32 %v2846, %v2658
        %v2849 = vrot.slane %v2847, 7
        %v2850 = vrot.slane %v2849, 2
        %v2852 = vadd.f32 %v2844, %v2850
        %2854 = vrot.lane.b32.xlu0 %v2852, 99
        %v2855 = vpop.permute.xlu0 %2854
        %v2856 = vrot.slane %v2855, 2
        %vm2857 = vcmask 809984
        %v2858 = vsel %vm2857, %v2855, %v2856
        %v2860 = vadd.f32 %v2787, %v2858
        %s2861 = sld [smem:[#allocation9 + $0x1a]]
        %v2862 = vstv %s2861
        %v2863 = vmul.f32 %v2862, %v2658
        %s2864 = sld [smem:[#allocation9 + $0x1b]]
        %v2865 = vstv %s2864
        %v2866 = vmul.f32 %v2865, %v2658
        %v2868 = vrot.slane %v2866, 7
        %v2869 = vrot.slane %v2868, 2
        %v2871 = vadd.f32 %v2863, %v2869
        %2873 = vrot.lane.b32.xlu0 %v2871, 99
        %v2874 = vpop.permute.xlu0 %2873
        %v2875 = vrot.slane %v2874, 2
        %v2876 = vsel %vm2857, %v2874, %v2875
        %v2878 = vadd.f32 %v2805, %v2876
        %s2879 = sld [smem:[#allocation9 + $0x1c]]
        %v2880 = vstv %s2879
        %v2881 = vmul.f32 %v2880, %v2658
        %s2882 = sld [smem:[#allocation9 + $0x1d]]
        %v2883 = vstv %s2882
        %v2884 = vmul.f32 %v2883, %v2658
        %v2886 = vrot.slane %v2884, 7
        %v2887 = vrot.slane %v2886, 2
        %v2889 = vadd.f32 %v2881, %v2887
        %2891 = vrot.lane.b32.xlu0 %v2889, 82
        %v2892 = vpop.permute.xlu0 %2891
        %v2893 = vrot.slane %v2892, 2
        %vm2894 = vcmask 670720
        %v2895 = vsel %vm2894, %v2892, %v2893
        %v2897 = vadd.f32 %v2823, %v2895
        %s2898 = sld [smem:[#allocation9 + $0x1e]]
        %v2899 = vstv %s2898
        %v2900 = vmul.f32 %v2899, %v2658
        %s2901 = sld [smem:[#allocation9 + $0x1f]]
        %v2902 = vstv %s2901
        %v2903 = vmul.f32 %v2902, %v2658
        %v2905 = vrot.slane %v2903, 7
        %v2906 = vrot.slane %v2905, 2
        %v2908 = vadd.f32 %v2900, %v2906
        %2910 = vrot.lane.b32.xlu0 %v2908, 82
        %v2911 = vpop.permute.xlu0 %2910
        %v2912 = vrot.slane %v2911, 2
        %v2913 = vsel %vm2894, %v2911, %v2912
        %v2915 = vadd.f32 %v2841, %v2913
        %s2916 = sld [smem:[#allocation9 + $0x20]]
        %v2917 = vstv %s2916
        %v2918 = vmul.f32 %v2917, %v2658
        %s2919 = sld [smem:[#allocation9 + $0x21]]
        %v2920 = vstv %s2919
        %v2921 = vmul.f32 %v2920, %v2658
        %v2923 = vrot.slane %v2921, 7
        %v2924 = vrot.slane %v2923, 2
        %v2926 = vadd.f32 %v2918, %v2924
        %2928 = vrot.lane.b32.xlu0 %v2926, 78
        %v2929 = vpop.permute.xlu0 %2928
        %v2930 = vrot.slane %v2929, 2
        %vm2931 = vcmask 637952
        %v2932 = vsel %vm2931, %v2929, %v2930
        %v2934 = vadd.f32 %v2860, %v2932
        %s2935 = sld [smem:[#allocation9 + $0x22]]
        %v2936 = vstv %s2935
        %v2937 = vmul.f32 %v2936, %v2658
        %s2938 = sld [smem:[#allocation9 + $0x23]]
        %v2939 = vstv %s2938
        %v2940 = vmul.f32 %v2939, %v2658
        %v2942 = vrot.slane %v2940, 7
        %v2943 = vrot.slane %v2942, 2
        %v2945 = vadd.f32 %v2937, %v2943
        %2947 = vrot.lane.b32.xlu0 %v2945, 78
        %v2948 = vpop.permute.xlu0 %2947
        %v2949 = vrot.slane %v2948, 2
        %v2950 = vsel %vm2931, %v2948, %v2949
        %v2952 = vadd.f32 %v2878, %v2950
        %s2953 = sld [smem:[#allocation9 + $0x24]]
        %v2954 = vstv %s2953
        %v2955 = vmul.f32 %v2954, %v2658
        %s2956 = sld [smem:[#allocation9 + $0x25]]
        %v2957 = vstv %s2956
        %v2958 = vmul.f32 %v2957, %v2658
        %v2960 = vrot.slane %v2958, 7
        %v2961 = vrot.slane %v2960, 2
        %v2963 = vadd.f32 %v2955, %v2961
        %2965 = vrot.lane.b32.xlu0 %v2963, 78
        %v2966 = vpop.permute.xlu0 %2965
        %v2967 = vrot.slane %v2966, 2
        %v2968 = vsel %vm2931, %v2966, %v2967
        %v2970 = vadd.f32 %v2897, %v2968
        %s2971 = sld [smem:[#allocation9 + $0x26]]
        %v2972 = vstv %s2971
        %v2973 = vmul.f32 %v2972, %v2658
        %s2974 = sld [smem:[#allocation9 + $0x27]]
        %v2975 = vstv %s2974
        %v2976 = vmul.f32 %v2975, %v2658
        %v2978 = vrot.slane %v2976, 7
        %v2979 = vrot.slane %v2978, 2
        %v2981 = vadd.f32 %v2973, %v2979
        %2983 = vrot.lane.b32.xlu0 %v2981, 78
        %v2984 = vpop.permute.xlu0 %2983
        %v2985 = vrot.slane %v2984, 2
        %v2986 = vsel %vm2931, %v2984, %v2985
        %v2988 = vadd.f32 %v2915, %v2986
        %s2989 = sld [smem:[#allocation9 + $0x28]]
        %v2990 = vstv %s2989
        %v2991 = vmul.f32 %v2990, %v2658
        %s2992 = sld [smem:[#allocation9 + $0x29]]
        %v2993 = vstv %s2992
        %v2994 = vmul.f32 %v2993, %v2658
        %v2996 = vrot.slane %v2994, 7
        %v2997 = vrot.slane %v2996, 2
        %v2999 = vadd.f32 %v2991, %v2997
        %3001 = vrot.lane.b32.xlu0 %v2999, 74
        %v3002 = vpop.permute.xlu0 %3001
        %v3003 = vrot.slane %v3002, 2
        %vm3004 = vcmask 605184
        %v3005 = vsel %vm3004, %v3002, %v3003
        %v3007 = vadd.f32 %v2934, %v3005
        %s3008 = sld [smem:[#allocation9 + $0x2a]]
        %v3009 = vstv %s3008
        %v3010 = vmul.f32 %v3009, %v2658
        %s3011 = sld [smem:[#allocation9 + $0x2b]]
        %v3012 = vstv %s3011
        %v3013 = vmul.f32 %v3012, %v2658
        %v3015 = vrot.slane %v3013, 7
        %v3016 = vrot.slane %v3015, 2
        %v3018 = vadd.f32 %v3010, %v3016
        %3020 = vrot.lane.b32.xlu0 %v3018, 57
        %v3021 = vpop.permute.xlu0 %3020
        %v3022 = vrot.slane %v3021, 2
        %vm3023 = vcmask 465920
        %v3024 = vsel %vm3023, %v3021, %v3022
        %v3026 = vadd.f32 %v2952, %v3024
        %s3027 = sld [smem:[#allocation9 + $0x2c]]
        %v3028 = vstv %s3027
        %v3029 = vmul.f32 %v3028, %v2658
        %s3030 = sld [smem:[#allocation9 + $0x2d]]
        %v3031 = vstv %s3030
        %v3032 = vmul.f32 %v3031, %v2658
        %v3034 = vrot.slane %v3032, 7
        %v3035 = vrot.slane %v3034, 2
        %v3037 = vadd.f32 %v3029, %v3035
        %3039 = vrot.lane.b32.xlu0 %v3037, 57
        %v3040 = vpop.permute.xlu0 %3039
        %v3041 = vrot.slane %v3040, 2
        %v3042 = vsel %vm3023, %v3040, %v3041
        %v3044 = vadd.f32 %v2970, %v3042
        %s3045 = sld [smem:[#allocation9 + $0x2e]]
        %v3046 = vstv %s3045
        %v3047 = vmul.f32 %v3046, %v2658
        %s3048 = sld [smem:[#allocation9 + $0x2f]]
        %v3049 = vstv %s3048
        %v3050 = vmul.f32 %v3049, %v2658
        %v3052 = vrot.slane %v3050, 7
        %v3053 = vrot.slane %v3052, 2
        %v3055 = vadd.f32 %v3047, %v3053
        %3057 = vrot.lane.b32.xlu0 %v3055, 57
        %v3058 = vpop.permute.xlu0 %3057
        %v3059 = vrot.slane %v3058, 2
        %v3060 = vsel %vm3023, %v3058, %v3059
        %v3062 = vadd.f32 %v2988, %v3060
        %s3063 = sld [smem:[#allocation9 + $0x30]]
        %v3064 = vstv %s3063
        %v3065 = vmul.f32 %v3064, %v2658
        %s3066 = sld [smem:[#allocation9 + $0x31]]
        %v3067 = vstv %s3066
        %v3068 = vmul.f32 %v3067, %v2658
        %v3070 = vrot.slane %v3068, 7
        %v3071 = vrot.slane %v3070, 2
        %v3073 = vadd.f32 %v3065, %v3071
        %3075 = vrot.lane.b32.xlu0 %v3073, 53
        %v3076 = vpop.permute.xlu0 %3075
        %v3077 = vrot.slane %v3076, 2
        %vm3078 = vcmask 433152
        %v3079 = vsel %vm3078, %v3076, %v3077
        %v3081 = vadd.f32 %v3007, %v3079
        %s3082 = sld [smem:[#allocation9 + $0x32]]
        %v3083 = vstv %s3082
        %v3084 = vmul.f32 %v3083, %v2658
        %s3085 = sld [smem:[#allocation9 + $0x33]]
        %v3086 = vstv %s3085
        %v3087 = vmul.f32 %v3086, %v2658
        %v3089 = vrot.slane %v3087, 7
        %v3090 = vrot.slane %v3089, 2
        %v3092 = vadd.f32 %v3084, %v3090
        %3094 = vrot.lane.b32.xlu0 %v3092, 53
        %v3095 = vpop.permute.xlu0 %3094
        %v3096 = vrot.slane %v3095, 2
        %v3097 = vsel %vm3078, %v3095, %v3096
        %v3099 = vadd.f32 %v3026, %v3097
        %s3100 = sld [smem:[#allocation9 + $0x34]]
        %v3101 = vstv %s3100
        %v3102 = vmul.f32 %v3101, %v2658
        %s3103 = sld [smem:[#allocation9 + $0x35]]
        %v3104 = vstv %s3103
        %v3105 = vmul.f32 %v3104, %v2658
        %v3107 = vrot.slane %v3105, 7
        %v3108 = vrot.slane %v3107, 2
        %v3110 = vadd.f32 %v3102, %v3108
        %3112 = vrot.lane.b32.xlu0 %v3110, 53
        %v3113 = vpop.permute.xlu0 %3112
        %v3114 = vrot.slane %v3113, 2
        %v3115 = vsel %vm3078, %v3113, %v3114
        %v3117 = vadd.f32 %v3044, %v3115
        %s3118 = sld [smem:[#allocation9 + $0x36]]
        %v3119 = vstv %s3118
        %v3120 = vmul.f32 %v3119, %v2658
        %s3121 = sld [smem:[#allocation9 + $0x37]]
        %v3122 = vstv %s3121
        %v3123 = vmul.f32 %v3122, %v2658
        %v3125 = vrot.slane %v3123, 7
        %v3126 = vrot.slane %v3125, 2
        %v3128 = vadd.f32 %v3120, %v3126
        %3130 = vrot.lane.b32.xlu0 %v3128, 53
        %v3131 = vpop.permute.xlu0 %3130
        %v3132 = vrot.slane %v3131, 2
        %v3133 = vsel %vm3078, %v3131, %v3132
        %v3135 = vadd.f32 %v3062, %v3133
        %s3136 = sld [smem:[#allocation9 + $0x38]]
        %v3137 = vstv %s3136
        %v3138 = vmul.f32 %v3137, %v2658
        %s3139 = sld [smem:[#allocation9 + $0x39]]
        %v3140 = vstv %s3139
        %v3141 = vmul.f32 %v3140, %v2658
        %v3143 = vrot.slane %v3141, 7
        %v3144 = vrot.slane %v3143, 2
        %v3146 = vadd.f32 %v3138, %v3144
        %3148 = vrot.lane.b32.xlu0 %v3146, 32
        %v3149 = vpop.permute.xlu0 %3148
        %v3150 = vrot.slane %v3149, 2
        %v3151 = vsel %vm2170, %v3149, %v3150
        %v3153 = vadd.f32 %v3081, %v3151
        %s3154 = sld [smem:[#allocation9 + $0x3a]]
        %v3155 = vstv %s3154
        %v3156 = vmul.f32 %v3155, %v2658
        %s3157 = sld [smem:[#allocation9 + $0x3b]]
        %v3158 = vstv %s3157
        %v3159 = vmul.f32 %v3158, %v2658
        %v3161 = vrot.slane %v3159, 7
        %v3162 = vrot.slane %v3161, 2
        %v3164 = vadd.f32 %v3156, %v3162
        %3166 = vrot.lane.b32.xlu0 %v3164, 32
        %v3167 = vpop.permute.xlu0 %3166
        %v3168 = vrot.slane %v3167, 2
        %v3169 = vsel %vm2170, %v3167, %v3168
        %v3171 = vadd.f32 %v3099, %v3169
        %s3172 = sld [smem:[#allocation9 + $0x3c]]
        %v3173 = vstv %s3172
        %v3174 = vmul.f32 %v3173, %v2658
        %s3175 = sld [smem:[#allocation9 + $0x3d]]
        %v3176 = vstv %s3175
        %v3177 = vmul.f32 %v3176, %v2658
        %v3179 = vrot.slane %v3177, 7
        %v3180 = vrot.slane %v3179, 2
        %v3182 = vadd.f32 %v3174, %v3180
        %3184 = vrot.lane.b32.xlu0 %v3182, 32
        %v3185 = vpop.permute.xlu0 %3184
        %v3186 = vrot.slane %v3185, 2
        %v3187 = vsel %vm2170, %v3185, %v3186
        %v3189 = vadd.f32 %v3117, %v3187
        %s3190 = sld [smem:[#allocation9 + $0x3e]]
        %v3191 = vstv %s3190
        %v3192 = vmul.f32 %v3191, %v2658
        %s3193 = sld [smem:[#allocation9 + $0x3f]]
        %v3194 = vstv %s3193
        %v3195 = vmul.f32 %v3194, %v2658
        %v3197 = vrot.slane %v3195, 7
        %v3198 = vrot.slane %v3197, 2
        %v3200 = vadd.f32 %v3192, %v3198
        %3202 = vrot.lane.b32.xlu0 %v3200, 32
        %v3203 = vpop.permute.xlu0 %3202
        %v3204 = vrot.slane %v3203, 2
        %v3205 = vsel %vm2170, %v3203, %v3204
        %v3207 = vadd.f32 %v3135, %v3205
        %s3208 = sld [smem:[#allocation9 + $0x40]]
        %v3209 = vstv %s3208
        %v3210 = vmul.f32 %v3209, %v2658
        %s3211 = sld [smem:[#allocation9 + $0x41]]
        %v3212 = vstv %s3211
        %v3213 = vmul.f32 %v3212, %v2658
        %v3215 = vrot.slane %v3213, 7
        %v3216 = vrot.slane %v3215, 2
        %v3218 = vadd.f32 %v3210, %v3216
        %3220 = vrot.lane.b32.xlu0 %v3218, 28
        %v3221 = vpop.permute.xlu0 %3220
        %v3222 = vrot.slane %v3221, 2
        %vm3223 = vcmask 228352
        %v3224 = vsel %vm3223, %v3221, %v3222
        %v3226 = vadd.f32 %v3153, %v3224
        %s3227 = sld [smem:[#allocation9 + $0x42]]
        %v3228 = vstv %s3227
        %v3229 = vmul.f32 %v3228, %v2658
        %s3230 = sld [smem:[#allocation9 + $0x43]]
        %v3231 = vstv %s3230
        %v3232 = vmul.f32 %v3231, %v2658
        %v3234 = vrot.slane %v3232, 7
        %v3235 = vrot.slane %v3234, 2
        %v3237 = vadd.f32 %v3229, %v3235
        %3239 = vrot.lane.b32.xlu0 %v3237, 28
        %v3240 = vpop.permute.xlu0 %3239
        %v3241 = vrot.slane %v3240, 2
        %v3242 = vsel %vm3223, %v3240, %v3241
        %v3244 = vadd.f32 %v3171, %v3242
        %s3245 = sld [smem:[#allocation9 + $0x44]]
        %v3246 = vstv %s3245
        %v3247 = vmul.f32 %v3246, %v2658
        %s3248 = sld [smem:[#allocation9 + $0x45]]
        %v3249 = vstv %s3248
        %v3250 = vmul.f32 %v3249, %v2658
        %v3252 = vrot.slane %v3250, 7
        %v3253 = vrot.slane %v3252, 2
        %v3255 = vadd.f32 %v3247, %v3253
        %3257 = vrot.lane.b32.xlu0 %v3255, 28
        %v3258 = vpop.permute.xlu0 %3257
        %v3259 = vrot.slane %v3258, 2
        %v3260 = vsel %vm3223, %v3258, %v3259
        %v3262 = vadd.f32 %v3189, %v3260
        %s3263 = sld [smem:[#allocation9 + $0x46]]
        %v3264 = vstv %s3263
        %v3265 = vmul.f32 %v3264, %v2658
        %s3266 = sld [smem:[#allocation9 + $0x47]]
        %v3267 = vstv %s3266
        %v3268 = vmul.f32 %v3267, %v2658
        %v3270 = vrot.slane %v3268, 7
        %v3271 = vrot.slane %v3270, 2
        %v3273 = vadd.f32 %v3265, %v3271
        %3275 = vrot.lane.b32.xlu0 %v3273, 11
        %v3276 = vpop.permute.xlu0 %3275
        %v3277 = vrot.slane %v3276, 2
        %vm3278 = vcmask 89088
        %v3279 = vsel %vm3278, %v3276, %v3277
        %v3281 = vadd.f32 %v3207, %v3279
        %s3282 = sld [smem:[#allocation9 + $0x48]]
        %v3283 = vstv %s3282
        %v3284 = vmul.f32 %v3283, %v2658
        %s3285 = sld [smem:[#allocation9 + $0x49]]
        %v3286 = vstv %s3285
        %v3287 = vmul.f32 %v3286, %v2658
        %v3289 = vrot.slane %v3287, 7
        %v3290 = vrot.slane %v3289, 2
        %v3292 = vadd.f32 %v3284, %v3290
        %3294 = vrot.lane.b32.xlu0 %v3292, 7
        %v3295 = vpop.permute.xlu0 %3294
        %v3296 = vrot.slane %v3295, 2
        %vm3297 = vcmask 56320
        %v3298 = vsel %vm3297, %v3295, %v3296
        %v3300 = vadd.f32 %v3226, %v3298
        %s3301 = sld [smem:[#allocation9 + $0x4a]]
        %v3302 = vstv %s3301
        %v3303 = vmul.f32 %v3302, %v2658
        %s3304 = sld [smem:[#allocation9 + $0x4b]]
        %v3305 = vstv %s3304
        %v3306 = vmul.f32 %v3305, %v2658
        %v3308 = vrot.slane %v3306, 7
        %v3309 = vrot.slane %v3308, 2
        %v3311 = vadd.f32 %v3303, %v3309
        %3313 = vrot.lane.b32.xlu0 %v3311, 7
        %v3314 = vpop.permute.xlu0 %3313
        %v3315 = vrot.slane %v3314, 2
        %v3316 = vsel %vm3297, %v3314, %v3315
        %v3318 = vadd.f32 %v3244, %v3316
        %s3319 = sld [smem:[#allocation9 + $0x4c]]
        %v3320 = vstv %s3319
        %v3321 = vmul.f32 %v3320, %v2658
        %s3322 = sld [smem:[#allocation9 + $0x4d]]
        %v3323 = vstv %s3322
        %v3324 = vmul.f32 %v3323, %v2658
        %v3326 = vrot.slane %v3324, 7
        %v3327 = vrot.slane %v3326, 2
        %v3329 = vadd.f32 %v3321, %v3327
        %3331 = vrot.lane.b32.xlu0 %v3329, 7
        %v3332 = vpop.permute.xlu0 %3331
        %v3333 = vrot.slane %v3332, 2
        %v3334 = vsel %vm3297, %v3332, %v3333
        %v3336 = vadd.f32 %v3262, %v3334
        %s3337 = sld [smem:[#allocation9 + $0x4e]]
        %v3338 = vstv %s3337
        %v3339 = vmul.f32 %v3338, %v2658
        %s3340 = sld [smem:[#allocation9 + $0x4f]]
        %v3341 = vstv %s3340
        %v3342 = vmul.f32 %v3341, %v2658
        %v3344 = vrot.slane %v3342, 7
        %v3345 = vrot.slane %v3344, 2
        %v3347 = vadd.f32 %v3339, %v3345
        %3349 = vrot.lane.b32.xlu0 %v3347, 7
        %v3350 = vpop.permute.xlu0 %3349
        %v3351 = vrot.slane %v3350, 2
        %v3352 = vsel %vm3297, %v3350, %v3351
        %v3354 = vadd.f32 %v3281, %v3352
        %s3355 = sld [smem:[#allocation9 + $0x50]]
        %v3356 = vstv %s3355
        %v3357 = vmul.f32 %v3356, %v2658
        %s3358 = sld [smem:[#allocation9 + $0x51]]
        %v3359 = vstv %s3358
        %v3360 = vmul.f32 %v3359, %v2658
        %v3362 = vrot.slane %v3360, 7
        %v3363 = vrot.slane %v3362, 2
        %v3365 = vadd.f32 %v3357, %v3363
        %3367 = vrot.lane.b32.xlu0 %v3365, 3
        %v3368 = vpop.permute.xlu0 %3367
        %v3369 = vrot.slane %v3368, 2
        %vm3370 = vcmask 23552
        %v3371 = vsel %vm3370, %v3368, %v3369
        %v3373 = vadd.f32 %v3300, %v3371
        %s3374 = sld [smem:[#allocation9 + $0x52]]
        %v3375 = vstv %s3374
        %v3376 = vmul.f32 %v3375, %v2658
        %s3377 = sld [smem:[#allocation9 + $0x53]]
        %v3378 = vstv %s3377
        %v3379 = vmul.f32 %v3378, %v2658
        %v3381 = vrot.slane %v3379, 7
        %v3382 = vrot.slane %v3381, 2
        %v3384 = vadd.f32 %v3376, %v3382
        %3386 = vrot.lane.b32.xlu0 %v3384, 3
        %v3387 = vpop.permute.xlu0 %3386
        %v3388 = vrot.slane %v3387, 2
        %v3389 = vsel %vm3370, %v3387, %v3388
        %v3391 = vadd.f32 %v3318, %v3389
        %v3392 = vld [vmem:[#allocation3 + $0x2] sm:$0xff]
        %s3393 = sld [smem:[#allocation9 + $0x54]]
        %v3394 = vstv %s3393
        %v3395 = vmul.f32 %v3394, %v3392
        %s3396 = sld [smem:[#allocation9 + $0x55]]
        %v3397 = vstv %s3396
        %v3398 = vmul.f32 %v3397, %v3392
        %v3400 = vrot.slane %v3398, 7
        %v3401 = vrot.slane %v3400, 2
        %v3403 = vadd.f32 %v3395, %v3401
        %3405 = vrot.lane.b32.xlu0 %v3403, 114
        %v3406 = vpop.permute.xlu0 %3405
        %v3407 = vrot.slane %v3406, 2
        %vm3408 = vcmask 932864
        %v3409 = vsel %vm3408, %v3406, %v3407
        %v3411 = vadd.f32 %v3336, %v3409
        %s3412 = sld [smem:[#allocation9 + $0x56]]
        %v3413 = vstv %s3412
        %v3414 = vmul.f32 %v3413, %v3392
        %s3415 = sld [smem:[#allocation9 + $0x57]]
        %v3416 = vstv %s3415
        %v3417 = vmul.f32 %v3416, %v3392
        %v3419 = vrot.slane %v3417, 7
        %v3420 = vrot.slane %v3419, 2
        %v3422 = vadd.f32 %v3414, %v3420
        %3424 = vrot.lane.b32.xlu0 %v3422, 114
        %v3425 = vpop.permute.xlu0 %3424
        %v3426 = vrot.slane %v3425, 2
        %v3427 = vsel %vm3408, %v3425, %v3426
        %v3429 = vadd.f32 %v3354, %v3427
        %s3430 = sld [smem:[#allocation9 + $0x58]]
        %v3431 = vstv %s3430
        %v3432 = vmul.f32 %v3431, %v3392
        %s3433 = sld [smem:[#allocation9 + $0x59]]
        %v3434 = vstv %s3433
        %v3435 = vmul.f32 %v3434, %v3392
        %v3437 = vrot.slane %v3435, 7
        %v3438 = vrot.slane %v3437, 2
        %v3440 = vadd.f32 %v3432, %v3438
        %3442 = vrot.lane.b32.xlu0 %v3440, 110
        %v3443 = vpop.permute.xlu0 %3442
        %v3444 = vrot.slane %v3443, 2
        %v3445 = vsel %vm909, %v3443, %v3444
        %v3447 = vadd.f32 %v3373, %v3445
        %s3448 = sld [smem:[#allocation9 + $0x5a]]
        %v3449 = vstv %s3448
        %v3450 = vmul.f32 %v3449, %v3392
        %s3451 = sld [smem:[#allocation9 + $0x5b]]
        %v3452 = vstv %s3451
        %v3453 = vmul.f32 %v3452, %v3392
        %v3455 = vrot.slane %v3453, 7
        %v3456 = vrot.slane %v3455, 2
        %v3458 = vadd.f32 %v3450, %v3456
        %3460 = vrot.lane.b32.xlu0 %v3458, 110
        %v3461 = vpop.permute.xlu0 %3460
        %v3462 = vrot.slane %v3461, 2
        %v3463 = vsel %vm909, %v3461, %v3462
        %v3465 = vadd.f32 %v3391, %v3463
        %s3466 = sld [smem:[#allocation9 + $0x5c]]
        %v3467 = vstv %s3466
        %v3468 = vmul.f32 %v3467, %v3392
        %s3469 = sld [smem:[#allocation9 + $0x5d]]
        %v3470 = vstv %s3469
        %v3471 = vmul.f32 %v3470, %v3392
        %v3473 = vrot.slane %v3471, 7
        %v3474 = vrot.slane %v3473, 2
        %v3476 = vadd.f32 %v3468, %v3474
        %3478 = vrot.lane.b32.xlu0 %v3476, 110
        %v3479 = vpop.permute.xlu0 %3478
        %v3480 = vrot.slane %v3479, 2
        %v3481 = vsel %vm909, %v3479, %v3480
        %v3483 = vadd.f32 %v3411, %v3481
        %s3484 = sld [smem:[#allocation9 + $0x5e]]
        %v3485 = vstv %s3484
        %v3486 = vmul.f32 %v3485, %v3392
        %s3487 = sld [smem:[#allocation9 + $0x5f]]
        %v3488 = vstv %s3487
        %v3489 = vmul.f32 %v3488, %v3392
        %v3491 = vrot.slane %v3489, 7
        %v3492 = vrot.slane %v3491, 2
        %v3494 = vadd.f32 %v3486, %v3492
        %3496 = vrot.lane.b32.xlu0 %v3494, 110
        %v3497 = vpop.permute.xlu0 %3496
        %v3498 = vrot.slane %v3497, 2
        %v3499 = vsel %vm909, %v3497, %v3498
        %v3501 = vadd.f32 %v3429, %v3499
        %s3502 = sld [smem:[#allocation9 + $0x60]]
        %v3503 = vstv %s3502
        %v3504 = vmul.f32 %v3503, %v3392
        %s3505 = sld [smem:[#allocation9 + $0x61]]
        %v3506 = vstv %s3505
        %v3507 = vmul.f32 %v3506, %v3392
        %v3509 = vrot.slane %v3507, 7
        %v3510 = vrot.slane %v3509, 2
        %v3512 = vadd.f32 %v3504, %v3510
        %3514 = vrot.lane.b32.xlu0 %v3512, 106
        %v3515 = vpop.permute.xlu0 %3514
        %v3516 = vrot.slane %v3515, 2
        %vm3517 = vcmask 867328
        %v3518 = vsel %vm3517, %v3515, %v3516
        %v3520 = vadd.f32 %v3447, %v3518
        %3522 = vrot.lane.b32.xlu0 %v3465, 127
        %v3523 = vpop.permute.xlu0 %3522
        %v3524 = vrot.slane %v3523, 2
        %v3525 = vsel %vm379, %v3523, %v3524
        %v3527 = vadd.f32 %v3520, %v3525
        %3529 = vrot.lane.b32.xlu0 %v3483, 126
        %v3530 = vpop.permute.xlu0 %3529
        %v3531 = vrot.slane %v3530, 2
        %v3532 = vsel %vm395, %v3530, %v3531
        %v3534 = vadd.f32 %v3527, %v3532
        %3536 = vrot.lane.b32.xlu0 %v3501, 125
        %v3537 = vpop.permute.xlu0 %3536
        %v3538 = vrot.slane %v3537, 2
        %v3539 = vsel %vm410, %v3537, %v3538
        %v3541 = vadd.f32 %v3534, %v3539
        %s3542 = sld [smem:[#allocation4]]
        %v3543 = vstv %s3542
        %v3544 = vadd.f32 %v3541, %v3543
        %v3545 = vxor.u32 %v3544, 2147483648
        %v3546 = vmul.f32 %v3545, 1.442695
        %v3547 = vpow.pop %v3546
        %v3548 = vadd.f32 %v3547, 1.0
        %v3549 = vrcp.pop %v3548
        %v3550 = vmul.f32 1.0, %v3549
        %v3552 = vlaneseq
        %v3553 = vshrl.u32 %v3552, 7
        %v3554 = vsub.s32 0, %v3553
        %v3555 = vrot.slane %v3550, %v3554
        %v3556 = vlaneseq
        %v3557 = vshrl.u32 %v3556, 7
        %v3558 = vsub.s32 2, %v3557
        %v3559 = vrot.slane %v3550, %v3558
        %v3560 = vlaneseq
        %v3561 = vshrl.u32 %v3560, 7
        %v3562 = vsub.s32 4, %v3561
        %v3563 = vrot.slane %v3550, %v3562
        %v3567 = vlaneseq
        %v3568 = vshrl.u32 %v3567, 7
        %v3569 = vsub.s32 0, %v3568
        %v3570 = vrot.slane %v3555, %v3569
        %v3571 = vlaneseq
        %v3572 = vshrl.u32 %v3571, 7
        %v3573 = vsub.s32 0, %v3572
        %v3574 = vrot.slane %v3559, %v3573
        %v3575 = vlaneseq
        %v3576 = vshrl.u32 %v3575, 7
        %v3577 = vsub.s32 0, %v3576
        %v3578 = vrot.slane %v3563, %v3577
        %v3579 = vmul.f32 %v2526, %v3570
        %v3580 = vmul.f32 %v2527, %v3574
        %v3581 = vmul.f32 %v2528, %v3578
        %v3582 = vadd.f32 %v3579, %v2261
        %v3583 = vadd.f32 %v3580, %v2262
        %v3584 = vadd.f32 %v3581, %v2263
        %3585 = vst [vmem:[%s355] sm:$0xff] %v3582
        %3586 = vst [vmem:[%s355 + $0x8] sm:$0xff] %v3583
        %3587 = vst [vmem:[%s355 + $0x10] sm:$0xff] %v3584
        %s3588 = sand.u32 %s228, 1
        %s3589 = scalar_lea.sflag [#allocation7], %s3588
        %s3590 = sand.u32 %s228, 1
        %s3591 = smul.addr %s3590, 24
        %s3592 = scalar_lea.vmem [#allocation10], %s3591
        // Predicated region
        $region65: #{tpu_custom_call.1} parent=55 // pred_check
          %p3593 = pneg %p238
        $region66: #{tpu_custom_call.1} parent=55 // pred_check_branch
          %3595 = sbr.rel (%p3593) target = $region68
        $region67: #{tpu_custom_call.1} parent=55 // pred_region
          %s3597 = ssub.s32 384, 384
          %3598 = vsyncadd %s3589, %s3597
          %s3599 = smul.addr %s26, 3
          %s3600 = smul.addr %s3599, 128
          %s3601 = scalar_lea.hbm %s9, %s3600
          %s3603 = sshll.u32 %s3592, 4
          %s3604 = int_to_ptr.vmem [resolvable:$true] %s3603
          %3606 = dma.vmem_to_hbm [thread:$0]  %s3604, 384, %s3601, %s3589
        $region68: #{tpu_custom_call.1} parent=55 // pred_fallthru
          _
      $region56: #{tpu_custom_call.1} parent=5 // pred_fallthru
        _
      %p3607 = scmp.le.s32.totalorder 2, %s21
      // Predicated region
      $region69: #{tpu_custom_call.1} parent=5 // pred_check
        %p3608 = pneg %p3607
      $region70: #{tpu_custom_call.1} parent=5 // pred_check_branch
        %3610 = sbr.rel (%p3608) target = $region72
      $region71: #{tpu_custom_call.1} parent=5 // pred_region
        %s3611 = ssub.s32 %s21, 2
        // Predicated region
        $region73: #{tpu_custom_call.1} parent=71 // pred_check
          %p3612 = pneg %p244
        $region74: #{tpu_custom_call.1} parent=71 // pred_check_branch
          %3614 = sbr.rel (%p3612) target = $region76
        $region75: #{tpu_custom_call.1} parent=71 // pred_region
          %s3615 = sand.u32 %s229, 1
          %s3616 = scalar_lea.sflag [#allocation7], %s3615
          %s3617 = sand.u32 %s229, 1
          %s3618 = smul.addr %s3617, 24
          %s3619 = scalar_lea.vmem [#allocation10], %s3618
          %3620 = dma.done %s3616, 384
        $region76: #{tpu_custom_call.1} parent=71 // pred_fallthru
          _
      $region72: #{tpu_custom_call.1} parent=5 // pred_fallthru
        _
    $region6: #{tpu_custom_call.1} parent=1 // loop_footer
      %s25 = sadd.s32 1, %s21
    $region7: #{tpu_custom_call.1} parent=1 // loop_footer_branch
      %20 = sbr.rel target = $region3
    $region8: #{tpu_custom_call.1} parent=1 // loop_exit
      _
    %3621 = vsyncpa [#allocation6], 1
    %s3622 = scalar_lea.sflag [#allocation6], 1
    %3623 = vsyncpa %s3622, 1
    %3624 = vsyncpa [#allocation7], 1
    %s3625 = scalar_lea.sflag [#allocation7], 1
    %3626 = vsyncpa %s3625, 1
    %3627 = vsyncpa [#allocation8], 1
    %s3628 = scalar_lea.sflag [#allocation8], 1
    %3629 = vsyncpa %s3628, 1

</llo_original>
